<compile_context>
chip_gen: v5e
topology: v5e:2x2
jax: 0.10.0
libtpu: 0.0.40
codegen_flags: <defaults>
</compile_context>

<pallas_src>
import functools

import numpy as np
import jax
import jax.numpy as jnp
from jax.experimental import pallas as pl
from jax.experimental.pallas import tpu as pltpu


def _lrelu(z):
    # LeakyReLU(0.2): x for x >= 0, 0.2x otherwise
    return jnp.maximum(z, 0.2 * z)


def _shift_down1(y):
    # y'[i] = y[i-1], y'[0] = 0   (left zero pad) -- XLU roll + VPU select, no concat copy
    rolled = pltpu.roll(y, shift=1, axis=0)
    row = jax.lax.broadcasted_iota(jnp.int32, y.shape, 0)
    return jnp.where(row == 0, jnp.zeros_like(rolled), rolled)


def _shift_up1(y):
    # y'[i] = y[i+1], y'[n-1] = 0 (right zero pad)
    n = y.shape[0]
    rolled = pltpu.roll(y, shift=n - 1, axis=0)
    row = jax.lax.broadcasted_iota(jnp.int32, y.shape, 0)
    return jnp.where(row == n - 1, jnp.zeros_like(rolled), rolled)


def _disc_block_kernel(*refs, attn, is_final, block_k, w_total, w_pad, cq, mm_dtype):
    if attn:
        (x_ref, w1_ref, b1_ref, wr1_ref, br1_ref, wr2_ref, br2_ref,
         wqkv_ref, bqkv_ref, gamma_ref, wd_ref, bd_ref,
         o_ref, k_scr, v_scr) = refs
    else:
        (x_ref, w1_ref, b1_ref, wr1_ref, br1_ref, wr2_ref, br2_ref,
         wd_ref, bd_ref, o_ref) = refs

    P = x_ref.shape[1]                  # number of row planes (1, or 2 = even/odd)
    cout = b1_ref.shape[-1]

    def mm(a_lp, w_lp):                 # bf16 operands, f32 MXU accumulation
        return jnp.dot(a_lp, w_lp, preferred_element_type=jnp.float32)

    def tap(y, t):                      # slice tap t out of an N-fused conv matmul output
        return y[:, t * cout:(t + 1) * cout]

    # ---- first: LeakyReLU -> conv1x1 -------------------------------------------------
    w1 = w1_ref[...]
    b1 = b1_ref[...]
    hs = [mm(_lrelu(x_ref[0, p]).astype(mm_dtype), w1) + b1 for p in range(P)]

    # ---- res_block: (LeakyReLU -> conv3 pad=1) x 2, plus residual ----------------------
    def conv3(zs, w_ref, b_ref):
        # w_ref holds the 3 taps fused along N: (C, 3*Cout) -> one matmul per plane.
        w = w_ref[...]
        b = b_ref[...]
        ys = [mm(z, w) for z in zs]
        if len(ys) == 1:
            (y,) = ys
            out = tap(y, 1) + _shift_down1(tap(y, 0)) + _shift_up1(tap(y, 2))
            return [out + b]
        ye, yo = ys                     # even/odd row planes
        # out[2j]   = W0 z_o[j-1] + W1 z_e[j] + W2 z_o[j]
        # out[2j+1] = W0 z_e[j]   + W1 z_o[j] + W2 z_e[j+1]
        out_e = tap(ye, 1) + tap(yo, 2) + _shift_down1(tap(yo, 0))
        out_o = tap(ye, 0) + tap(yo, 1) + _shift_up1(tap(ye, 2))
        return [out_e + b, out_o + b]

    rs = conv3([_lrelu(h).astype(mm_dtype) for h in hs], wr1_ref, br1_ref)
    rs = conv3([_lrelu(r).astype(mm_dtype) for r in rs], wr2_ref, br2_ref)
    hs = [h + r for h, r in zip(hs, rs)]

    # ---- self-attention (optional): fused QKV projection + online softmax --------------
    if attn:
        rows_per_plane = hs[0].shape[0]
        h_cat = jnp.concatenate(hs, axis=0) if P > 1 else hs[0]     # (W, C) f32
        h_lp = h_cat.astype(mm_dtype)
        qkv = mm(h_lp, wqkv_ref[...]) + bqkv_ref[...]               # (W, 2*Cq + C) f32
        q = qkv[:, :cq].astype(mm_dtype)
        # K / V (bf16) into VMEM scratch, padded up to a whole number of key blocks.
        if w_pad == w_total:
            k_scr[...] = qkv[:, cq:2 * cq].astype(mm_dtype)
            v_scr[...] = qkv[:, 2 * cq:].astype(mm_dtype)
        else:
            k_scr[:w_total, :] = qkv[:, cq:2 * cq].astype(mm_dtype)
            v_scr[:w_total, :] = qkv[:, 2 * cq:].astype(mm_dtype)
            k_scr[w_total:, :] = jnp.zeros((w_pad - w_total, cq), mm_dtype)
            v_scr[w_total:, :] = jnp.zeros((w_pad - w_total, cout), mm_dtype)

        def body(i, carry):
            m, l, acc = carry
            off = pl.multiple_of(i * block_k, block_k)
            k_blk = k_scr[pl.ds(off, block_k), :]
            v_blk = v_scr[pl.ds(off, block_k), :]
            s = jax.lax.dot_general(q, k_blk, (((1,), (1,)), ((), ())),
                                    preferred_element_type=jnp.float32)
            if w_pad > w_total:         # mask padded keys (static check: only if padded)
                col = jax.lax.broadcasted_iota(jnp.int32, s.shape, 1) + off
                s = jnp.where(col < w_total, s, jnp.float32(-1e30))
            m_new = jnp.maximum(m, jnp.max(s, axis=-1, keepdims=True))
            alpha = jnp.exp(m - m_new)
            # TODO(synk): on v6e/v7x compute these exp's on the bf16 EUP path.
            p = jnp.exp(s - m_new)
            l_new = alpha * l + jnp.sum(p, axis=-1, keepdims=True)
            acc_new = alpha * acc + jnp.dot(p.astype(mm_dtype), v_blk,
                                            preferred_element_type=jnp.float32)
            return m_new, l_new, acc_new

        m0 = jnp.full((w_total, 1), -1e30, jnp.float32)
        l0 = jnp.zeros((w_total, 1), jnp.float32)
        acc0 = jnp.zeros((w_total, cout), jnp.float32)
        m, l, acc = jax.lax.fori_loop(0, w_pad // block_k, body, (m0, l0, acc0))
        o = acc * pl.reciprocal(l, approx=True)
        h_cat = jnp.tanh(gamma_ref[...]) * o + h_cat
        hs = [h_cat[p * rows_per_plane:(p + 1) * rows_per_plane, :] for p in range(P)]

    # ---- down: conv4 (stride 2 pad 1, or valid if final) -> LeakyReLU -------------------
    wd = wd_ref[...]                    # (C, 4*Cout) taps fused along N
    bd = bd_ref[...]
    if is_final:
        (h,) = hs
        y_full = mm(h.astype(mm_dtype), wd)        # valid conv: out[o] = sum_t W_t h[o+t]
        wo = h.shape[0] - 3
        y = (tap(y_full, 0)[:wo] + tap(y_full, 1)[1:wo + 1]
             + tap(y_full, 2)[2:wo + 2] + tap(y_full, 3)[3:wo + 3])
    else:
        h_e, h_o = hs
        ye = mm(h_e.astype(mm_dtype), wd)
        yo = mm(h_o.astype(mm_dtype), wd)
        # out[o] = W0 h[2o-1] + W1 h[2o] + W2 h[2o+1] + W3 h[2o+2]
        y = (tap(ye, 1) + tap(yo, 2)
             + _shift_down1(tap(yo, 0)) + _shift_up1(tap(ye, 3)))
    o_ref[0] = _lrelu(y + bd).astype(o_ref.dtype)


def _pack_conv(w):
    """PyTorch Conv1d weight (O, I, K) -> taps fused along N: (I, K*O)."""
    O, I, K = w.shape
    return jnp.transpose(w, (1, 2, 0)).reshape(I, K * O)


def discriminator_block_residual(x_nwc, params, *, attn, is_final,
                                 block_k=1024, matmul_dtype=jnp.bfloat16):
    """Forward pass of DiscriminatorBlockResidual.

    x_nwc: (B, W, Cin) channels-last input.
    params: PyTorch-layout tensors: w1 (Cout,Cin,1), b1 (Cout,), wr1/wr2 (Cout,Cout,3),
      br1/br2 (Cout,), wq/wk (Cq,Cout,1), bq/bk (Cq,), wv (Cout,Cout,1), bv (Cout,),
      gamma scalar, wd (Cout,Cout,4), bd (Cout,).
    Returns (B, Wo, Cout) float32, channels-last.
    """
    B, W, Cin = x_nwc.shape
    Cout = params["w1"].shape[0]

    if is_final:
        assert W >= 4, "is_final path needs W >= 4"
        P, Wp, Wo = 1, W, W - 3
        xp = x_nwc.reshape(B, 1, W, Cin)
    else:
        assert W % 2 == 0, "stride-2 down path assumes even W"
        P, Wp, Wo = 2, W // 2, W // 2
        # de-interleave into even/odd row planes (cheap XLA layout plumbing)
        xp = x_nwc.reshape(B, Wp, 2, Cin).transpose(0, 2, 1, 3)     # (B, 2, Wp, Cin)
    xp = xp.astype(matmul_dtype)        # halve the only B*W-scaling HBM->VMEM DMA

    f32 = jnp.float32
    cast = lambda a: a.astype(matmul_dtype)
    ordered = [cast(_pack_conv(params["w1"])), params["b1"].reshape(1, Cout).astype(f32),
               cast(_pack_conv(params["wr1"])), params["br1"].reshape(1, Cout).astype(f32),
               cast(_pack_conv(params["wr2"])), params["br2"].reshape(1, Cout).astype(f32)]

    Cq = W_tot = W_pad = block_k_eff = 0
    if attn:
        Cq = params["wq"].shape[0]
        wqkv = jnp.concatenate([_pack_conv(params["wq"]), _pack_conv(params["wk"]),
                                _pack_conv(params["wv"])], axis=1)   # (Cout, 2*Cq+Cout)
        bqkv = jnp.concatenate([params["bq"], params["bk"], params["bv"]]).reshape(1, -1)
        ordered += [cast(wqkv), bqkv.astype(f32),
                    jnp.asarray(params["gamma"], f32).reshape(1, 1)]
        W_tot = P * Wp
        block_k_eff = max(8, min(block_k, W_tot))
        n_blocks = -(-W_tot // block_k_eff)
        W_pad = n_blocks * block_k_eff
    ordered += [cast(_pack_conv(params["wd"])), params["bd"].reshape(1, Cout).astype(f32)]

    kernel = functools.partial(_disc_block_kernel, attn=attn, is_final=is_final,
                               block_k=block_k_eff, w_total=W_tot, w_pad=W_pad,
                               cq=Cq, mm_dtype=matmul_dtype)

    scratch_shapes = []
    if attn:
        scratch_shapes = [pltpu.VMEM((W_pad, Cq), matmul_dtype),
                          pltpu.VMEM((W_pad, Cout), matmul_dtype)]

    # ---- VMEM budget: generation aware (v5e/v6e: 128 MiB, v7x: 64 MiB physical) -------
    try:
        cap = int(getattr(pltpu.get_tpu_info(), "vmem_capacity_bytes", 0)) or (64 << 20)
    except Exception:
        cap = 64 << 20
    itm = jnp.dtype(matmul_dtype).itemsize
    weight_bytes = sum(int(a.size) * a.dtype.itemsize for a in ordered)
    act_bytes = 4 * W * (Cin + 28 * Cout)               # generous f32 activation estimate
    x_bytes = 2 * W * Cin * itm                         # double-buffered input block
    out_bytes = 2 * Wo * Cout * 4
    attn_bytes = 0
    if attn:
        attn_bytes = (W_pad * (Cq + Cout) * itm                       # K/V scratch
                      + 4 * W_tot * (Cout + block_k_eff + 4)          # acc + p + m/l
                      + W_tot * (2 * Cq + Cout) * (4 + itm))          # qkv + q
    budget = 2 * weight_bytes + act_bytes + x_bytes + out_bytes + attn_bytes + (4 << 20)
    vmem_limit = int(min(int(0.85 * cap), max(16 << 20, budget)))

    out_shape = jax.ShapeDtypeStruct((B, Wo, Cout), jnp.float32)
    x_spec = pl.BlockSpec((1, P, Wp, Cin), lambda b: (b, 0, 0, 0))
    out_spec = pl.BlockSpec((1, Wo, Cout), lambda b: (b, 0, 0))
    cparams = pltpu.CompilerParams(dimension_semantics=("parallel",),
                                   vmem_limit_bytes=vmem_limit)
    # TODO(synk): for very large W on v7x (64 MiB VMEM), add a (B, W-tile) grid with
    # halo'd conv taps and query-tiled flash attention instead of this full-W-per-step body.

    def build(single_buffer_weights):
        in_specs = [x_spec]
        for arr in ordered:
            kw = {}
            if single_buffer_weights:
                # weights are reused across the whole batch grid; no need to double-buffer
                kw["pipeline_mode"] = pl.Buffered(1)
            in_specs.append(pl.BlockSpec(arr.shape,
                                         lambda b, _n=arr.ndim: (0,) * _n, **kw))
        return pl.pallas_call(kernel, out_shape=out_shape, grid=(B,),
                              in_specs=in_specs, out_specs=out_spec,
                              scratch_shapes=scratch_shapes,
                              compiler_params=cparams)

    try:
        return build(True)(xp, *ordered)
    except Exception:
        # fall back to default (double) buffering if this JAX rejects Buffered(1)
        return build(False)(xp, *ordered)


if __name__ == "__main__":
    B, Cin, Cout, W = 2, 8, 16, 16
    Cq = Cout // 8                     # query/key channels in SelfAttention

    key = jax.random.PRNGKey(0)
    keys = jax.random.split(key, 16)

    def init(k, shape, scale=0.1):
        return (scale * jax.random.normal(k, shape)).astype(jnp.float32)

    # PyTorch-shaped parameters: Conv1d weight (Cout, Cin, K), bias (Cout,)
    params = {
        "w1": init(keys[0], (Cout, Cin, 1)),   "b1": init(keys[1], (Cout,)),
        "wr1": init(keys[2], (Cout, Cout, 3)), "br1": init(keys[3], (Cout,)),
        "wr2": init(keys[4], (Cout, Cout, 3)), "br2": init(keys[5], (Cout,)),
        "wq": init(keys[6], (Cq, Cout, 1)),    "bq": init(keys[7], (Cq,)),
        "wk": init(keys[8], (Cq, Cout, 1)),    "bk": init(keys[9], (Cq,)),
        "wv": init(keys[10], (Cout, Cout, 1)), "bv": init(keys[11], (Cout,)),
        "wd": init(keys[12], (Cout, Cout, 4)), "bd": init(keys[13], (Cout,)),
        # PyTorch __init__ sets gamma = 0.0 (learnable); use a nonzero value so the
        # attention path actually contributes in this synthetic test.
        "gamma": jnp.float32(0.3),
    }

    x_ncw = jax.random.normal(keys[14], (B, Cin, W), dtype=jnp.float32)
    x_nwc = jnp.transpose(x_ncw, (0, 2, 1))            # (B, W, Cin) channels-last

    # ---- pure-JAX reference mirroring the PyTorch NCW semantics ----
    def conv1d(x, w, b, stride=1, padding=0):
        y = jax.lax.conv_general_dilated(
            x, w, window_strides=(stride,), padding=[(padding, padding)],
            dimension_numbers=("NCH", "OIH", "NCH"))
        return y + b[None, :, None]

    def lrelu(z):
        return jnp.where(z >= 0, z, 0.2 * z)

    def reference(x, attn, is_final):
        out = conv1d(lrelu(x), params["w1"], params["b1"])
        r = conv1d(lrelu(out), params["wr1"], params["br1"], padding=1)
        r = conv1d(lrelu(r), params["wr2"], params["br2"], padding=1)
        out = r + out
        if attn:
            q = conv1d(out, params["wq"], params["bq"])
            k = conv1d(out, params["wk"], params["bk"])
            v = conv1d(out, params["wv"], params["bv"])
            energy = jnp.einsum("nci,ncj->nij", q, k)
            attention = jax.nn.softmax(energy, axis=-1)
            o = jnp.einsum("ncj,nij->nci", v, attention)
            out = jnp.tanh(params["gamma"]) * o + out
        if is_final:
            out = lrelu(conv1d(out, params["wd"], params["bd"]))
        else:
            out = lrelu(conv1d(out, params["wd"], params["bd"], stride=2, padding=1))
        return out

    # exercise both down-sampling paths (stride-2 + attention, and final/valid conv)
    for attn_flag, final_flag in ((True, False), (False, True)):
        out_nwc = discriminator_block_residual(x_nwc, params,
                                               attn=attn_flag, is_final=final_flag)
        out_nwc = jax.block_until_ready(out_nwc)
        out_ncw = jnp.transpose(out_nwc, (0, 2, 1))
        ref = reference(x_ncw, attn_flag, final_flag)
        # bf16 matmul operands / bf16 input (f32 accumulation) -> relaxed tolerance
        np.testing.assert_allclose(np.asarray(out_ncw), np.asarray(ref),
                                   rtol=2e-2, atol=1e-2)
    print("KERNEL_OK")
</pallas_src>

<mosaic_0001>
module attributes {stable_mosaic.version = 11 : i64} {
  func.func @_disc_block_kernel(%arg0: i32, %arg1: memref<1x2x8x8xbf16, #tpu.memory_space<vmem>>, %arg2: memref<8x16xbf16, #tpu.memory_space<vmem>>, %arg3: memref<1x16xf32, #tpu.memory_space<vmem>>, %arg4: memref<16x48xbf16, #tpu.memory_space<vmem>>, %arg5: memref<1x16xf32, #tpu.memory_space<vmem>>, %arg6: memref<16x48xbf16, #tpu.memory_space<vmem>>, %arg7: memref<1x16xf32, #tpu.memory_space<vmem>>, %arg8: memref<16x20xbf16, #tpu.memory_space<vmem>>, %arg9: memref<1x20xf32, #tpu.memory_space<vmem>>, %arg10: memref<1x1xf32, #tpu.memory_space<vmem>>, %arg11: memref<16x64xbf16, #tpu.memory_space<vmem>>, %arg12: memref<1x16xf32, #tpu.memory_space<vmem>>, %arg13: memref<1x8x16xf32, #tpu.memory_space<vmem>>, %arg14: memref<16x2xbf16, #tpu.memory_space<vmem>>, %arg15: memref<16x16xbf16, #tpu.memory_space<vmem>>) attributes {dimension_semantics = [#tpu.dimension_semantics<parallel>], iteration_bounds = array<i64: 2>, scalar_prefetch = 0 : i64, scratch_operands = 2 : i64, tpu.core_type = #tpu.core_type<tc>, window_params = [{transform_indices = @transform_0, window_bounds = array<i64: 1, 2, 8, 8>}, {pipeline_mode = #tpu.pipeline_mode<synchronous>, transform_indices = @transform_1, window_bounds = array<i64: 8, 16>}, {pipeline_mode = #tpu.pipeline_mode<synchronous>, transform_indices = @transform_2, window_bounds = array<i64: 1, 16>}, {pipeline_mode = #tpu.pipeline_mode<synchronous>, transform_indices = @transform_3, window_bounds = array<i64: 16, 48>}, {pipeline_mode = #tpu.pipeline_mode<synchronous>, transform_indices = @transform_4, window_bounds = array<i64: 1, 16>}, {pipeline_mode = #tpu.pipeline_mode<synchronous>, transform_indices = @transform_5, window_bounds = array<i64: 16, 48>}, {pipeline_mode = #tpu.pipeline_mode<synchronous>, transform_indices = @transform_6, window_bounds = array<i64: 1, 16>}, {pipeline_mode = #tpu.pipeline_mode<synchronous>, transform_indices = @transform_7, window_bounds = array<i64: 16, 20>}, {pipeline_mode = #tpu.pipeline_mode<synchronous>, transform_indices = @transform_8, window_bounds = array<i64: 1, 20>}, {pipeline_mode = #tpu.pipeline_mode<synchronous>, transform_indices = @transform_9, window_bounds = array<i64: 1, 1>}, {pipeline_mode = #tpu.pipeline_mode<synchronous>, transform_indices = @transform_10, window_bounds = array<i64: 16, 64>}, {pipeline_mode = #tpu.pipeline_mode<synchronous>, transform_indices = @transform_11, window_bounds = array<i64: 1, 16>}, {transform_indices = @transform_12, window_bounds = array<i64: 1, 8, 16>}]} {
    %c0 = arith.constant 0 : index
    %c0_0 = arith.constant 0 : index
    %0 = vector.load %arg2[%c0, %c0_0] : memref<8x16xbf16, #tpu.memory_space<vmem>>, vector<8x16xbf16>
    %c0_1 = arith.constant 0 : index
    %c0_2 = arith.constant 0 : index
    %1 = vector.load %arg3[%c0_1, %c0_2] : memref<1x16xf32, #tpu.memory_space<vmem>>, vector<1x16xf32>
    %c0_3 = arith.constant 0 : index
    %c0_4 = arith.constant 0 : index
    %c0_5 = arith.constant 0 : index
    %c0_6 = arith.constant 0 : index
    %2 = vector.load %arg1[%c0_3, %c0_4, %c0_5, %c0_6] : memref<1x2x8x8xbf16, #tpu.memory_space<vmem>>, vector<1x1x8x8xbf16>
    %3 = vector.shape_cast %2 : vector<1x1x8x8xbf16> to vector<8x8xbf16>
    %cst = arith.constant 2.001950e-01 : bf16
    %4 = vector.broadcast %cst : bf16 to vector<8x8xbf16>
    %5 = arith.mulf %4, %3 : vector<8x8xbf16>
    %6 = arith.maximumf %3, %5 : vector<8x8xbf16>
    %cst_7 = arith.constant dense<0.000000e+00> : vector<8x16xf32>
    %7 = tpu.matmul %6, %0, %cst_7 {dimension_numbers = #tpu.dot_dimension_numbers<[1], [0], [0], [1], [0, 0, 1, 1], [], []>} : vector<8x8xbf16>, vector<8x16xbf16>, vector<8x16xf32> -> vector<8x16xf32>
    %8 = vector.broadcast %1 : vector<1x16xf32> to vector<8x16xf32>
    %9 = arith.addf %7, %8 : vector<8x16xf32>
    %c0_8 = arith.constant 0 : index
    %c1 = arith.constant 1 : index
    %c0_9 = arith.constant 0 : index
    %c0_10 = arith.constant 0 : index
    %10 = vector.load %arg1[%c0_8, %c1, %c0_9, %c0_10] : memref<1x2x8x8xbf16, #tpu.memory_space<vmem>>, vector<1x1x8x8xbf16>
    %11 = vector.shape_cast %10 : vector<1x1x8x8xbf16> to vector<8x8xbf16>
    %cst_11 = arith.constant 2.001950e-01 : bf16
    %12 = vector.broadcast %cst_11 : bf16 to vector<8x8xbf16>
    %13 = arith.mulf %12, %11 : vector<8x8xbf16>
    %14 = arith.maximumf %11, %13 : vector<8x8xbf16>
    %cst_12 = arith.constant dense<0.000000e+00> : vector<8x16xf32>
    %15 = tpu.matmul %14, %0, %cst_12 {dimension_numbers = #tpu.dot_dimension_numbers<[1], [0], [0], [1], [0, 0, 1, 1], [], []>} : vector<8x8xbf16>, vector<8x16xbf16>, vector<8x16xf32> -> vector<8x16xf32>
    %16 = vector.broadcast %1 : vector<1x16xf32> to vector<8x16xf32>
    %17 = arith.addf %15, %16 : vector<8x16xf32>
    %cst_13 = arith.constant 2.000000e-01 : f32
    %18 = vector.broadcast %cst_13 : f32 to vector<8x16xf32>
    %19 = arith.mulf %18, %9 : vector<8x16xf32>
    %20 = arith.maximumf %9, %19 : vector<8x16xf32>
    %21 = arith.truncf %20 : vector<8x16xf32> to vector<8x16xbf16>
    %cst_14 = arith.constant 2.000000e-01 : f32
    %22 = vector.broadcast %cst_14 : f32 to vector<8x16xf32>
    %23 = arith.mulf %22, %17 : vector<8x16xf32>
    %24 = arith.maximumf %17, %23 : vector<8x16xf32>
    %25 = arith.truncf %24 : vector<8x16xf32> to vector<8x16xbf16>
    %c0_15 = arith.constant 0 : index
    %c0_16 = arith.constant 0 : index
    %26 = vector.load %arg4[%c0_15, %c0_16] : memref<16x48xbf16, #tpu.memory_space<vmem>>, vector<16x48xbf16>
    %c0_17 = arith.constant 0 : index
    %c0_18 = arith.constant 0 : index
    %27 = vector.load %arg5[%c0_17, %c0_18] : memref<1x16xf32, #tpu.memory_space<vmem>>, vector<1x16xf32>
    %cst_19 = arith.constant dense<0.000000e+00> : vector<8x48xf32>
    %28 = tpu.matmul %21, %26, %cst_19 {dimension_numbers = #tpu.dot_dimension_numbers<[1], [0], [0], [1], [0, 0, 1, 1], [], []>} : vector<8x16xbf16>, vector<16x48xbf16>, vector<8x48xf32> -> vector<8x48xf32>
    %cst_20 = arith.constant dense<0.000000e+00> : vector<8x48xf32>
    %29 = tpu.matmul %25, %26, %cst_20 {dimension_numbers = #tpu.dot_dimension_numbers<[1], [0], [0], [1], [0, 0, 1, 1], [], []>} : vector<8x16xbf16>, vector<16x48xbf16>, vector<8x48xf32> -> vector<8x48xf32>
    %30 = vector.extract_strided_slice %28 {offsets = [0, 16], sizes = [8, 16], strides = [1, 1]} : vector<8x48xf32> to vector<8x16xf32>
    %31 = vector.extract_strided_slice %29 {offsets = [0, 32], sizes = [8, 16], strides = [1, 1]} : vector<8x48xf32> to vector<8x16xf32>
    %32 = arith.addf %30, %31 : vector<8x16xf32>
    %33 = vector.extract_strided_slice %29 {offsets = [0, 0], sizes = [8, 16], strides = [1, 1]} : vector<8x48xf32> to vector<8x16xf32>
    %c1_i32 = arith.constant 1 : i32
    %34 = tpu.dynamic_rotate %33 by %c1_i32 dim 0 : vector<8x16xf32>, i32 -> vector<8x16xf32>
    %35 = tpu.iota {dimensions = array<i32: 0>} : vector<8x16xi32>
    %c0_i32 = arith.constant 0 : i32
    %36 = vector.broadcast %c0_i32 : i32 to vector<8x16xi32>
    %37 = arith.cmpi eq, %35, %36 : vector<8x16xi32>
    %cst_21 = arith.constant 0.000000e+00 : f32
    %38 = vector.broadcast %cst_21 : f32 to vector<8x16xf32>
    %39 = arith.select %37, %38, %34 : vector<8x16xi1>, vector<8x16xf32>
    %40 = arith.addf %32, %39 : vector<8x16xf32>
    %41 = vector.extract_strided_slice %28 {offsets = [0, 0], sizes = [8, 16], strides = [1, 1]} : vector<8x48xf32> to vector<8x16xf32>
    %42 = vector.extract_strided_slice %29 {offsets = [0, 16], sizes = [8, 16], strides = [1, 1]} : vector<8x48xf32> to vector<8x16xf32>
    %43 = arith.addf %41, %42 : vector<8x16xf32>
    %44 = vector.extract_strided_slice %28 {offsets = [0, 32], sizes = [8, 16], strides = [1, 1]} : vector<8x48xf32> to vector<8x16xf32>
    %c7_i32 = arith.constant 7 : i32
    %45 = tpu.dynamic_rotate %44 by %c7_i32 dim 0 : vector<8x16xf32>, i32 -> vector<8x16xf32>
    %46 = tpu.iota {dimensions = array<i32: 0>} : vector<8x16xi32>
    %c7_i32_22 = arith.constant 7 : i32
    %47 = vector.broadcast %c7_i32_22 : i32 to vector<8x16xi32>
    %48 = arith.cmpi eq, %46, %47 : vector<8x16xi32>
    %cst_23 = arith.constant 0.000000e+00 : f32
    %49 = vector.broadcast %cst_23 : f32 to vector<8x16xf32>
    %50 = arith.select %48, %49, %45 : vector<8x16xi1>, vector<8x16xf32>
    %51 = arith.addf %43, %50 : vector<8x16xf32>
    %52 = vector.broadcast %27 : vector<1x16xf32> to vector<8x16xf32>
    %53 = arith.addf %40, %52 : vector<8x16xf32>
    %54 = vector.broadcast %27 : vector<1x16xf32> to vector<8x16xf32>
    %55 = arith.addf %51, %54 : vector<8x16xf32>
    %cst_24 = arith.constant 2.000000e-01 : f32
    %56 = vector.broadcast %cst_24 : f32 to vector<8x16xf32>
    %57 = arith.mulf %56, %53 : vector<8x16xf32>
    %58 = arith.maximumf %53, %57 : vector<8x16xf32>
    %59 = arith.truncf %58 : vector<8x16xf32> to vector<8x16xbf16>
    %cst_25 = arith.constant 2.000000e-01 : f32
    %60 = vector.broadcast %cst_25 : f32 to vector<8x16xf32>
    %61 = arith.mulf %60, %55 : vector<8x16xf32>
    %62 = arith.maximumf %55, %61 : vector<8x16xf32>
    %63 = arith.truncf %62 : vector<8x16xf32> to vector<8x16xbf16>
    %c0_26 = arith.constant 0 : index
    %c0_27 = arith.constant 0 : index
    %64 = vector.load %arg6[%c0_26, %c0_27] : memref<16x48xbf16, #tpu.memory_space<vmem>>, vector<16x48xbf16>
    %c0_28 = arith.constant 0 : index
    %c0_29 = arith.constant 0 : index
    %65 = vector.load %arg7[%c0_28, %c0_29] : memref<1x16xf32, #tpu.memory_space<vmem>>, vector<1x16xf32>
    %cst_30 = arith.constant dense<0.000000e+00> : vector<8x48xf32>
    %66 = tpu.matmul %59, %64, %cst_30 {dimension_numbers = #tpu.dot_dimension_numbers<[1], [0], [0], [1], [0, 0, 1, 1], [], []>} : vector<8x16xbf16>, vector<16x48xbf16>, vector<8x48xf32> -> vector<8x48xf32>
    %cst_31 = arith.constant dense<0.000000e+00> : vector<8x48xf32>
    %67 = tpu.matmul %63, %64, %cst_31 {dimension_numbers = #tpu.dot_dimension_numbers<[1], [0], [0], [1], [0, 0, 1, 1], [], []>} : vector<8x16xbf16>, vector<16x48xbf16>, vector<8x48xf32> -> vector<8x48xf32>
    %68 = vector.extract_strided_slice %66 {offsets = [0, 16], sizes = [8, 16], strides = [1, 1]} : vector<8x48xf32> to vector<8x16xf32>
    %69 = vector.extract_strided_slice %67 {offsets = [0, 32], sizes = [8, 16], strides = [1, 1]} : vector<8x48xf32> to vector<8x16xf32>
    %70 = arith.addf %68, %69 : vector<8x16xf32>
    %71 = vector.extract_strided_slice %67 {offsets = [0, 0], sizes = [8, 16], strides = [1, 1]} : vector<8x48xf32> to vector<8x16xf32>
    %c1_i32_32 = arith.constant 1 : i32
    %72 = tpu.dynamic_rotate %71 by %c1_i32_32 dim 0 : vector<8x16xf32>, i32 -> vector<8x16xf32>
    %73 = tpu.iota {dimensions = array<i32: 0>} : vector<8x16xi32>
    %c0_i32_33 = arith.constant 0 : i32
    %74 = vector.broadcast %c0_i32_33 : i32 to vector<8x16xi32>
    %75 = arith.cmpi eq, %73, %74 : vector<8x16xi32>
    %cst_34 = arith.constant 0.000000e+00 : f32
    %76 = vector.broadcast %cst_34 : f32 to vector<8x16xf32>
    %77 = arith.select %75, %76, %72 : vector<8x16xi1>, vector<8x16xf32>
    %78 = arith.addf %70, %77 : vector<8x16xf32>
    %79 = vector.extract_strided_slice %66 {offsets = [0, 0], sizes = [8, 16], strides = [1, 1]} : vector<8x48xf32> to vector<8x16xf32>
    %80 = vector.extract_strided_slice %67 {offsets = [0, 16], sizes = [8, 16], strides = [1, 1]} : vector<8x48xf32> to vector<8x16xf32>
    %81 = arith.addf %79, %80 : vector<8x16xf32>
    %82 = vector.extract_strided_slice %66 {offsets = [0, 32], sizes = [8, 16], strides = [1, 1]} : vector<8x48xf32> to vector<8x16xf32>
    %c7_i32_35 = arith.constant 7 : i32
    %83 = tpu.dynamic_rotate %82 by %c7_i32_35 dim 0 : vector<8x16xf32>, i32 -> vector<8x16xf32>
    %84 = tpu.iota {dimensions = array<i32: 0>} : vector<8x16xi32>
    %c7_i32_36 = arith.constant 7 : i32
    %85 = vector.broadcast %c7_i32_36 : i32 to vector<8x16xi32>
    %86 = arith.cmpi eq, %84, %85 : vector<8x16xi32>
    %cst_37 = arith.constant 0.000000e+00 : f32
    %87 = vector.broadcast %cst_37 : f32 to vector<8x16xf32>
    %88 = arith.select %86, %87, %83 : vector<8x16xi1>, vector<8x16xf32>
    %89 = arith.addf %81, %88 : vector<8x16xf32>
    %90 = vector.broadcast %65 : vector<1x16xf32> to vector<8x16xf32>
    %91 = arith.addf %78, %90 : vector<8x16xf32>
    %92 = vector.broadcast %65 : vector<1x16xf32> to vector<8x16xf32>
    %93 = arith.addf %89, %92 : vector<8x16xf32>
    %94 = arith.addf %9, %91 : vector<8x16xf32>
    %95 = arith.addf %17, %93 : vector<8x16xf32>
    %96 = tpu.concatenate %94, %95 in 0 : vector<8x16xf32>, vector<8x16xf32> -> vector<16x16xf32>
    %97 = arith.truncf %96 : vector<16x16xf32> to vector<16x16xbf16>
    %c0_38 = arith.constant 0 : index
    %c0_39 = arith.constant 0 : index
    %98 = vector.load %arg8[%c0_38, %c0_39] : memref<16x20xbf16, #tpu.memory_space<vmem>>, vector<16x20xbf16>
    %cst_40 = arith.constant dense<0.000000e+00> : vector<16x20xf32>
    %99 = tpu.matmul %97, %98, %cst_40 {dimension_numbers = #tpu.dot_dimension_numbers<[1], [0], [0], [1], [0, 0, 1, 1], [], []>} : vector<16x16xbf16>, vector<16x20xbf16>, vector<16x20xf32> -> vector<16x20xf32>
    %c0_41 = arith.constant 0 : index
    %c0_42 = arith.constant 0 : index
    %100 = vector.load %arg9[%c0_41, %c0_42] : memref<1x20xf32, #tpu.memory_space<vmem>>, vector<1x20xf32>
    %101 = vector.broadcast %100 : vector<1x20xf32> to vector<16x20xf32>
    %102 = arith.addf %99, %101 : vector<16x20xf32>
    %103 = vector.extract_strided_slice %102 {offsets = [0, 0], sizes = [16, 2], strides = [1, 1]} : vector<16x20xf32> to vector<16x2xf32>
    %104 = arith.truncf %103 : vector<16x2xf32> to vector<16x2xbf16>
    %105 = vector.extract_strided_slice %102 {offsets = [0, 2], sizes = [16, 2], strides = [1, 1]} : vector<16x20xf32> to vector<16x2xf32>
    %106 = arith.truncf %105 : vector<16x2xf32> to vector<16x2xbf16>
    %c0_43 = arith.constant 0 : index
    %c0_44 = arith.constant 0 : index
    %107 = vector.load %arg14[%c0_43, %c0_44] : memref<16x2xbf16, #tpu.memory_space<vmem>>, vector<16x2xbf16>
    tpu.vector_store %arg14[%c0_43, %c0_44], %106 {strides = array<i32>} : memref<16x2xbf16, #tpu.memory_space<vmem>>, vector<16x2xbf16>,
    %108 = vector.extract_strided_slice %102 {offsets = [0, 4], sizes = [16, 16], strides = [1, 1]} : vector<16x20xf32> to vector<16x16xf32>
    %109 = arith.truncf %108 : vector<16x16xf32> to vector<16x16xbf16>
    %c0_45 = arith.constant 0 : index
    %c0_46 = arith.constant 0 : index
    %110 = vector.load %arg15[%c0_45, %c0_46] : memref<16x16xbf16, #tpu.memory_space<vmem>>, vector<16x16xbf16>
    tpu.vector_store %arg15[%c0_45, %c0_46], %109 {strides = array<i32>} : memref<16x16xbf16, #tpu.memory_space<vmem>>, vector<16x16xbf16>,
    %cst_47 = arith.constant -1.000000e+30 : f32
    %111 = vector.broadcast %cst_47 : f32 to vector<16x1xf32>
    %cst_48 = arith.constant 0.000000e+00 : f32
    %112 = vector.broadcast %cst_48 : f32 to vector<16x1xf32>
    %cst_49 = arith.constant 0.000000e+00 : f32
    %113 = vector.broadcast %cst_49 : f32 to vector<16x16xf32>
    %c0_i32_50 = arith.constant 0 : i32
    %c16_i32 = arith.constant 16 : i32
    %114 = arith.muli %c0_i32_50, %c16_i32 : i32
    %115 = tpu.assume_multiple %114, 16 : i32
    %116 = arith.index_cast %115 : i32 to index
    %c0_51 = arith.constant 0 : index
    %117 = vector.load %arg14[%116, %c0_51] : memref<16x2xbf16, #tpu.memory_space<vmem>>, vector<16x2xbf16>
    %118 = arith.index_cast %115 : i32 to index
    %c0_52 = arith.constant 0 : index
    %119 = vector.load %arg15[%118, %c0_52] : memref<16x16xbf16, #tpu.memory_space<vmem>>, vector<16x16xbf16>
    %cst_53 = arith.constant dense<0.000000e+00> : vector<16x16xf32>
    %120 = tpu.matmul %104, %117, %cst_53 {dimension_numbers = #tpu.dot_dimension_numbers<[1], [1], [0], [0], [0, 0, 1, 0], [], []>} : vector<16x2xbf16>, vector<16x2xbf16>, vector<16x16xf32> -> vector<16x16xf32>
    %cst_54 = arith.constant dense<0xFF800000> : vector<16xf32>
    %121 = vector.multi_reduction <maximumf>, %120, %cst_54 [1] : vector<16x16xf32> to vector<16xf32>
    %122 = vector.shape_cast %121 : vector<16xf32> to vector<16x1xf32>
    %123 = arith.maximumf %111, %122 : vector<16x1xf32>
    %124 = arith.subf %111, %123 : vector<16x1xf32>
    %125 = math.exp %124 : vector<16x1xf32>
    %126 = vector.broadcast %123 : vector<16x1xf32> to vector<16x16xf32>
    %127 = arith.subf %120, %126 : vector<16x16xf32>
    %128 = math.exp %127 : vector<16x16xf32>
    %129 = arith.mulf %125, %112 : vector<16x1xf32>
    %cst_55 = arith.constant dense<0.000000e+00> : vector<16xf32>
    %130 = vector.multi_reduction <add>, %128, %cst_55 [1] : vector<16x16xf32> to vector<16xf32>
    %131 = vector.shape_cast %130 : vector<16xf32> to vector<16x1xf32>
    %132 = arith.addf %129, %131 : vector<16x1xf32>
    %133 = vector.broadcast %125 : vector<16x1xf32> to vector<16x16xf32>
    %134 = arith.mulf %133, %113 : vector<16x16xf32>
    %135 = arith.truncf %128 : vector<16x16xf32> to vector<16x16xbf16>
    %cst_56 = arith.constant dense<0.000000e+00> : vector<16x16xf32>
    %136 = tpu.matmul %135, %119, %cst_56 {dimension_numbers = #tpu.dot_dimension_numbers<[1], [0], [0], [1], [0, 0, 1, 1], [], []>} : vector<16x16xbf16>, vector<16x16xbf16>, vector<16x16xf32> -> vector<16x16xf32>
    %137 = arith.addf %134, %136 : vector<16x16xf32>
    %c1_i32_57 = arith.constant 1 : i32
    %138 = tpu.reciprocal %132 {approx = true} : vector<16x1xf32> -> vector<16x1xf32>
    %139 = vector.broadcast %138 : vector<16x1xf32> to vector<16x16xf32>
    %140 = arith.mulf %137, %139 : vector<16x16xf32>
    %c0_58 = arith.constant 0 : index
    %c0_59 = arith.constant 0 : index
    %141 = vector.load %arg10[%c0_58, %c0_59] : memref<1x1xf32, #tpu.memory_space<vmem>>, vector<1x1xf32>
    %142 = math.tanh %141 : vector<1x1xf32>
    %143 = vector.broadcast %142 : vector<1x1xf32> to vector<16x16xf32>
    %144 = arith.mulf %143, %140 : vector<16x16xf32>
    %145 = arith.addf %144, %96 : vector<16x16xf32>
    %146 = vector.extract_strided_slice %145 {offsets = [0, 0], sizes = [8, 16], strides = [1, 1]} : vector<16x16xf32> to vector<8x16xf32>
    %147 = vector.extract_strided_slice %145 {offsets = [8, 0], sizes = [8, 16], strides = [1, 1]} : vector<16x16xf32> to vector<8x16xf32>
    %c0_60 = arith.constant 0 : index
    %c0_61 = arith.constant 0 : index
    %148 = vector.load %arg11[%c0_60, %c0_61] : memref<16x64xbf16, #tpu.memory_space<vmem>>, vector<16x64xbf16>
    %c0_62 = arith.constant 0 : index
    %c0_63 = arith.constant 0 : index
    %149 = vector.load %arg12[%c0_62, %c0_63] : memref<1x16xf32, #tpu.memory_space<vmem>>, vector<1x16xf32>
    %150 = arith.truncf %146 : vector<8x16xf32> to vector<8x16xbf16>
    %cst_64 = arith.constant dense<0.000000e+00> : vector<8x64xf32>
    %151 = tpu.matmul %150, %148, %cst_64 {dimension_numbers = #tpu.dot_dimension_numbers<[1], [0], [0], [1], [0, 0, 1, 1], [], []>} : vector<8x16xbf16>, vector<16x64xbf16>, vector<8x64xf32> -> vector<8x64xf32>
    %152 = arith.truncf %147 : vector<8x16xf32> to vector<8x16xbf16>
    %cst_65 = arith.constant dense<0.000000e+00> : vector<8x64xf32>
    %153 = tpu.matmul %152, %148, %cst_65 {dimension_numbers = #tpu.dot_dimension_numbers<[1], [0], [0], [1], [0, 0, 1, 1], [], []>} : vector<8x16xbf16>, vector<16x64xbf16>, vector<8x64xf32> -> vector<8x64xf32>
    %154 = vector.extract_strided_slice %151 {offsets = [0, 16], sizes = [8, 16], strides = [1, 1]} : vector<8x64xf32> to vector<8x16xf32>
    %155 = vector.extract_strided_slice %153 {offsets = [0, 32], sizes = [8, 16], strides = [1, 1]} : vector<8x64xf32> to vector<8x16xf32>
    %156 = arith.addf %154, %155 : vector<8x16xf32>
    %157 = vector.extract_strided_slice %153 {offsets = [0, 0], sizes = [8, 16], strides = [1, 1]} : vector<8x64xf32> to vector<8x16xf32>
    %c1_i32_66 = arith.constant 1 : i32
    %158 = tpu.dynamic_rotate %157 by %c1_i32_66 dim 0 : vector<8x16xf32>, i32 -> vector<8x16xf32>
    %159 = tpu.iota {dimensions = array<i32: 0>} : vector<8x16xi32>
    %c0_i32_67 = arith.constant 0 : i32
    %160 = vector.broadcast %c0_i32_67 : i32 to vector<8x16xi32>
    %161 = arith.cmpi eq, %159, %160 : vector<8x16xi32>
    %cst_68 = arith.constant 0.000000e+00 : f32
    %162 = vector.broadcast %cst_68 : f32 to vector<8x16xf32>
    %163 = arith.select %161, %162, %158 : vector<8x16xi1>, vector<8x16xf32>
    %164 = arith.addf %156, %163 : vector<8x16xf32>
    %165 = vector.extract_strided_slice %151 {offsets = [0, 48], sizes = [8, 16], strides = [1, 1]} : vector<8x64xf32> to vector<8x16xf32>
    %c7_i32_69 = arith.constant 7 : i32
    %166 = tpu.dynamic_rotate %165 by %c7_i32_69 dim 0 : vector<8x16xf32>, i32 -> vector<8x16xf32>
    %167 = tpu.iota {dimensions = array<i32: 0>} : vector<8x16xi32>
    %c7_i32_70 = arith.constant 7 : i32
    %168 = vector.broadcast %c7_i32_70 : i32 to vector<8x16xi32>
    %169 = arith.cmpi eq, %167, %168 : vector<8x16xi32>
    %cst_71 = arith.constant 0.000000e+00 : f32
    %170 = vector.broadcast %cst_71 : f32 to vector<8x16xf32>
    %171 = arith.select %169, %170, %166 : vector<8x16xi1>, vector<8x16xf32>
    %172 = arith.addf %164, %171 : vector<8x16xf32>
    %173 = vector.broadcast %149 : vector<1x16xf32> to vector<8x16xf32>
    %174 = arith.addf %172, %173 : vector<8x16xf32>
    %cst_72 = arith.constant 2.000000e-01 : f32
    %175 = vector.broadcast %cst_72 : f32 to vector<8x16xf32>
    %176 = arith.mulf %175, %174 : vector<8x16xf32>
    %177 = arith.maximumf %174, %176 : vector<8x16xf32>
    %c0_73 = arith.constant 0 : index
    %c0_74 = arith.constant 0 : index
    %c0_75 = arith.constant 0 : index
    %178 = vector.load %arg13[%c0_73, %c0_74, %c0_75] : memref<1x8x16xf32, #tpu.memory_space<vmem>>, vector<1x8x16xf32>
    %179 = vector.shape_cast %178 : vector<1x8x16xf32> to vector<8x16xf32>
    %180 = vector.shape_cast %177 : vector<8x16xf32> to vector<1x8x16xf32>
    tpu.vector_store %arg13[%c0_73, %c0_74, %c0_75], %180 {strides = array<i32>} : memref<1x8x16xf32, #tpu.memory_space<vmem>>, vector<1x8x16xf32>,
    return
  }
  func.func @transform_0(%arg0: i32) -> (i32, i32, i32, i32) {
    %c0_i32 = arith.constant 0 : i32
    %c0_i32_0 = arith.constant 0 : i32
    %c0_i32_1 = arith.constant 0 : i32
    %c0_i32_2 = arith.constant 0 : i32
    return %arg0, %c0_i32, %c0_i32_0, %c0_i32_1 : i32, i32, i32, i32
  }
  func.func @transform_1(%arg0: i32) -> (i32, i32) {
    %c0_i32 = arith.constant 0 : i32
    %c0_i32_0 = arith.constant 0 : i32
    %c0_i32_1 = arith.constant 0 : i32
    return %c0_i32, %c0_i32_0 : i32, i32
  }
  func.func @transform_2(%arg0: i32) -> (i32, i32) {
    %c0_i32 = arith.constant 0 : i32
    %c0_i32_0 = arith.constant 0 : i32
    %c0_i32_1 = arith.constant 0 : i32
    return %c0_i32, %c0_i32_0 : i32, i32
  }
  func.func @transform_3(%arg0: i32) -> (i32, i32) {
    %c0_i32 = arith.constant 0 : i32
    %c0_i32_0 = arith.constant 0 : i32
    %c0_i32_1 = arith.constant 0 : i32
    return %c0_i32, %c0_i32_0 : i32, i32
  }
  func.func @transform_4(%arg0: i32) -> (i32, i32) {
    %c0_i32 = arith.constant 0 : i32
    %c0_i32_0 = arith.constant 0 : i32
    %c0_i32_1 = arith.constant 0 : i32
    return %c0_i32, %c0_i32_0 : i32, i32
  }
  func.func @transform_5(%arg0: i32) -> (i32, i32) {
    %c0_i32 = arith.constant 0 : i32
    %c0_i32_0 = arith.constant 0 : i32
    %c0_i32_1 = arith.constant 0 : i32
    return %c0_i32, %c0_i32_0 : i32, i32
  }
  func.func @transform_6(%arg0: i32) -> (i32, i32) {
    %c0_i32 = arith.constant 0 : i32
    %c0_i32_0 = arith.constant 0 : i32
    %c0_i32_1 = arith.constant 0 : i32
    return %c0_i32, %c0_i32_0 : i32, i32
  }
  func.func @transform_7(%arg0: i32) -> (i32, i32) {
    %c0_i32 = arith.constant 0 : i32
    %c0_i32_0 = arith.constant 0 : i32
    %c0_i32_1 = arith.constant 0 : i32
    return %c0_i32, %c0_i32_0 : i32, i32
  }
  func.func @transform_8(%arg0: i32) -> (i32, i32) {
    %c0_i32 = arith.constant 0 : i32
    %c0_i32_0 = arith.constant 0 : i32
    %c0_i32_1 = arith.constant 0 : i32
    return %c0_i32, %c0_i32_0 : i32, i32
  }
  func.func @transform_9(%arg0: i32) -> (i32, i32) {
    %c0_i32 = arith.constant 0 : i32
    %c0_i32_0 = arith.constant 0 : i32
    %c0_i32_1 = arith.constant 0 : i32
    return %c0_i32, %c0_i32_0 : i32, i32
  }
  func.func @transform_10(%arg0: i32) -> (i32, i32) {
    %c0_i32 = arith.constant 0 : i32
    %c0_i32_0 = arith.constant 0 : i32
    %c0_i32_1 = arith.constant 0 : i32
    return %c0_i32, %c0_i32_0 : i32, i32
  }
  func.func @transform_11(%arg0: i32) -> (i32, i32) {
    %c0_i32 = arith.constant 0 : i32
    %c0_i32_0 = arith.constant 0 : i32
    %c0_i32_1 = arith.constant 0 : i32
    return %c0_i32, %c0_i32_0 : i32, i32
  }
  func.func @transform_12(%arg0: i32) -> (i32, i32, i32) {
    %c0_i32 = arith.constant 0 : i32
    %c0_i32_0 = arith.constant 0 : i32
    %c0_i32_1 = arith.constant 0 : i32
    return %arg0, %c0_i32, %c0_i32_0 : i32, i32, i32
  }
}

module attributes {stable_mosaic.version = 11 : i64} {
  func.func @_disc_block_kernel(%arg0: i32, %arg1: memref<1x2x8x8xbf16, #tpu.memory_space<vmem>>, %arg2: memref<8x16xbf16, #tpu.memory_space<vmem>>, %arg3: memref<1x16xf32, #tpu.memory_space<vmem>>, %arg4: memref<16x48xbf16, #tpu.memory_space<vmem>>, %arg5: memref<1x16xf32, #tpu.memory_space<vmem>>, %arg6: memref<16x48xbf16, #tpu.memory_space<vmem>>, %arg7: memref<1x16xf32, #tpu.memory_space<vmem>>, %arg8: memref<16x20xbf16, #tpu.memory_space<vmem>>, %arg9: memref<1x20xf32, #tpu.memory_space<vmem>>, %arg10: memref<1x1xf32, #tpu.memory_space<vmem>>, %arg11: memref<16x64xbf16, #tpu.memory_space<vmem>>, %arg12: memref<1x16xf32, #tpu.memory_space<vmem>>, %arg13: memref<1x8x16xf32, #tpu.memory_space<vmem>>, %arg14: memref<16x2xbf16, #tpu.memory_space<vmem>>, %arg15: memref<16x16xbf16, #tpu.memory_space<vmem>>) attributes {dimension_semantics = [#tpu.dimension_semantics<parallel>], iteration_bounds = array<i64: 2>, scalar_prefetch = 0 : i64, scratch_operands = 2 : i64, tpu.core_type = #tpu.core_type<tc>, window_params = [{transform_indices = @transform_0, window_bounds = array<i64: 1, 2, 8, 8>}, {pipeline_mode = #tpu.pipeline_mode<synchronous>, transform_indices = @transform_1, window_bounds = array<i64: 8, 16>}, {pipeline_mode = #tpu.pipeline_mode<synchronous>, transform_indices = @transform_2, window_bounds = array<i64: 1, 16>}, {pipeline_mode = #tpu.pipeline_mode<synchronous>, transform_indices = @transform_3, window_bounds = array<i64: 16, 48>}, {pipeline_mode = #tpu.pipeline_mode<synchronous>, transform_indices = @transform_4, window_bounds = array<i64: 1, 16>}, {pipeline_mode = #tpu.pipeline_mode<synchronous>, transform_indices = @transform_5, window_bounds = array<i64: 16, 48>}, {pipeline_mode = #tpu.pipeline_mode<synchronous>, transform_indices = @transform_6, window_bounds = array<i64: 1, 16>}, {pipeline_mode = #tpu.pipeline_mode<synchronous>, transform_indices = @transform_7, window_bounds = array<i64: 16, 20>}, {pipeline_mode = #tpu.pipeline_mode<synchronous>, transform_indices = @transform_8, window_bounds = array<i64: 1, 20>}, {pipeline_mode = #tpu.pipeline_mode<synchronous>, transform_indices = @transform_9, window_bounds = array<i64: 1, 1>}, {pipeline_mode = #tpu.pipeline_mode<synchronous>, transform_indices = @transform_10, window_bounds = array<i64: 16, 64>}, {pipeline_mode = #tpu.pipeline_mode<synchronous>, transform_indices = @transform_11, window_bounds = array<i64: 1, 16>}, {transform_indices = @transform_12, window_bounds = array<i64: 1, 8, 16>}]} {
    %c0 = arith.constant 0 : index
    %c0_0 = arith.constant 0 : index
    %0 = vector.load %arg2[%c0, %c0_0] : memref<8x16xbf16, #tpu.memory_space<vmem>>, vector<8x16xbf16>
    %c0_1 = arith.constant 0 : index
    %c0_2 = arith.constant 0 : index
    %1 = vector.load %arg3[%c0_1, %c0_2] : memref<1x16xf32, #tpu.memory_space<vmem>>, vector<1x16xf32>
    %c0_3 = arith.constant 0 : index
    %c0_4 = arith.constant 0 : index
    %c0_5 = arith.constant 0 : index
    %c0_6 = arith.constant 0 : index
    %2 = vector.load %arg1[%c0_3, %c0_4, %c0_5, %c0_6] : memref<1x2x8x8xbf16, #tpu.memory_space<vmem>>, vector<1x1x8x8xbf16>
    %3 = vector.shape_cast %2 : vector<1x1x8x8xbf16> to vector<8x8xbf16>
    %cst = arith.constant 2.001950e-01 : bf16
    %4 = vector.broadcast %cst : bf16 to vector<8x8xbf16>
    %5 = arith.mulf %4, %3 : vector<8x8xbf16>
    %6 = arith.maximumf %3, %5 : vector<8x8xbf16>
    %cst_7 = arith.constant dense<0.000000e+00> : vector<8x16xf32>
    %7 = tpu.matmul %6, %0, %cst_7 {dimension_numbers = #tpu.dot_dimension_numbers<[1], [0], [0], [1], [0, 0, 1, 1], [], []>} : vector<8x8xbf16>, vector<8x16xbf16>, vector<8x16xf32> -> vector<8x16xf32>
    %8 = vector.broadcast %1 : vector<1x16xf32> to vector<8x16xf32>
    %9 = arith.addf %7, %8 : vector<8x16xf32>
    %c0_8 = arith.constant 0 : index
    %c1 = arith.constant 1 : index
    %c0_9 = arith.constant 0 : index
    %c0_10 = arith.constant 0 : index
    %10 = vector.load %arg1[%c0_8, %c1, %c0_9, %c0_10] : memref<1x2x8x8xbf16, #tpu.memory_space<vmem>>, vector<1x1x8x8xbf16>
    %11 = vector.shape_cast %10 : vector<1x1x8x8xbf16> to vector<8x8xbf16>
    %cst_11 = arith.constant 2.001950e-01 : bf16
    %12 = vector.broadcast %cst_11 : bf16 to vector<8x8xbf16>
    %13 = arith.mulf %12, %11 : vector<8x8xbf16>
    %14 = arith.maximumf %11, %13 : vector<8x8xbf16>
    %cst_12 = arith.constant dense<0.000000e+00> : vector<8x16xf32>
    %15 = tpu.matmul %14, %0, %cst_12 {dimension_numbers = #tpu.dot_dimension_numbers<[1], [0], [0], [1], [0, 0, 1, 1], [], []>} : vector<8x8xbf16>, vector<8x16xbf16>, vector<8x16xf32> -> vector<8x16xf32>
    %16 = vector.broadcast %1 : vector<1x16xf32> to vector<8x16xf32>
    %17 = arith.addf %15, %16 : vector<8x16xf32>
    %cst_13 = arith.constant 2.000000e-01 : f32
    %18 = vector.broadcast %cst_13 : f32 to vector<8x16xf32>
    %19 = arith.mulf %18, %9 : vector<8x16xf32>
    %20 = arith.maximumf %9, %19 : vector<8x16xf32>
    %21 = arith.truncf %20 : vector<8x16xf32> to vector<8x16xbf16>
    %cst_14 = arith.constant 2.000000e-01 : f32
    %22 = vector.broadcast %cst_14 : f32 to vector<8x16xf32>
    %23 = arith.mulf %22, %17 : vector<8x16xf32>
    %24 = arith.maximumf %17, %23 : vector<8x16xf32>
    %25 = arith.truncf %24 : vector<8x16xf32> to vector<8x16xbf16>
    %c0_15 = arith.constant 0 : index
    %c0_16 = arith.constant 0 : index
    %26 = vector.load %arg4[%c0_15, %c0_16] : memref<16x48xbf16, #tpu.memory_space<vmem>>, vector<16x48xbf16>
    %c0_17 = arith.constant 0 : index
    %c0_18 = arith.constant 0 : index
    %27 = vector.load %arg5[%c0_17, %c0_18] : memref<1x16xf32, #tpu.memory_space<vmem>>, vector<1x16xf32>
    %cst_19 = arith.constant dense<0.000000e+00> : vector<8x48xf32>
    %28 = tpu.matmul %21, %26, %cst_19 {dimension_numbers = #tpu.dot_dimension_numbers<[1], [0], [0], [1], [0, 0, 1, 1], [], []>} : vector<8x16xbf16>, vector<16x48xbf16>, vector<8x48xf32> -> vector<8x48xf32>
    %cst_20 = arith.constant dense<0.000000e+00> : vector<8x48xf32>
    %29 = tpu.matmul %25, %26, %cst_20 {dimension_numbers = #tpu.dot_dimension_numbers<[1], [0], [0], [1], [0, 0, 1, 1], [], []>} : vector<8x16xbf16>, vector<16x48xbf16>, vector<8x48xf32> -> vector<8x48xf32>
    %30 = vector.extract_strided_slice %28 {offsets = [0, 16], sizes = [8, 16], strides = [1, 1]} : vector<8x48xf32> to vector<8x16xf32>
    %31 = vector.extract_strided_slice %29 {offsets = [0, 32], sizes = [8, 16], strides = [1, 1]} : vector<8x48xf32> to vector<8x16xf32>
    %32 = arith.addf %30, %31 : vector<8x16xf32>
    %33 = vector.extract_strided_slice %29 {offsets = [0, 0], sizes = [8, 16], strides = [1, 1]} : vector<8x48xf32> to vector<8x16xf32>
    %c1_i32 = arith.constant 1 : i32
    %34 = tpu.dynamic_rotate %33 by %c1_i32 dim 0 : vector<8x16xf32>, i32 -> vector<8x16xf32>
    %35 = tpu.iota {dimensions = array<i32: 0>} : vector<8x16xi32>
    %c0_i32 = arith.constant 0 : i32
    %36 = vector.broadcast %c0_i32 : i32 to vector<8x16xi32>
    %37 = arith.cmpi eq, %35, %36 : vector<8x16xi32>
    %cst_21 = arith.constant 0.000000e+00 : f32
    %38 = vector.broadcast %cst_21 : f32 to vector<8x16xf32>
    %39 = arith.select %37, %38, %34 : vector<8x16xi1>, vector<8x16xf32>
    %40 = arith.addf %32, %39 : vector<8x16xf32>
    %41 = vector.extract_strided_slice %28 {offsets = [0, 0], sizes = [8, 16], strides = [1, 1]} : vector<8x48xf32> to vector<8x16xf32>
    %42 = vector.extract_strided_slice %29 {offsets = [0, 16], sizes = [8, 16], strides = [1, 1]} : vector<8x48xf32> to vector<8x16xf32>
    %43 = arith.addf %41, %42 : vector<8x16xf32>
    %44 = vector.extract_strided_slice %28 {offsets = [0, 32], sizes = [8, 16], strides = [1, 1]} : vector<8x48xf32> to vector<8x16xf32>
    %c7_i32 = arith.constant 7 : i32
    %45 = tpu.dynamic_rotate %44 by %c7_i32 dim 0 : vector<8x16xf32>, i32 -> vector<8x16xf32>
    %46 = tpu.iota {dimensions = array<i32: 0>} : vector<8x16xi32>
    %c7_i32_22 = arith.constant 7 : i32
    %47 = vector.broadcast %c7_i32_22 : i32 to vector<8x16xi32>
    %48 = arith.cmpi eq, %46, %47 : vector<8x16xi32>
    %cst_23 = arith.constant 0.000000e+00 : f32
    %49 = vector.broadcast %cst_23 : f32 to vector<8x16xf32>
    %50 = arith.select %48, %49, %45 : vector<8x16xi1>, vector<8x16xf32>
    %51 = arith.addf %43, %50 : vector<8x16xf32>
    %52 = vector.broadcast %27 : vector<1x16xf32> to vector<8x16xf32>
    %53 = arith.addf %40, %52 : vector<8x16xf32>
    %54 = vector.broadcast %27 : vector<1x16xf32> to vector<8x16xf32>
    %55 = arith.addf %51, %54 : vector<8x16xf32>
    %cst_24 = arith.constant 2.000000e-01 : f32
    %56 = vector.broadcast %cst_24 : f32 to vector<8x16xf32>
    %57 = arith.mulf %56, %53 : vector<8x16xf32>
    %58 = arith.maximumf %53, %57 : vector<8x16xf32>
    %59 = arith.truncf %58 : vector<8x16xf32> to vector<8x16xbf16>
    %cst_25 = arith.constant 2.000000e-01 : f32
    %60 = vector.broadcast %cst_25 : f32 to vector<8x16xf32>
    %61 = arith.mulf %60, %55 : vector<8x16xf32>
    %62 = arith.maximumf %55, %61 : vector<8x16xf32>
    %63 = arith.truncf %62 : vector<8x16xf32> to vector<8x16xbf16>
    %c0_26 = arith.constant 0 : index
    %c0_27 = arith.constant 0 : index
    %64 = vector.load %arg6[%c0_26, %c0_27] : memref<16x48xbf16, #tpu.memory_space<vmem>>, vector<16x48xbf16>
    %c0_28 = arith.constant 0 : index
    %c0_29 = arith.constant 0 : index
    %65 = vector.load %arg7[%c0_28, %c0_29] : memref<1x16xf32, #tpu.memory_space<vmem>>, vector<1x16xf32>
    %cst_30 = arith.constant dense<0.000000e+00> : vector<8x48xf32>
    %66 = tpu.matmul %59, %64, %cst_30 {dimension_numbers = #tpu.dot_dimension_numbers<[1], [0], [0], [1], [0, 0, 1, 1], [], []>} : vector<8x16xbf16>, vector<16x48xbf16>, vector<8x48xf32> -> vector<8x48xf32>
    %cst_31 = arith.constant dense<0.000000e+00> : vector<8x48xf32>
    %67 = tpu.matmul %63, %64, %cst_31 {dimension_numbers = #tpu.dot_dimension_numbers<[1], [0], [0], [1], [0, 0, 1, 1], [], []>} : vector<8x16xbf16>, vector<16x48xbf16>, vector<8x48xf32> -> vector<8x48xf32>
    %68 = vector.extract_strided_slice %66 {offsets = [0, 16], sizes = [8, 16], strides = [1, 1]} : vector<8x48xf32> to vector<8x16xf32>
    %69 = vector.extract_strided_slice %67 {offsets = [0, 32], sizes = [8, 16], strides = [1, 1]} : vector<8x48xf32> to vector<8x16xf32>
    %70 = arith.addf %68, %69 : vector<8x16xf32>
    %71 = vector.extract_strided_slice %67 {offsets = [0, 0], sizes = [8, 16], strides = [1, 1]} : vector<8x48xf32> to vector<8x16xf32>
    %c1_i32_32 = arith.constant 1 : i32
    %72 = tpu.dynamic_rotate %71 by %c1_i32_32 dim 0 : vector<8x16xf32>, i32 -> vector<8x16xf32>
    %73 = tpu.iota {dimensions = array<i32: 0>} : vector<8x16xi32>
    %c0_i32_33 = arith.constant 0 : i32
    %74 = vector.broadcast %c0_i32_33 : i32 to vector<8x16xi32>
    %75 = arith.cmpi eq, %73, %74 : vector<8x16xi32>
    %cst_34 = arith.constant 0.000000e+00 : f32
    %76 = vector.broadcast %cst_34 : f32 to vector<8x16xf32>
    %77 = arith.select %75, %76, %72 : vector<8x16xi1>, vector<8x16xf32>
    %78 = arith.addf %70, %77 : vector<8x16xf32>
    %79 = vector.extract_strided_slice %66 {offsets = [0, 0], sizes = [8, 16], strides = [1, 1]} : vector<8x48xf32> to vector<8x16xf32>
    %80 = vector.extract_strided_slice %67 {offsets = [0, 16], sizes = [8, 16], strides = [1, 1]} : vector<8x48xf32> to vector<8x16xf32>
    %81 = arith.addf %79, %80 : vector<8x16xf32>
    %82 = vector.extract_strided_slice %66 {offsets = [0, 32], sizes = [8, 16], strides = [1, 1]} : vector<8x48xf32> to vector<8x16xf32>
    %c7_i32_35 = arith.constant 7 : i32
    %83 = tpu.dynamic_rotate %82 by %c7_i32_35 dim 0 : vector<8x16xf32>, i32 -> vector<8x16xf32>
    %84 = tpu.iota {dimensions = array<i32: 0>} : vector<8x16xi32>
    %c7_i32_36 = arith.constant 7 : i32
    %85 = vector.broadcast %c7_i32_36 : i32 to vector<8x16xi32>
    %86 = arith.cmpi eq, %84, %85 : vector<8x16xi32>
    %cst_37 = arith.constant 0.000000e+00 : f32
    %87 = vector.broadcast %cst_37 : f32 to vector<8x16xf32>
    %88 = arith.select %86, %87, %83 : vector<8x16xi1>, vector<8x16xf32>
    %89 = arith.addf %81, %88 : vector<8x16xf32>
    %90 = vector.broadcast %65 : vector<1x16xf32> to vector<8x16xf32>
    %91 = arith.addf %78, %90 : vector<8x16xf32>
    %92 = vector.broadcast %65 : vector<1x16xf32> to vector<8x16xf32>
    %93 = arith.addf %89, %92 : vector<8x16xf32>
    %94 = arith.addf %9, %91 : vector<8x16xf32>
    %95 = arith.addf %17, %93 : vector<8x16xf32>
    %96 = tpu.concatenate %94, %95 in 0 : vector<8x16xf32>, vector<8x16xf32> -> vector<16x16xf32>
    %97 = arith.truncf %96 : vector<16x16xf32> to vector<16x16xbf16>
    %c0_38 = arith.constant 0 : index
    %c0_39 = arith.constant 0 : index
    %98 = vector.load %arg8[%c0_38, %c0_39] : memref<16x20xbf16, #tpu.memory_space<vmem>>, vector<16x20xbf16>
    %cst_40 = arith.constant dense<0.000000e+00> : vector<16x20xf32>
    %99 = tpu.matmul %97, %98, %cst_40 {dimension_numbers = #tpu.dot_dimension_numbers<[1], [0], [0], [1], [0, 0, 1, 1], [], []>} : vector<16x16xbf16>, vector<16x20xbf16>, vector<16x20xf32> -> vector<16x20xf32>
    %c0_41 = arith.constant 0 : index
    %c0_42 = arith.constant 0 : index
    %100 = vector.load %arg9[%c0_41, %c0_42] : memref<1x20xf32, #tpu.memory_space<vmem>>, vector<1x20xf32>
    %101 = vector.broadcast %100 : vector<1x20xf32> to vector<16x20xf32>
    %102 = arith.addf %99, %101 : vector<16x20xf32>
    %103 = vector.extract_strided_slice %102 {offsets = [0, 0], sizes = [16, 2], strides = [1, 1]} : vector<16x20xf32> to vector<16x2xf32>
    %104 = arith.truncf %103 : vector<16x2xf32> to vector<16x2xbf16>
    %105 = vector.extract_strided_slice %102 {offsets = [0, 2], sizes = [16, 2], strides = [1, 1]} : vector<16x20xf32> to vector<16x2xf32>
    %106 = arith.truncf %105 : vector<16x2xf32> to vector<16x2xbf16>
    %c0_43 = arith.constant 0 : index
    %c0_44 = arith.constant 0 : index
    %107 = vector.load %arg14[%c0_43, %c0_44] : memref<16x2xbf16, #tpu.memory_space<vmem>>, vector<16x2xbf16>
    tpu.vector_store %arg14[%c0_43, %c0_44], %106 {strides = array<i32>} : memref<16x2xbf16, #tpu.memory_space<vmem>>, vector<16x2xbf16>,
    %108 = vector.extract_strided_slice %102 {offsets = [0, 4], sizes = [16, 16], strides = [1, 1]} : vector<16x20xf32> to vector<16x16xf32>
    %109 = arith.truncf %108 : vector<16x16xf32> to vector<16x16xbf16>
    %c0_45 = arith.constant 0 : index
    %c0_46 = arith.constant 0 : index
    %110 = vector.load %arg15[%c0_45, %c0_46] : memref<16x16xbf16, #tpu.memory_space<vmem>>, vector<16x16xbf16>
    tpu.vector_store %arg15[%c0_45, %c0_46], %109 {strides = array<i32>} : memref<16x16xbf16, #tpu.memory_space<vmem>>, vector<16x16xbf16>,
    %cst_47 = arith.constant -1.000000e+30 : f32
    %111 = vector.broadcast %cst_47 : f32 to vector<16x1xf32>
    %cst_48 = arith.constant 0.000000e+00 : f32
    %112 = vector.broadcast %cst_48 : f32 to vector<16x1xf32>
    %cst_49 = arith.constant 0.000000e+00 : f32
    %113 = vector.broadcast %cst_49 : f32 to vector<16x16xf32>
    %c0_i32_50 = arith.constant 0 : i32
    %c16_i32 = arith.constant 16 : i32
    %114 = arith.muli %c0_i32_50, %c16_i32 : i32
    %115 = tpu.assume_multiple %114, 16 : i32
    %116 = arith.index_cast %115 : i32 to index
    %c0_51 = arith.constant 0 : index
    %117 = vector.load %arg14[%116, %c0_51] : memref<16x2xbf16, #tpu.memory_space<vmem>>, vector<16x2xbf16>
    %118 = arith.index_cast %115 : i32 to index
    %c0_52 = arith.constant 0 : index
    %119 = vector.load %arg15[%118, %c0_52] : memref<16x16xbf16, #tpu.memory_space<vmem>>, vector<16x16xbf16>
    %cst_53 = arith.constant dense<0.000000e+00> : vector<16x16xf32>
    %120 = tpu.matmul %104, %117, %cst_53 {dimension_numbers = #tpu.dot_dimension_numbers<[1], [1], [0], [0], [0, 0, 1, 0], [], []>} : vector<16x2xbf16>, vector<16x2xbf16>, vector<16x16xf32> -> vector<16x16xf32>
    %cst_54 = arith.constant dense<0xFF800000> : vector<16xf32>
    %121 = vector.multi_reduction <maximumf>, %120, %cst_54 [1] : vector<16x16xf32> to vector<16xf32>
    %122 = vector.shape_cast %121 : vector<16xf32> to vector<16x1xf32>
    %123 = arith.maximumf %111, %122 : vector<16x1xf32>
    %124 = arith.subf %111, %123 : vector<16x1xf32>
    %125 = math.exp %124 : vector<16x1xf32>
    %126 = vector.broadcast %123 : vector<16x1xf32> to vector<16x16xf32>
    %127 = arith.subf %120, %126 : vector<16x16xf32>
    %128 = math.exp %127 : vector<16x16xf32>
    %129 = arith.mulf %125, %112 : vector<16x1xf32>
    %cst_55 = arith.constant dense<0.000000e+00> : vector<16xf32>
    %130 = vector.multi_reduction <add>, %128, %cst_55 [1] : vector<16x16xf32> to vector<16xf32>
    %131 = vector.shape_cast %130 : vector<16xf32> to vector<16x1xf32>
    %132 = arith.addf %129, %131 : vector<16x1xf32>
    %133 = vector.broadcast %125 : vector<16x1xf32> to vector<16x16xf32>
    %134 = arith.mulf %133, %113 : vector<16x16xf32>
    %135 = arith.truncf %128 : vector<16x16xf32> to vector<16x16xbf16>
    %cst_56 = arith.constant dense<0.000000e+00> : vector<16x16xf32>
    %136 = tpu.matmul %135, %119, %cst_56 {dimension_numbers = #tpu.dot_dimension_numbers<[1], [0], [0], [1], [0, 0, 1, 1], [], []>} : vector<16x16xbf16>, vector<16x16xbf16>, vector<16x16xf32> -> vector<16x16xf32>
    %137 = arith.addf %134, %136 : vector<16x16xf32>
    %c1_i32_57 = arith.constant 1 : i32
    %138 = tpu.reciprocal %132 {approx = true} : vector<16x1xf32> -> vector<16x1xf32>
    %139 = vector.broadcast %138 : vector<16x1xf32> to vector<16x16xf32>
    %140 = arith.mulf %137, %139 : vector<16x16xf32>
    %c0_58 = arith.constant 0 : index
    %c0_59 = arith.constant 0 : index
    %141 = vector.load %arg10[%c0_58, %c0_59] : memref<1x1xf32, #tpu.memory_space<vmem>>, vector<1x1xf32>
    %142 = math.tanh %141 : vector<1x1xf32>
    %143 = vector.broadcast %142 : vector<1x1xf32> to vector<16x16xf32>
    %144 = arith.mulf %143, %140 : vector<16x16xf32>
    %145 = arith.addf %144, %96 : vector<16x16xf32>
    %146 = vector.extract_strided_slice %145 {offsets = [0, 0], sizes = [8, 16], strides = [1, 1]} : vector<16x16xf32> to vector<8x16xf32>
    %147 = vector.extract_strided_slice %145 {offsets = [8, 0], sizes = [8, 16], strides = [1, 1]} : vector<16x16xf32> to vector<8x16xf32>
    %c0_60 = arith.constant 0 : index
    %c0_61 = arith.constant 0 : index
    %148 = vector.load %arg11[%c0_60, %c0_61] : memref<16x64xbf16, #tpu.memory_space<vmem>>, vector<16x64xbf16>
    %c0_62 = arith.constant 0 : index
    %c0_63 = arith.constant 0 : index
    %149 = vector.load %arg12[%c0_62, %c0_63] : memref<1x16xf32, #tpu.memory_space<vmem>>, vector<1x16xf32>
    %150 = arith.truncf %146 : vector<8x16xf32> to vector<8x16xbf16>
    %cst_64 = arith.constant dense<0.000000e+00> : vector<8x64xf32>
    %151 = tpu.matmul %150, %148, %cst_64 {dimension_numbers = #tpu.dot_dimension_numbers<[1], [0], [0], [1], [0, 0, 1, 1], [], []>} : vector<8x16xbf16>, vector<16x64xbf16>, vector<8x64xf32> -> vector<8x64xf32>
    %152 = arith.truncf %147 : vector<8x16xf32> to vector<8x16xbf16>
    %cst_65 = arith.constant dense<0.000000e+00> : vector<8x64xf32>
    %153 = tpu.matmul %152, %148, %cst_65 {dimension_numbers = #tpu.dot_dimension_numbers<[1], [0], [0], [1], [0, 0, 1, 1], [], []>} : vector<8x16xbf16>, vector<16x64xbf16>, vector<8x64xf32> -> vector<8x64xf32>
    %154 = vector.extract_strided_slice %151 {offsets = [0, 16], sizes = [8, 16], strides = [1, 1]} : vector<8x64xf32> to vector<8x16xf32>
    %155 = vector.extract_strided_slice %153 {offsets = [0, 32], sizes = [8, 16], strides = [1, 1]} : vector<8x64xf32> to vector<8x16xf32>
    %156 = arith.addf %154, %155 : vector<8x16xf32>
    %157 = vector.extract_strided_slice %153 {offsets = [0, 0], sizes = [8, 16], strides = [1, 1]} : vector<8x64xf32> to vector<8x16xf32>
    %c1_i32_66 = arith.constant 1 : i32
    %158 = tpu.dynamic_rotate %157 by %c1_i32_66 dim 0 : vector<8x16xf32>, i32 -> vector<8x16xf32>
    %159 = tpu.iota {dimensions = array<i32: 0>} : vector<8x16xi32>
    %c0_i32_67 = arith.constant 0 : i32
    %160 = vector.broadcast %c0_i32_67 : i32 to vector<8x16xi32>
    %161 = arith.cmpi eq, %159, %160 : vector<8x16xi32>
    %cst_68 = arith.constant 0.000000e+00 : f32
    %162 = vector.broadcast %cst_68 : f32 to vector<8x16xf32>
    %163 = arith.select %161, %162, %158 : vector<8x16xi1>, vector<8x16xf32>
    %164 = arith.addf %156, %163 : vector<8x16xf32>
    %165 = vector.extract_strided_slice %151 {offsets = [0, 48], sizes = [8, 16], strides = [1, 1]} : vector<8x64xf32> to vector<8x16xf32>
    %c7_i32_69 = arith.constant 7 : i32
    %166 = tpu.dynamic_rotate %165 by %c7_i32_69 dim 0 : vector<8x16xf32>, i32 -> vector<8x16xf32>
    %167 = tpu.iota {dimensions = array<i32: 0>} : vector<8x16xi32>
    %c7_i32_70 = arith.constant 7 : i32
    %168 = vector.broadcast %c7_i32_70 : i32 to vector<8x16xi32>
    %169 = arith.cmpi eq, %167, %168 : vector<8x16xi32>
    %cst_71 = arith.constant 0.000000e+00 : f32
    %170 = vector.broadcast %cst_71 : f32 to vector<8x16xf32>
    %171 = arith.select %169, %170, %166 : vector<8x16xi1>, vector<8x16xf32>
    %172 = arith.addf %164, %171 : vector<8x16xf32>
    %173 = vector.broadcast %149 : vector<1x16xf32> to vector<8x16xf32>
    %174 = arith.addf %172, %173 : vector<8x16xf32>
    %cst_72 = arith.constant 2.000000e-01 : f32
    %175 = vector.broadcast %cst_72 : f32 to vector<8x16xf32>
    %176 = arith.mulf %175, %174 : vector<8x16xf32>
    %177 = arith.maximumf %174, %176 : vector<8x16xf32>
    %c0_73 = arith.constant 0 : index
    %c0_74 = arith.constant 0 : index
    %c0_75 = arith.constant 0 : index
    %178 = vector.load %arg13[%c0_73, %c0_74, %c0_75] : memref<1x8x16xf32, #tpu.memory_space<vmem>>, vector<1x8x16xf32>
    %179 = vector.shape_cast %178 : vector<1x8x16xf32> to vector<8x16xf32>
    %180 = vector.shape_cast %177 : vector<8x16xf32> to vector<1x8x16xf32>
    tpu.vector_store %arg13[%c0_73, %c0_74, %c0_75], %180 {strides = array<i32>} : memref<1x8x16xf32, #tpu.memory_space<vmem>>, vector<1x8x16xf32>,
    return
  }
  func.func @transform_0(%arg0: i32) -> (i32, i32, i32, i32) {
    %c0_i32 = arith.constant 0 : i32
    %c0_i32_0 = arith.constant 0 : i32
    %c0_i32_1 = arith.constant 0 : i32
    %c0_i32_2 = arith.constant 0 : i32
    return %arg0, %c0_i32, %c0_i32_0, %c0_i32_1 : i32, i32, i32, i32
  }
  func.func @transform_1(%arg0: i32) -> (i32, i32) {
    %c0_i32 = arith.constant 0 : i32
    %c0_i32_0 = arith.constant 0 : i32
    %c0_i32_1 = arith.constant 0 : i32
    return %c0_i32, %c0_i32_0 : i32, i32
  }
  func.func @transform_2(%arg0: i32) -> (i32, i32) {
    %c0_i32 = arith.constant 0 : i32
    %c0_i32_0 = arith.constant 0 : i32
    %c0_i32_1 = arith.constant 0 : i32
    return %c0_i32, %c0_i32_0 : i32, i32
  }
  func.func @transform_3(%arg0: i32) -> (i32, i32) {
    %c0_i32 = arith.constant 0 : i32
    %c0_i32_0 = arith.constant 0 : i32
    %c0_i32_1 = arith.constant 0 : i32
    return %c0_i32, %c0_i32_0 : i32, i32
  }
  func.func @transform_4(%arg0: i32) -> (i32, i32) {
    %c0_i32 = arith.constant 0 : i32
    %c0_i32_0 = arith.constant 0 : i32
    %c0_i32_1 = arith.constant 0 : i32
    return %c0_i32, %c0_i32_0 : i32, i32
  }
  func.func @transform_5(%arg0: i32) -> (i32, i32) {
    %c0_i32 = arith.constant 0 : i32
    %c0_i32_0 = arith.constant 0 : i32
    %c0_i32_1 = arith.constant 0 : i32
    return %c0_i32, %c0_i32_0 : i32, i32
  }
  func.func @transform_6(%arg0: i32) -> (i32, i32) {
    %c0_i32 = arith.constant 0 : i32
    %c0_i32_0 = arith.constant 0 : i32
    %c0_i32_1 = arith.constant 0 : i32
    return %c0_i32, %c0_i32_0 : i32, i32
  }
  func.func @transform_7(%arg0: i32) -> (i32, i32) {
    %c0_i32 = arith.constant 0 : i32
    %c0_i32_0 = arith.constant 0 : i32
    %c0_i32_1 = arith.constant 0 : i32
    return %c0_i32, %c0_i32_0 : i32, i32
  }
  func.func @transform_8(%arg0: i32) -> (i32, i32) {
    %c0_i32 = arith.constant 0 : i32
    %c0_i32_0 = arith.constant 0 : i32
    %c0_i32_1 = arith.constant 0 : i32
    return %c0_i32, %c0_i32_0 : i32, i32
  }
  func.func @transform_9(%arg0: i32) -> (i32, i32) {
    %c0_i32 = arith.constant 0 : i32
    %c0_i32_0 = arith.constant 0 : i32
    %c0_i32_1 = arith.constant 0 : i32
    return %c0_i32, %c0_i32_0 : i32, i32
  }
  func.func @transform_10(%arg0: i32) -> (i32, i32) {
    %c0_i32 = arith.constant 0 : i32
    %c0_i32_0 = arith.constant 0 : i32
    %c0_i32_1 = arith.constant 0 : i32
    return %c0_i32, %c0_i32_0 : i32, i32
  }
  func.func @transform_11(%arg0: i32) -> (i32, i32) {
    %c0_i32 = arith.constant 0 : i32
    %c0_i32_0 = arith.constant 0 : i32
    %c0_i32_1 = arith.constant 0 : i32
    return %c0_i32, %c0_i32_0 : i32, i32
  }
  func.func @transform_12(%arg0: i32) -> (i32, i32, i32) {
    %c0_i32 = arith.constant 0 : i32
    %c0_i32_0 = arith.constant 0 : i32
    %c0_i32_1 = arith.constant 0 : i32
    return %arg0, %c0_i32, %c0_i32_0 : i32, i32, i32
  }
}

</mosaic_0001>

<llo_original>
// kernel: tpu_custom_call.1
$region0: #{tpu_custom_call.1}
  #allocation0 [shape = 'u32[]', space=smem, size = 0x4, offset = 0x4, fixed_abs, tag = 'smem constant byte address 0x4 - core index']
  #allocation1 [shape = 'u32[72,128]{1,0:T(1,128)}', space=vmem, size = 0x9000, scoped, tag = 'internal scratch']
  #allocation2 [shape = 'bf16[16,2]{1,0:T(8,128)(2,1)}', space=vmem, size = 0x1000, scoped, tag = 'scratch operand']
  #allocation3 [shape = 'bf16[16,16]{1,0:T(8,128)(2,1)}', space=vmem, size = 0x1000, scoped, tag = 'scratch operand']
  #allocation4 [shape = 'f32[1,1]{1,0:T(1,128)S(1)}', space=vmem, size = 0x200, scoped, tag = 'scoped memory for tpu_custom_call.1']
  %s0 = inlined_call_operand.hbm [shape: bf16[2,2,8,8], index: 0, kind: input, shape index: {}]
  %s1 = inlined_call_operand.hbm [shape: bf16[8,16], index: 1, kind: input, shape index: {}]
  %s2 = inlined_call_operand.hbm [shape: f32[1,16], index: 2, kind: input, shape index: {}]
  %s3 = inlined_call_operand.hbm [shape: bf16[16,48], index: 3, kind: input, shape index: {}]
  %s4 = inlined_call_operand.hbm [shape: f32[1,16], index: 4, kind: input, shape index: {}]
  %s5 = inlined_call_operand.hbm [shape: bf16[16,48], index: 5, kind: input, shape index: {}]
  %s6 = inlined_call_operand.hbm [shape: f32[1,16], index: 6, kind: input, shape index: {}]
  %s7 = inlined_call_operand.vmem [shape: bf16[16,20], index: 7, kind: input, shape index: {}]
  %s8 = inlined_call_operand.vmem [shape: f32[1,20], index: 8, kind: input, shape index: {}]
  %s9 = inlined_call_operand.<no memory space> [shape: f32[1,1], index: 9, kind: input, shape index: {}]
  %s10 = inlined_call_operand.hbm [shape: bf16[16,64], index: 10, kind: input, shape index: {}]
  %s11 = inlined_call_operand.vmem [shape: f32[1,16], index: 11, kind: input, shape index: {}]
  %s12 = inlined_call_operand.hbm [shape: f32[2,8,16], index: 12, kind: output, shape index: {}]
  %s13 = sld [smem:[#allocation0]]
  $region113: #{tpu_custom_call.1} parent=0
    _
  %s15 = ssub.s32 1, %s13
  %s16 = scalar_select 0, %s15, %s13
  %v17 = vstv %s9
  %18 = vst [vmem:[#allocation4] sm:$0x1] %v17
  $region1: #{tpu_custom_call.1} parent=0
    #allocation5 [shape = 'u8[8192]{0}', space=vmem, size = 0x2000, scoped, tag = 'input window, operand 0']
    #allocation6 [shape = 's32[2]{0}', space=sflag, size = 0x8, scoped, tag = 'scoped memory for tpu_custom_call.1']
    #allocation7 [shape = 's32[2]{0}', space=sflag, size = 0x8, scoped, tag = 'scoped memory for tpu_custom_call.1']
    #allocation8 [shape = 'u8[2048]{0}', space=vmem, size = 0x800, scoped, tag = 'input window, operand 1, single buffered']
    #allocation9 [shape = 's32[1]{0}', space=sflag, size = 0x4, scoped, tag = 'scoped memory for tpu_custom_call.1']
    #allocation10 [shape = 'u8[512]{0}', space=vmem, size = 0x400, scoped, tag = 'input window, operand 2, single buffered']
    #allocation11 [shape = 'u8[4096]{0}', space=vmem, size = 0x1000, scoped, tag = 'input window, operand 3, single buffered']
    #allocation12 [shape = 's32[1]{0}', space=sflag, size = 0x4, scoped, tag = 'scoped memory for tpu_custom_call.1']
    #allocation13 [shape = 'u8[512]{0}', space=vmem, size = 0x400, scoped, tag = 'input window, operand 4, single buffered']
    #allocation14 [shape = 'u8[4096]{0}', space=vmem, size = 0x1000, scoped, tag = 'input window, operand 5, single buffered']
    #allocation15 [shape = 's32[1]{0}', space=sflag, size = 0x4, scoped, tag = 'scoped memory for tpu_custom_call.1']
    #allocation16 [shape = 'u8[512]{0}', space=vmem, size = 0x400, scoped, tag = 'input window, operand 6, single buffered']
    #allocation17 [shape = 'u8[4096]{0}', space=vmem, size = 0x1000, scoped, tag = 'input window, operand 10, single buffered']
    #allocation18 [shape = 's32[1]{0}', space=sflag, size = 0x4, scoped, tag = 'scoped memory for tpu_custom_call.1']
    #allocation19 [shape = 'u8[8192]{0}', space=vmem, size = 0x2000, scoped, tag = 'output window, operand 0']
    %19 = vsyncpa [#allocation6], 0
    %s20 = scalar_lea.sflag [#allocation6], 1
    %21 = vsyncpa %s20, 0
    %22 = vsyncpa [#allocation9], 0
    %23 = vsyncpa [#allocation12], 0
    %24 = vsyncpa [#allocation15], 0
    %25 = vsyncpa [#allocation18], 0
    %26 = vsyncpa [#allocation7], 0
    %s27 = scalar_lea.sflag [#allocation7], 1
    %28 = vsyncpa %s27, 0
    loop: start=0, step=1, limit=4
    $region2: #{tpu_custom_call.1} parent=1 // loop_pre_header
      _
    $region3: #{tpu_custom_call.1} parent=1 // loop_header
      %s30 = sphi 0, %s34
      %p31 = scmp.ge.s32.totalorder %s30, 4
      %s40 = sphi 0, %s42
      %s43 = sphi 0, %s40
      %s44 = sphi 0, %s43
      %s60 = sphi 0, %s44
      %s64 = sphi 0, %s64
      %s66 = sphi 0, %s64
      %s67 = sphi 0, %s66
      %s81 = sphi 0, %s67
      %s85 = sphi 0, %s85
      %s87 = sphi 0, %s85
      %s88 = sphi 0, %s87
      %s102 = sphi 0, %s88
      %s106 = sphi 0, %s106
      %s108 = sphi 0, %s106
      %s109 = sphi 0, %s108
      %s123 = sphi 0, %s109
      %s127 = sphi 0, %s127
      %s129 = sphi 0, %s127
      %s130 = sphi 0, %s129
      %s144 = sphi 0, %s130
      %s148 = sphi 0, %s148
      %s150 = sphi 0, %s148
      %s151 = sphi 0, %s150
      %s165 = sphi 0, %s151
      %s169 = sphi 0, %s169
      %s171 = sphi 0, %s169
      %s172 = sphi 0, %s171
      %s186 = sphi 0, %s172
      %s190 = sphi 0, %s190
      %s192 = sphi 0, %s190
      %s193 = sphi 0, %s192
      %s207 = sphi 0, %s193
      %s211 = sphi 0, %s211
      %s213 = sphi 0, %s211
      %s214 = sphi 0, %s213
      %s228 = sphi 0, %s214
      %s232 = sphi 0, %s232
      %s234 = sphi 0, %s232
      %s235 = sphi 0, %s234
      %s249 = sphi 0, %s235
      %s253 = sphi 0, %s253
      %s255 = sphi 0, %s253
      %s256 = sphi 0, %s255
      %s270 = sphi 0, %s256
      %s274 = sphi 0, %s274
      %s276 = sphi 0, %s274
      %s277 = sphi 0, %s276
      %s291 = sphi 0, %s277
      %s297 = sphi 0, %s299
      %s300 = sphi 0, %s297
      %s301 = sphi 0, %s300
      %s317 = sphi 0, %s301
    $region4: #{tpu_custom_call.1} parent=1 // loop_header_branch
      %33 = sbr.rel (%p31) target = $region8
    $region5: #{tpu_custom_call.1} parent=1 // loop_body
      %s35 = ssub.s32 %s30, 1
      %s36 = ssub.s32 %s30, 2
      %s37 = sadd.s32 %s30, 1
      %s38 = ssub.s32 %s30, %s37
      %p39 = scmp.eq.s32.totalorder %s38, 0
      %s41 = sadd.s32 %s40, 1
      %s42 = scalar_select %p39, %s40, %s41
      %p45 = pneg %p39
      %p46 = scmp.eq.s32.totalorder %s30, 1
      %p47 = por %p45, %p46
      %p48 = scmp.ne.s32.totalorder %s40, %s43
      %p49 = scmp.eq.s32.totalorder %s30, 0
      %p50 = por %p48, %p49
      %p51 = scmp.ne.s32.totalorder %s40, %s43
      %p52 = scmp.eq.s32.totalorder %s35, 1
      %p53 = por %p51, %p52
      %p54 = scmp.ne.s32.totalorder %s43, %s44
      %p55 = scmp.eq.s32.totalorder %s35, 0
      %p56 = por %p54, %p55
      %p57 = scmp.ne.s32.totalorder %s43, %s44
      %p58 = scmp.eq.s32.totalorder %s36, 1
      %p59 = por %p57, %p58
      %p61 = scmp.ne.s32.totalorder %s44, %s60
      %p62 = scmp.eq.s32.totalorder %s36, 0
      %p63 = por %p61, %p62
      %s65 = sadd.s32 %s64, 1
      %p68 = scmp.eq.s32.totalorder %s30, 1
      %p69 = scmp.ne.s32.totalorder %s64, %s66
      %p70 = scmp.eq.s32.totalorder %s30, 0
      %p71 = por %p69, %p70
      %p72 = scmp.ne.s32.totalorder %s64, %s66
      %p73 = scmp.eq.s32.totalorder %s35, 1
      %p74 = por %p72, %p73
      %p75 = scmp.ne.s32.totalorder %s66, %s67
      %p76 = scmp.eq.s32.totalorder %s35, 0
      %p77 = por %p75, %p76
      %p78 = scmp.ne.s32.totalorder %s66, %s67
      %p79 = scmp.eq.s32.totalorder %s36, 1
      %p80 = por %p78, %p79
      %p82 = scmp.ne.s32.totalorder %s67, %s81
      %p83 = scmp.eq.s32.totalorder %s36, 0
      %p84 = por %p82, %p83
      %s86 = sadd.s32 %s85, 1
      %p89 = scmp.eq.s32.totalorder %s30, 1
      %p90 = scmp.ne.s32.totalorder %s85, %s87
      %p91 = scmp.eq.s32.totalorder %s30, 0
      %p92 = por %p90, %p91
      %p93 = scmp.ne.s32.totalorder %s85, %s87
      %p94 = scmp.eq.s32.totalorder %s35, 1
      %p95 = por %p93, %p94
      %p96 = scmp.ne.s32.totalorder %s87, %s88
      %p97 = scmp.eq.s32.totalorder %s35, 0
      %p98 = por %p96, %p97
      %p99 = scmp.ne.s32.totalorder %s87, %s88
      %p100 = scmp.eq.s32.totalorder %s36, 1
      %p101 = por %p99, %p100
      %p103 = scmp.ne.s32.totalorder %s88, %s102
      %p104 = scmp.eq.s32.totalorder %s36, 0
      %p105 = por %p103, %p104
      %s107 = sadd.s32 %s106, 1
      %p110 = scmp.eq.s32.totalorder %s30, 1
      %p111 = scmp.ne.s32.totalorder %s106, %s108
      %p112 = scmp.eq.s32.totalorder %s30, 0
      %p113 = por %p111, %p112
      %p114 = scmp.ne.s32.totalorder %s106, %s108
      %p115 = scmp.eq.s32.totalorder %s35, 1
      %p116 = por %p114, %p115
      %p117 = scmp.ne.s32.totalorder %s108, %s109
      %p118 = scmp.eq.s32.totalorder %s35, 0
      %p119 = por %p117, %p118
      %p120 = scmp.ne.s32.totalorder %s108, %s109
      %p121 = scmp.eq.s32.totalorder %s36, 1
      %p122 = por %p120, %p121
      %p124 = scmp.ne.s32.totalorder %s109, %s123
      %p125 = scmp.eq.s32.totalorder %s36, 0
      %p126 = por %p124, %p125
      %s128 = sadd.s32 %s127, 1
      %p131 = scmp.eq.s32.totalorder %s30, 1
      %p132 = scmp.ne.s32.totalorder %s127, %s129
      %p133 = scmp.eq.s32.totalorder %s30, 0
      %p134 = por %p132, %p133
      %p135 = scmp.ne.s32.totalorder %s127, %s129
      %p136 = scmp.eq.s32.totalorder %s35, 1
      %p137 = por %p135, %p136
      %p138 = scmp.ne.s32.totalorder %s129, %s130
      %p139 = scmp.eq.s32.totalorder %s35, 0
      %p140 = por %p138, %p139
      %p141 = scmp.ne.s32.totalorder %s129, %s130
      %p142 = scmp.eq.s32.totalorder %s36, 1
      %p143 = por %p141, %p142
      %p145 = scmp.ne.s32.totalorder %s130, %s144
      %p146 = scmp.eq.s32.totalorder %s36, 0
      %p147 = por %p145, %p146
      %s149 = sadd.s32 %s148, 1
      %p152 = scmp.eq.s32.totalorder %s30, 1
      %p153 = scmp.ne.s32.totalorder %s148, %s150
      %p154 = scmp.eq.s32.totalorder %s30, 0
      %p155 = por %p153, %p154
      %p156 = scmp.ne.s32.totalorder %s148, %s150
      %p157 = scmp.eq.s32.totalorder %s35, 1
      %p158 = por %p156, %p157
      %p159 = scmp.ne.s32.totalorder %s150, %s151
      %p160 = scmp.eq.s32.totalorder %s35, 0
      %p161 = por %p159, %p160
      %p162 = scmp.ne.s32.totalorder %s150, %s151
      %p163 = scmp.eq.s32.totalorder %s36, 1
      %p164 = por %p162, %p163
      %p166 = scmp.ne.s32.totalorder %s151, %s165
      %p167 = scmp.eq.s32.totalorder %s36, 0
      %p168 = por %p166, %p167
      %s170 = sadd.s32 %s169, 1
      %p173 = scmp.eq.s32.totalorder %s30, 1
      %p174 = scmp.ne.s32.totalorder %s169, %s171
      %p175 = scmp.eq.s32.totalorder %s30, 0
      %p176 = por %p174, %p175
      %p177 = scmp.ne.s32.totalorder %s169, %s171
      %p178 = scmp.eq.s32.totalorder %s35, 1
      %p179 = por %p177, %p178
      %p180 = scmp.ne.s32.totalorder %s171, %s172
      %p181 = scmp.eq.s32.totalorder %s35, 0
      %p182 = por %p180, %p181
      %p183 = scmp.ne.s32.totalorder %s171, %s172
      %p184 = scmp.eq.s32.totalorder %s36, 1
      %p185 = por %p183, %p184
      %p187 = scmp.ne.s32.totalorder %s172, %s186
      %p188 = scmp.eq.s32.totalorder %s36, 0
      %p189 = por %p187, %p188
      %s191 = sadd.s32 %s190, 1
      %p194 = scmp.eq.s32.totalorder %s30, 1
      %p195 = scmp.ne.s32.totalorder %s190, %s192
      %p196 = scmp.eq.s32.totalorder %s30, 0
      %p197 = por %p195, %p196
      %p198 = scmp.ne.s32.totalorder %s190, %s192
      %p199 = scmp.eq.s32.totalorder %s35, 1
      %p200 = por %p198, %p199
      %p201 = scmp.ne.s32.totalorder %s192, %s193
      %p202 = scmp.eq.s32.totalorder %s35, 0
      %p203 = por %p201, %p202
      %p204 = scmp.ne.s32.totalorder %s192, %s193
      %p205 = scmp.eq.s32.totalorder %s36, 1
      %p206 = por %p204, %p205
      %p208 = scmp.ne.s32.totalorder %s193, %s207
      %p209 = scmp.eq.s32.totalorder %s36, 0
      %p210 = por %p208, %p209
      %s212 = sadd.s32 %s211, 1
      %p215 = scmp.eq.s32.totalorder %s30, 1
      %p216 = scmp.ne.s32.totalorder %s211, %s213
      %p217 = scmp.eq.s32.totalorder %s30, 0
      %p218 = por %p216, %p217
      %p219 = scmp.ne.s32.totalorder %s211, %s213
      %p220 = scmp.eq.s32.totalorder %s35, 1
      %p221 = por %p219, %p220
      %p222 = scmp.ne.s32.totalorder %s213, %s214
      %p223 = scmp.eq.s32.totalorder %s35, 0
      %p224 = por %p222, %p223
      %p225 = scmp.ne.s32.totalorder %s213, %s214
      %p226 = scmp.eq.s32.totalorder %s36, 1
      %p227 = por %p225, %p226
      %p229 = scmp.ne.s32.totalorder %s214, %s228
      %p230 = scmp.eq.s32.totalorder %s36, 0
      %p231 = por %p229, %p230
      %s233 = sadd.s32 %s232, 1
      %p236 = scmp.eq.s32.totalorder %s30, 1
      %p237 = scmp.ne.s32.totalorder %s232, %s234
      %p238 = scmp.eq.s32.totalorder %s30, 0
      %p239 = por %p237, %p238
      %p240 = scmp.ne.s32.totalorder %s232, %s234
      %p241 = scmp.eq.s32.totalorder %s35, 1
      %p242 = por %p240, %p241
      %p243 = scmp.ne.s32.totalorder %s234, %s235
      %p244 = scmp.eq.s32.totalorder %s35, 0
      %p245 = por %p243, %p244
      %p246 = scmp.ne.s32.totalorder %s234, %s235
      %p247 = scmp.eq.s32.totalorder %s36, 1
      %p248 = por %p246, %p247
      %p250 = scmp.ne.s32.totalorder %s235, %s249
      %p251 = scmp.eq.s32.totalorder %s36, 0
      %p252 = por %p250, %p251
      %s254 = sadd.s32 %s253, 1
      %p257 = scmp.eq.s32.totalorder %s30, 1
      %p258 = scmp.ne.s32.totalorder %s253, %s255
      %p259 = scmp.eq.s32.totalorder %s30, 0
      %p260 = por %p258, %p259
      %p261 = scmp.ne.s32.totalorder %s253, %s255
      %p262 = scmp.eq.s32.totalorder %s35, 1
      %p263 = por %p261, %p262
      %p264 = scmp.ne.s32.totalorder %s255, %s256
      %p265 = scmp.eq.s32.totalorder %s35, 0
      %p266 = por %p264, %p265
      %p267 = scmp.ne.s32.totalorder %s255, %s256
      %p268 = scmp.eq.s32.totalorder %s36, 1
      %p269 = por %p267, %p268
      %p271 = scmp.ne.s32.totalorder %s256, %s270
      %p272 = scmp.eq.s32.totalorder %s36, 0
      %p273 = por %p271, %p272
      %s275 = sadd.s32 %s274, 1
      %p278 = scmp.eq.s32.totalorder %s30, 1
      %p279 = scmp.ne.s32.totalorder %s274, %s276
      %p280 = scmp.eq.s32.totalorder %s30, 0
      %p281 = por %p279, %p280
      %p282 = scmp.ne.s32.totalorder %s274, %s276
      %p283 = scmp.eq.s32.totalorder %s35, 1
      %p284 = por %p282, %p283
      %p285 = scmp.ne.s32.totalorder %s276, %s277
      %p286 = scmp.eq.s32.totalorder %s35, 0
      %p287 = por %p285, %p286
      %p288 = scmp.ne.s32.totalorder %s276, %s277
      %p289 = scmp.eq.s32.totalorder %s36, 1
      %p290 = por %p288, %p289
      %p292 = scmp.ne.s32.totalorder %s277, %s291
      %p293 = scmp.eq.s32.totalorder %s36, 0
      %p294 = por %p292, %p293
      %s295 = ssub.s32 %s30, %s37
      %p296 = scmp.eq.s32.totalorder %s295, 0
      %s298 = sadd.s32 %s297, 1
      %s299 = scalar_select %p296, %s297, %s298
      %p302 = pneg %p296
      %p303 = scmp.eq.s32.totalorder %s30, 1
      %p304 = por %p302, %p303
      %p305 = scmp.ne.s32.totalorder %s297, %s300
      %p306 = scmp.eq.s32.totalorder %s30, 0
      %p307 = por %p305, %p306
      %p308 = scmp.ne.s32.totalorder %s297, %s300
      %p309 = scmp.eq.s32.totalorder %s35, 1
      %p310 = por %p308, %p309
      %p311 = scmp.ne.s32.totalorder %s300, %s301
      %p312 = scmp.eq.s32.totalorder %s35, 0
      %p313 = por %p311, %p312
      %p314 = scmp.ne.s32.totalorder %s300, %s301
      %p315 = scmp.eq.s32.totalorder %s36, 1
      %p316 = por %p314, %p315
      %p318 = scmp.ne.s32.totalorder %s301, %s317
      %p319 = scmp.eq.s32.totalorder %s36, 0
      %p320 = por %p318, %p319
      %p321 = scmp.le.s32.totalorder 1, %s30
      %p322 = scmp.lt.s32.totalorder %s30, 3
      %p323 = pnand %p321, %p322
      %p324 = pneg %p323
      // Predicated region
      $region9: #{tpu_custom_call.1} parent=5 // pred_check
        _
      $region10: #{tpu_custom_call.1} parent=5 // pred_check_branch
        %326 = sbr.rel (%p323) target = $region12
      $region11: #{tpu_custom_call.1} parent=5 // pred_region
        %s327 = ssub.s32 %s30, 1
        // Predicated region
        $region13: #{tpu_custom_call.1} parent=11 // pred_check
          %p328 = pneg %p77
        $region14: #{tpu_custom_call.1} parent=11 // pred_check_branch
          %330 = sbr.rel (%p328) target = $region16
        $region15: #{tpu_custom_call.1} parent=11 // pred_region
          %332 = vsyncadd [#allocation9], 0
          %s334 = sshll.u32 %s1, 4
          %s335 = int_to_ptr.hbm [resolvable:$true] %s334
          %s336 = sshll.u32 [#allocation8], 4
          %s337 = int_to_ptr.vmem [resolvable:$true] %s336
          %339 = dma.hbm_to_vmem [thread:$0]  %s335, 64, %s337, [#allocation9]
        $region16: #{tpu_custom_call.1} parent=11 // pred_fallthru
          _
        // Predicated region
        $region17: #{tpu_custom_call.1} parent=11 // pred_check
          %p340 = pneg %p98
        $region18: #{tpu_custom_call.1} parent=11 // pred_check_branch
          %342 = sbr.rel (%p340) target = $region20
        $region19: #{tpu_custom_call.1} parent=11 // pred_region
          %344 = vsyncadd [#allocation9], 0
          %s346 = sshll.u32 %s2, 4
          %s347 = int_to_ptr.hbm [resolvable:$true] %s346
          %s348 = sshll.u32 [#allocation10], 4
          %s349 = int_to_ptr.vmem [resolvable:$true] %s348
          %351 = dma.hbm_to_vmem [thread:$0]  %s347, 16, %s349, [#allocation9]
        $region20: #{tpu_custom_call.1} parent=11 // pred_fallthru
          _
        // Predicated region
        $region21: #{tpu_custom_call.1} parent=11 // pred_check
          %p352 = pneg %p119
        $region22: #{tpu_custom_call.1} parent=11 // pred_check_branch
          %354 = sbr.rel (%p352) target = $region24
        $region23: #{tpu_custom_call.1} parent=11 // pred_region
          %356 = vsyncadd [#allocation12], 0
          %s357 = sshll.u32 %s3, 4
          %s358 = int_to_ptr.hbm [resolvable:$true] %s357
          %s359 = sshll.u32 [#allocation11], 4
          %s360 = int_to_ptr.vmem [resolvable:$true] %s359
          %365 = dma.hbm_to_vmem [thread:$0]  %s358, 128, %s360, [#allocation12], 64, 64, 4
        $region24: #{tpu_custom_call.1} parent=11 // pred_fallthru
          _
        // Predicated region
        $region25: #{tpu_custom_call.1} parent=11 // pred_check
          %p366 = pneg %p140
        $region26: #{tpu_custom_call.1} parent=11 // pred_check_branch
          %368 = sbr.rel (%p366) target = $region28
        $region27: #{tpu_custom_call.1} parent=11 // pred_region
          %370 = vsyncadd [#allocation12], 0
          %s372 = sshll.u32 %s4, 4
          %s373 = int_to_ptr.hbm [resolvable:$true] %s372
          %s374 = sshll.u32 [#allocation13], 4
          %s375 = int_to_ptr.vmem [resolvable:$true] %s374
          %377 = dma.hbm_to_vmem [thread:$0]  %s373, 16, %s375, [#allocation12]
        $region28: #{tpu_custom_call.1} parent=11 // pred_fallthru
          _
        // Predicated region
        $region29: #{tpu_custom_call.1} parent=11 // pred_check
          %p378 = pneg %p161
        $region30: #{tpu_custom_call.1} parent=11 // pred_check_branch
          %380 = sbr.rel (%p378) target = $region32
        $region31: #{tpu_custom_call.1} parent=11 // pred_region
          %382 = vsyncadd [#allocation15], 0
          %s383 = sshll.u32 %s5, 4
          %s384 = int_to_ptr.hbm [resolvable:$true] %s383
          %s385 = sshll.u32 [#allocation14], 4
          %s386 = int_to_ptr.vmem [resolvable:$true] %s385
          %391 = dma.hbm_to_vmem [thread:$0]  %s384, 128, %s386, [#allocation15], 64, 64, 4
        $region32: #{tpu_custom_call.1} parent=11 // pred_fallthru
          _
        // Predicated region
        $region33: #{tpu_custom_call.1} parent=11 // pred_check
          %p392 = pneg %p182
        $region34: #{tpu_custom_call.1} parent=11 // pred_check_branch
          %394 = sbr.rel (%p392) target = $region36
        $region35: #{tpu_custom_call.1} parent=11 // pred_region
          %396 = vsyncadd [#allocation15], 0
          %s398 = sshll.u32 %s6, 4
          %s399 = int_to_ptr.hbm [resolvable:$true] %s398
          %s400 = sshll.u32 [#allocation16], 4
          %s401 = int_to_ptr.vmem [resolvable:$true] %s400
          %403 = dma.hbm_to_vmem [thread:$0]  %s399, 16, %s401, [#allocation15]
        $region36: #{tpu_custom_call.1} parent=11 // pred_fallthru
          _
        // Predicated region
        $region37: #{tpu_custom_call.1} parent=11 // pred_check
          %p404 = pneg %p203
        $region38: #{tpu_custom_call.1} parent=11 // pred_check_branch
          %406 = sbr.rel (%p404) target = $region40
        $region39: #{tpu_custom_call.1} parent=11 // pred_region
          _
        $region40: #{tpu_custom_call.1} parent=11 // pred_fallthru
          _
        // Predicated region
        $region41: #{tpu_custom_call.1} parent=11 // pred_check
          %p407 = pneg %p224
        $region42: #{tpu_custom_call.1} parent=11 // pred_check_branch
          %409 = sbr.rel (%p407) target = $region44
        $region43: #{tpu_custom_call.1} parent=11 // pred_region
          _
        $region44: #{tpu_custom_call.1} parent=11 // pred_fallthru
          _
        // Predicated region
        $region45: #{tpu_custom_call.1} parent=11 // pred_check
          %p410 = pneg %p245
        $region46: #{tpu_custom_call.1} parent=11 // pred_check_branch
          %412 = sbr.rel (%p410) target = $region48
        $region47: #{tpu_custom_call.1} parent=11 // pred_region
          _
        $region48: #{tpu_custom_call.1} parent=11 // pred_fallthru
          _
        // Predicated region
        $region49: #{tpu_custom_call.1} parent=11 // pred_check
          %p413 = pneg %p266
        $region50: #{tpu_custom_call.1} parent=11 // pred_check_branch
          %415 = sbr.rel (%p413) target = $region52
        $region51: #{tpu_custom_call.1} parent=11 // pred_region
          %417 = vsyncadd [#allocation18], 0
          %s418 = sshll.u32 %s10, 4
          %s419 = int_to_ptr.hbm [resolvable:$true] %s418
          %s420 = sshll.u32 [#allocation17], 4
          %s421 = int_to_ptr.vmem [resolvable:$true] %s420
          %426 = dma.hbm_to_vmem [thread:$0]  %s419, 128, %s421, [#allocation18], 64, 64, 4
        $region52: #{tpu_custom_call.1} parent=11 // pred_fallthru
          _
        // Predicated region
        $region53: #{tpu_custom_call.1} parent=11 // pred_check
          %p427 = pneg %p287
        $region54: #{tpu_custom_call.1} parent=11 // pred_check_branch
          %429 = sbr.rel (%p427) target = $region56
        $region55: #{tpu_custom_call.1} parent=11 // pred_region
          _
        $region56: #{tpu_custom_call.1} parent=11 // pred_fallthru
          _
      $region12: #{tpu_custom_call.1} parent=5 // pred_fallthru
        _
      %p430 = scmp.lt.s32.totalorder %s30, 2
      // Predicated region
      $region57: #{tpu_custom_call.1} parent=5 // pred_check
        %p431 = pneg %p430
      $region58: #{tpu_custom_call.1} parent=5 // pred_check_branch
        %433 = sbr.rel (%p431) target = $region60
      $region59: #{tpu_custom_call.1} parent=5 // pred_region
        // Predicated region
        $region61: #{tpu_custom_call.1} parent=59 // pred_check
          %p434 = pneg %p50
        $region62: #{tpu_custom_call.1} parent=59 // pred_check_branch
          %436 = sbr.rel (%p434) target = $region64
        $region63: #{tpu_custom_call.1} parent=59 // pred_region
          %s437 = sand.u32 %s40, 1
          %s438 = scalar_lea.sflag [#allocation6], %s437
          %s439 = sand.u32 %s40, 1
          %s440 = smul.addr %s439, 8
          %s441 = scalar_lea.vmem [#allocation5], %s440
          %443 = vsyncadd %s438, 0
          %s444 = smul.addr %s30, 2
          %s445 = smul.addr %s444, 4
          %s446 = scalar_lea.hbm %s0, %s445
          %s447 = sshll.u32 %s446, 4
          %s448 = int_to_ptr.hbm [resolvable:$true] %s447
          %s449 = sshll.u32 %s441, 4
          %s450 = int_to_ptr.vmem [resolvable:$true] %s449
          %455 = dma.hbm_to_vmem [thread:$0]  %s448, 128, %s450, %s438, 64, 64, 4
        $region64: #{tpu_custom_call.1} parent=59 // pred_fallthru
          _
      $region60: #{tpu_custom_call.1} parent=5 // pred_fallthru
        _
      %p456 = scmp.le.s32.totalorder 1, %s30
      %p457 = scmp.lt.s32.totalorder %s30, 3
      %p458 = pnand %p456, %p457
      %p459 = pneg %p458
      // Predicated region
      $region65: #{tpu_custom_call.1} parent=5 // pred_check
        _
      $region66: #{tpu_custom_call.1} parent=5 // pred_check_branch
        %461 = sbr.rel (%p458) target = $region68
      $region67: #{tpu_custom_call.1} parent=5 // pred_region
        %s462 = ssub.s32 %s30, 1
        %s463 = sand.u32 %s43, 1
        %s464 = scalar_lea.sflag [#allocation6], %s463
        %s465 = sand.u32 %s43, 1
        %s466 = smul.addr %s465, 8
        %s467 = scalar_lea.vmem [#allocation5], %s466
        // Predicated region
        $region69: #{tpu_custom_call.1} parent=67 // pred_check
          %p468 = pneg %p56
        $region70: #{tpu_custom_call.1} parent=67 // pred_check_branch
          %470 = sbr.rel (%p468) target = $region72
        $region71: #{tpu_custom_call.1} parent=67 // pred_region
          %472 = dma.done %s464, 128
        $region72: #{tpu_custom_call.1} parent=67 // pred_fallthru
          _
        // Predicated region
        $region73: #{tpu_custom_call.1} parent=67 // pred_check
          %p473 = pneg %p77
        $region74: #{tpu_custom_call.1} parent=67 // pred_check_branch
          %475 = sbr.rel (%p473) target = $region76
        $region75: #{tpu_custom_call.1} parent=67 // pred_region
          %477 = dma.done [#allocation9], 64
        $region76: #{tpu_custom_call.1} parent=67 // pred_fallthru
          _
        // Predicated region
        $region77: #{tpu_custom_call.1} parent=67 // pred_check
          %p478 = pneg %p98
        $region78: #{tpu_custom_call.1} parent=67 // pred_check_branch
          %480 = sbr.rel (%p478) target = $region80
        $region79: #{tpu_custom_call.1} parent=67 // pred_region
          %482 = dma.done [#allocation9], 16
        $region80: #{tpu_custom_call.1} parent=67 // pred_fallthru
          _
        // Predicated region
        $region81: #{tpu_custom_call.1} parent=67 // pred_check
          %p483 = pneg %p119
        $region82: #{tpu_custom_call.1} parent=67 // pred_check_branch
          %485 = sbr.rel (%p483) target = $region84
        $region83: #{tpu_custom_call.1} parent=67 // pred_region
          %487 = dma.done [#allocation12], 128
        $region84: #{tpu_custom_call.1} parent=67 // pred_fallthru
          _
        // Predicated region
        $region85: #{tpu_custom_call.1} parent=67 // pred_check
          %p488 = pneg %p140
        $region86: #{tpu_custom_call.1} parent=67 // pred_check_branch
          %490 = sbr.rel (%p488) target = $region88
        $region87: #{tpu_custom_call.1} parent=67 // pred_region
          %492 = dma.done [#allocation12], 16
        $region88: #{tpu_custom_call.1} parent=67 // pred_fallthru
          _
        // Predicated region
        $region89: #{tpu_custom_call.1} parent=67 // pred_check
          %p493 = pneg %p161
        $region90: #{tpu_custom_call.1} parent=67 // pred_check_branch
          %495 = sbr.rel (%p493) target = $region92
        $region91: #{tpu_custom_call.1} parent=67 // pred_region
          %497 = dma.done [#allocation15], 128
        $region92: #{tpu_custom_call.1} parent=67 // pred_fallthru
          _
        // Predicated region
        $region93: #{tpu_custom_call.1} parent=67 // pred_check
          %p498 = pneg %p182
        $region94: #{tpu_custom_call.1} parent=67 // pred_check_branch
          %500 = sbr.rel (%p498) target = $region96
        $region95: #{tpu_custom_call.1} parent=67 // pred_region
          %502 = dma.done [#allocation15], 16
        $region96: #{tpu_custom_call.1} parent=67 // pred_fallthru
          _
        // Predicated region
        $region97: #{tpu_custom_call.1} parent=67 // pred_check
          %p503 = pneg %p266
        $region98: #{tpu_custom_call.1} parent=67 // pred_check_branch
          %505 = sbr.rel (%p503) target = $region100
        $region99: #{tpu_custom_call.1} parent=67 // pred_region
          %507 = dma.done [#allocation18], 128
        $region100: #{tpu_custom_call.1} parent=67 // pred_fallthru
          _
        %s508 = sand.u32 %s43, 1
        %s509 = scalar_lea.sflag [#allocation6], %s508
        %s510 = sand.u32 %s43, 1
        %s511 = smul.addr %s510, 8
        %s512 = scalar_lea.vmem [#allocation5], %s511
        %p513 = pneg %p56
        %p514 = pneg %p53
        %p515 = pneg %p77
        %p516 = pneg %p74
        %p517 = pneg %p98
        %p518 = pneg %p95
        %p519 = pneg %p119
        %p520 = pneg %p116
        %p521 = pneg %p140
        %p522 = pneg %p137
        %p523 = pneg %p161
        %p524 = pneg %p158
        %p525 = pneg %p182
        %p526 = pneg %p179
        %p527 = pneg %p203
        %p528 = pneg %p200
        %p529 = pneg %p224
        %p530 = pneg %p221
        %p531 = pneg %p245
        %p532 = pneg %p242
        %p533 = pneg %p266
        %p534 = pneg %p263
        %p535 = pneg %p287
        %p536 = pneg %p284
        %p537 = pneg %p313
        %p538 = pneg %p310
        %s539 = sand.u32 %s300, 1
        %s540 = scalar_lea.sflag [#allocation7], %s539
        %s541 = sand.u32 %s300, 1
        %s542 = smul.addr %s541, 8
        %s543 = scalar_lea.vmem [#allocation19], %s542
        %v545 = vld [vmem:[#allocation8] sm:$0xf]
        %v546 = vld [vmem:[#allocation10] sm:$0x1]
        %v547 = vld [vmem:[%s467] sm:$0xf]
        %v548 = vunpack.c.l.bf16 %v547
        %v549 = vmul.f32 %v548, 0.20019531
        %v550 = vpack.c.bf16 %v549, %v549
        %v551 = vunpack.c.l.bf16 %v550
        %v552 = vmax.f32 %v548, %v551
        %v553 = vpack.c.bf16 %v552, %v552
        %v555 = vperm.slane %v546, 0
        %vm557 = vcmask 64512
        %v559 = vsel %vm557, %v553, 0
        %vm561 = vcmask 1043456
        %v563 = vsel %vm561, %v545, 0
        %565 = vmatpush.bf16.msra.mxu0 0
        %566 = vmatpush.bf16.msra.mxu0 0
        %567 = vmatpush.bf16.msra.mxu0 0
        %568 = vmatpush.bf16.msra.mxu0 0
        %569 = vmatpush.bf16.msra.mxu0 0
        %570 = vmatpush.bf16.msra.mxu0 0
        %571 = vmatpush.bf16.msra.mxu0 0
        %572 = vmatpush.bf16.msra.mxu0 %v563
        %573 = vmatmul.bf16.gmra.mxu0 %v559
        %v574 = vpop.f32.mrf.mxu0
        %v575 = vadd.f32 %v555, %v574
        %v576 = vpop.f32.mrf.mxu0
        %577 = vdwg.mxu0
        %s578 = scalar_lea.vmem %s467, 4 [#allocation5]
        %v579 = vld [vmem:[%s578] sm:$0xf]
        %v580 = vunpack.c.l.bf16 %v579
        %v581 = vmul.f32 %v580, 0.20019531
        %v582 = vpack.c.bf16 %v581, %v581
        %v583 = vunpack.c.l.bf16 %v582
        %v584 = vmax.f32 %v580, %v583
        %v585 = vpack.c.bf16 %v584, %v584
        %v587 = vsel %vm557, %v585, 0
        %589 = vmatpush.bf16.msra.mxu0 0
        %590 = vmatpush.bf16.msra.mxu0 0
        %591 = vmatpush.bf16.msra.mxu0 0
        %592 = vmatpush.bf16.msra.mxu0 0
        %593 = vmatpush.bf16.msra.mxu0 0
        %594 = vmatpush.bf16.msra.mxu0 0
        %595 = vmatpush.bf16.msra.mxu0 0
        %596 = vmatpush.bf16.msra.mxu0 %v563
        %597 = vmatmul.bf16.gmra.mxu0 %v587
        %v598 = vpop.f32.mrf.mxu0
        %v599 = vadd.f32 %v555, %v598
        %v600 = vpop.f32.mrf.mxu0
        %601 = vdwg.mxu0
        %v602 = vmul.f32 %v575, 0.2
        %v603 = vmax.f32 %v575, %v602
        %v604 = vpack.c.bf16 %v603, %v603
        %v605 = vmul.f32 %v599, 0.2
        %v606 = vmax.f32 %v599, %v605
        %v607 = vpack.c.bf16 %v606, %v606
        %v608 = vld [vmem:[#allocation11] sm:$0xf]
        %v609 = vld [vmem:[#allocation11 + $0x4] sm:$0xf]
        %v610 = vld [vmem:[#allocation13] sm:$0x1]
        %v613 = vunpack.c.l.b16 %v608
        %v614 = vunpack.c.l.b16 %v609
        %v615 = vpack.c.b16 %v614, %v613
        %vm617 = vcmask 130048
        %v619 = vsel %vm617, %v604, 0
        %621 = vmatpush.bf16.msra.mxu0 0
        %622 = vmatpush.bf16.msra.mxu0 0
        %623 = vmatpush.bf16.msra.mxu0 0
        %624 = vmatpush.bf16.msra.mxu0 0
        %625 = vmatpush.bf16.msra.mxu0 0
        %626 = vmatpush.bf16.msra.mxu0 0
        %627 = vmatpush.bf16.msra.mxu0 0
        %628 = vmatpush.bf16.msra.mxu0 %v615
        %629 = vmatmul.bf16.gmra.mxu0 %v619
        %v630 = vpop.f32.mrf.mxu0
        %v631 = vadd.f32 0.0, %v630
        %v632 = vpop.f32.mrf.mxu0
        %633 = vdwg.mxu0
        %v635 = vsel %vm617, %v607, 0
        %637 = vmatpush.bf16.msra.mxu0 0
        %638 = vmatpush.bf16.msra.mxu0 0
        %639 = vmatpush.bf16.msra.mxu0 0
        %640 = vmatpush.bf16.msra.mxu0 0
        %641 = vmatpush.bf16.msra.mxu0 0
        %642 = vmatpush.bf16.msra.mxu0 0
        %643 = vmatpush.bf16.msra.mxu0 0
        %644 = vmatpush.bf16.msra.mxu0 %v615
        %645 = vmatmul.bf16.gmra.mxu0 %v635
        %v646 = vpop.f32.mrf.mxu0
        %v647 = vadd.f32 0.0, %v646
        %v648 = vpop.f32.mrf.mxu0
        %649 = vdwg.mxu0
        %651 = vrot.lane.b32.xlu0 %v647, 112
        %v652 = vpop.permute.xlu0 %651
        %v654 = vadd.f32 %v631, %v652
        %v655 = vrot.slane %v647, 7
        %v656 = vlaneseq
        %v657 = vshrl.u32 %v656, 7
        %vm658 = vcmp.eq.s32.totalorder %v657, 0
        %v659 = vsel %vm658, 0.0, %v655
        %661 = vrot.lane.b32.xlu0 %v659, 16
        %v662 = vpop.permute.xlu0 %661
        %v664 = vadd.f32 %v654, %v662
        %666 = vrot.lane.b32.xlu0 %v631, 96
        %v667 = vpop.permute.xlu0 %666
        %v669 = vrot.slane %v667, 1
        %vm670 = vcmp.eq.s32.totalorder %v657, 7
        %v671 = vsel %vm670, 0.0, %v669
        %v672 = vadd.f32 %v654, %v671
        %v674 = vperm.slane %v610, 0
        %676 = vrot.lane.b32.xlu0 %v674, 16
        %v677 = vpop.permute.xlu0 %676
        %v679 = vadd.f32 %v664, %v677
        %v680 = vadd.f32 %v672, %v674
        %v681 = vmul.f32 %v679, 0.2
        %v682 = vmax.f32 %v679, %v681
        %v683 = vpack.c.bf16 %v682, %v682
        %v684 = vmul.f32 %v680, 0.2
        %v685 = vmax.f32 %v680, %v684
        %v686 = vpack.c.bf16 %v685, %v685
        %v687 = vld [vmem:[#allocation14] sm:$0xf]
        %v688 = vld [vmem:[#allocation14 + $0x4] sm:$0xf]
        %v689 = vld [vmem:[#allocation16] sm:$0x1]
        %691 = vrot.lane.b32.xlu0 %v683, 112
        %v692 = vpop.permute.xlu0 %691
        %v695 = vunpack.c.l.b16 %v687
        %v696 = vunpack.c.l.b16 %v688
        %v697 = vpack.c.b16 %v696, %v695
        %v700 = vsel %vm617, %v692, 0
        %702 = vmatpush.bf16.msra.mxu0 0
        %703 = vmatpush.bf16.msra.mxu0 0
        %704 = vmatpush.bf16.msra.mxu0 0
        %705 = vmatpush.bf16.msra.mxu0 0
        %706 = vmatpush.bf16.msra.mxu0 0
        %707 = vmatpush.bf16.msra.mxu0 0
        %708 = vmatpush.bf16.msra.mxu0 0
        %709 = vmatpush.bf16.msra.mxu0 %v697
        %710 = vmatmul.bf16.gmra.mxu0 %v700
        %v711 = vpop.f32.mrf.mxu0
        %v712 = vadd.f32 0.0, %v711
        %v713 = vpop.f32.mrf.mxu0
        %714 = vdwg.mxu0
        %v716 = vsel %vm617, %v686, 0
        %718 = vmatpush.bf16.msra.mxu0 0
        %719 = vmatpush.bf16.msra.mxu0 0
        %720 = vmatpush.bf16.msra.mxu0 0
        %721 = vmatpush.bf16.msra.mxu0 0
        %722 = vmatpush.bf16.msra.mxu0 0
        %723 = vmatpush.bf16.msra.mxu0 0
        %724 = vmatpush.bf16.msra.mxu0 0
        %725 = vmatpush.bf16.msra.mxu0 %v697
        %726 = vmatmul.bf16.gmra.mxu0 %v716
        %v727 = vpop.f32.mrf.mxu0
        %v728 = vadd.f32 0.0, %v727
        %v729 = vpop.f32.mrf.mxu0
        %730 = vdwg.mxu0
        %732 = vrot.lane.b32.xlu0 %v728, 112
        %v733 = vpop.permute.xlu0 %732
        %v735 = vadd.f32 %v712, %v733
        %v736 = vrot.slane %v728, 7
        %v737 = vsel %vm658, 0.0, %v736
        %739 = vrot.lane.b32.xlu0 %v737, 16
        %v740 = vpop.permute.xlu0 %739
        %v742 = vadd.f32 %v735, %v740
        %744 = vrot.lane.b32.xlu0 %v712, 96
        %v745 = vpop.permute.xlu0 %744
        %v747 = vrot.slane %v745, 1
        %v748 = vsel %vm670, 0.0, %v747
        %v749 = vadd.f32 %v735, %v748
        %v751 = vperm.slane %v689, 0
        %753 = vrot.lane.b32.xlu0 %v751, 16
        %v754 = vpop.permute.xlu0 %753
        %v756 = vadd.f32 %v742, %v754
        %v757 = vadd.f32 %v749, %v751
        %759 = vrot.lane.b32.xlu0 %v756, 112
        %v760 = vpop.permute.xlu0 %759
        %v762 = vadd.f32 %v575, %v760
        %v763 = vadd.f32 %v599, %v757
        %v764 = vpack.c.bf16 %v763, %v762
        %v765 = vld [vmem:[%s7] sm:$0xf]
        %v766 = vld [vmem:[%s7 + $0x4] sm:$0xf]
        %v767 = vld [vmem:[%s8] sm:$0x1]
        %v769 = vperm.slane %v767, 0
        %v773 = vunpack.c.l.b16 %v765
        %v774 = vunpack.c.l.b16 %v766
        %v775 = vpack.c.b16 %v774, %v773
        %v778 = vsel %vm617, %v764, 0
        %780 = vmatpush.bf16.msra.mxu0 0
        %781 = vmatpush.bf16.msra.mxu0 0
        %782 = vmatpush.bf16.msra.mxu0 0
        %783 = vmatpush.bf16.msra.mxu0 0
        %784 = vmatpush.bf16.msra.mxu0 0
        %785 = vmatpush.bf16.msra.mxu0 0
        %786 = vmatpush.bf16.msra.mxu0 0
        %787 = vmatpush.bf16.msra.mxu0 %v775
        %788 = vmatmul.bf16.gmra.mxu0 %v778
        %v789 = vpop.f32.mrf.mxu0
        %v790 = vadd.f32 %v769, %v789
        %v791 = vpop.f32.mrf.mxu0
        %v792 = vadd.f32 %v769, %v791
        %793 = vdwg.mxu0
        %v794 = vpack.c.bf16 %v792, %v790
        %v795 = vpack.c.bf16 %v790, %v790
        %v796 = vpack.c.bf16 %v792, %v792
        %799 = vrot.lane.b32.xlu0 %v795, 126
        %v800 = vpop.permute.xlu0 %799
        %801 = vrot.lane.b32.xlu0 %v796, 126
        %v802 = vpop.permute.xlu0 %801
        %vm805 = vcmask 11264
        %806 = vst.msk [vmem:[#allocation2] sm:$0xf] %vm805, %v800
        %807 = vst.msk [vmem:[#allocation2 + $0x4] sm:$0xf] %vm805, %v802
        %808 = vrot.lane.b32.xlu0 %v795, 124
        %v809 = vpop.permute.xlu0 %808
        %810 = vrot.lane.b32.xlu0 %v796, 124
        %v811 = vpop.permute.xlu0 %810
        %vm814 = vcmask 125952
        %815 = vst.msk [vmem:[#allocation3] sm:$0xf] %vm814, %v809
        %816 = vst.msk [vmem:[#allocation3 + $0x4] sm:$0xf] %vm814, %v811
        %v817 = vld [vmem:[#allocation2] sm:$0xf]
        %v818 = vld [vmem:[#allocation2 + $0x4] sm:$0xf]
        %v819 = vld [vmem:[#allocation3] sm:$0xf]
        %v820 = vld [vmem:[#allocation3 + $0x4] sm:$0xf]
        %v823 = vunpack.c.l.b16 %v817
        %v824 = vunpack.c.l.b16 %v818
        %v825 = vpack.c.b16 %v824, %v823
        %vm826 = vcmask 15360
        %v828 = vsel %vm826, %v794, 0
        %v831 = vsel %vm826, %v825, 0
        %833 = vmatpush.bf16.xpose.msra.mxu0 0
        %834 = vmatpush.bf16.xpose.msra.mxu0 0
        %835 = vmatpush.bf16.xpose.msra.mxu0 0
        %836 = vmatpush.bf16.xpose.msra.mxu0 0
        %837 = vmatpush.bf16.xpose.msra.mxu0 0
        %838 = vmatpush.bf16.xpose.msra.mxu0 0
        %839 = vmatpush.bf16.xpose.msra.mxu0 0
        %840 = vmatpush.bf16.xpose.msra.mxu0 %v831
        %841 = vmatmul.bf16.gmra.mxu0 %v828
        %v842 = vpop.f32.mrf.mxu0
        %v843 = vadd.f32 0.0, %v842
        %v844 = vpop.f32.mrf.mxu0
        %v845 = vadd.f32 0.0, %v844
        %846 = vdwg.mxu0
        %v847 = vsel %vm617, %v843, -inf
        %848 = vmax.xlane.f32.xlu0 %v847
        %v849 = vpop.xlane.xlu0 %848
        %v850 = vsel %vm617, %v845, -inf
        %851 = vmax.xlane.f32.xlu0 %v850
        %v852 = vpop.xlane.xlu0 %851
        %v853 = vmax.f32 %v849, -1e+30
        %v854 = vmax.f32 %v852, -1e+30
        %v855 = vsub.f32 -1e+30, %v853
        %v856 = vsub.f32 -1e+30, %v854
        %v857 = vmul.f32 %v855, 1.442695
        %v858 = vpow.pop %v857
        %v859 = vmul.f32 %v856, 1.442695
        %v860 = vpow.pop %v859
        %v861 = vsub.f32 %v843, %v853
        %v862 = vsub.f32 %v845, %v854
        %v863 = vmul.f32 %v861, 1.442695
        %v864 = vpow.pop %v863
        %v865 = vmul.f32 %v862, 1.442695
        %v866 = vpow.pop %v865
        %v867 = vmul.f32 %v858, 0.0
        %v868 = vmul.f32 %v860, 0.0
        %v869 = vsel %vm617, %v864, 0.0
        %870 = vadd.xlane.f32.xlu0 %v869
        %v871 = vpop.xlane.xlu0 %870
        %v872 = vsel %vm617, %v866, 0.0
        %873 = vadd.xlane.f32.xlu0 %v872
        %v874 = vpop.xlane.xlu0 %873
        %v875 = vadd.f32 %v867, %v871
        %v876 = vadd.f32 %v868, %v874
        %v877 = vpack.c.bf16 %v866, %v864
        %v880 = vunpack.c.l.b16 %v819
        %v881 = vunpack.c.l.b16 %v820
        %v882 = vpack.c.b16 %v881, %v880
        %v885 = vsel %vm617, %v877, 0
        %887 = vmatpush.bf16.msra.mxu0 0
        %888 = vmatpush.bf16.msra.mxu0 0
        %889 = vmatpush.bf16.msra.mxu0 0
        %890 = vmatpush.bf16.msra.mxu0 0
        %891 = vmatpush.bf16.msra.mxu0 0
        %892 = vmatpush.bf16.msra.mxu0 0
        %893 = vmatpush.bf16.msra.mxu0 0
        %894 = vmatpush.bf16.msra.mxu0 %v882
        %895 = vmatmul.bf16.gmra.mxu0 %v885
        %v896 = vpop.f32.mrf.mxu0
        %v897 = vadd.f32 0.0, %v896
        %v898 = vpop.f32.mrf.mxu0
        %v899 = vadd.f32 0.0, %v898
        %900 = vdwg.mxu0
        %v901 = vadd.f32 %v867, %v897
        %v902 = vadd.f32 %v868, %v899
        %v903 = vrcp.pop %v875
        %v904 = vrcp.pop %v876
        %v905 = vmul.f32 %v901, %v903
        %v906 = vmul.f32 %v902, %v904
        %v907 = vld [vmem:[#allocation4] sm:$0x1]
        %v908 = vtanh.pop %v907
        %v910 = vperm.slane %v908, 0
        %911 = vset.pattern.permute.xlu0 0
        %912 = vperm.xlu0 %911, %v910
        %v913 = vpop.permute.xlu0 %912
        %v915 = vmul.f32 %v913, %v905
        %v916 = vmul.f32 %v913, %v906
        %v917 = vadd.f32 %v915, %v762
        %v918 = vadd.f32 %v916, %v763
        %v919 = vld [vmem:[#allocation17] sm:$0xf]
        %v920 = vld [vmem:[#allocation17 + $0x4] sm:$0xf]
        %v921 = vld [vmem:[%s11] sm:$0x1]
        %v922 = vpack.c.bf16 %v917, %v917
        %v925 = vunpack.c.l.b16 %v919
        %v926 = vunpack.c.l.b16 %v920
        %v927 = vpack.c.b16 %v926, %v925
        %v930 = vsel %vm617, %v922, 0
        %932 = vmatpush.bf16.msra.mxu0 0
        %933 = vmatpush.bf16.msra.mxu0 0
        %934 = vmatpush.bf16.msra.mxu0 0
        %935 = vmatpush.bf16.msra.mxu0 0
        %936 = vmatpush.bf16.msra.mxu0 0
        %937 = vmatpush.bf16.msra.mxu0 0
        %938 = vmatpush.bf16.msra.mxu0 0
        %939 = vmatpush.bf16.msra.mxu0 %v927
        %940 = vmatmul.bf16.gmra.mxu0 %v930
        %v941 = vpop.f32.mrf.mxu0
        %v942 = vadd.f32 0.0, %v941
        %v943 = vpop.f32.mrf.mxu0
        %944 = vdwg.mxu0
        %v945 = vpack.c.bf16 %v918, %v918
        %v947 = vsel %vm617, %v945, 0
        %949 = vmatpush.bf16.msra.mxu0 0
        %950 = vmatpush.bf16.msra.mxu0 0
        %951 = vmatpush.bf16.msra.mxu0 0
        %952 = vmatpush.bf16.msra.mxu0 0
        %953 = vmatpush.bf16.msra.mxu0 0
        %954 = vmatpush.bf16.msra.mxu0 0
        %955 = vmatpush.bf16.msra.mxu0 0
        %956 = vmatpush.bf16.msra.mxu0 %v927
        %957 = vmatmul.bf16.gmra.mxu0 %v947
        %v958 = vpop.f32.mrf.mxu0
        %v959 = vadd.f32 0.0, %v958
        %v960 = vpop.f32.mrf.mxu0
        %961 = vdwg.mxu0
        %963 = vrot.lane.b32.xlu0 %v959, 112
        %v964 = vpop.permute.xlu0 %963
        %v966 = vadd.f32 %v942, %v964
        %v967 = vrot.slane %v959, 7
        %v968 = vsel %vm658, 0.0, %v967
        %970 = vrot.lane.b32.xlu0 %v968, 16
        %v971 = vpop.permute.xlu0 %970
        %v973 = vadd.f32 %v966, %v971
        %975 = vrot.lane.b32.xlu0 %v942, 80
        %v976 = vpop.permute.xlu0 %975
        %v978 = vrot.slane %v976, 1
        %v979 = vsel %vm670, 0.0, %v978
        %981 = vrot.lane.b32.xlu0 %v979, 16
        %v982 = vpop.permute.xlu0 %981
        %v984 = vadd.f32 %v973, %v982
        %v986 = vperm.slane %v921, 0
        %987 = vrot.lane.b32.xlu0 %v986, 16
        %v988 = vpop.permute.xlu0 %987
        %v990 = vadd.f32 %v984, %v988
        %v991 = vmul.f32 %v990, 0.2
        %v992 = vmax.f32 %v990, %v991
        %994 = vrot.lane.b32.xlu0 %v992, 112
        %v995 = vpop.permute.xlu0 %994
        %997 = vst.msk [vmem:[%s543] sm:$0xff] %vm617, %v995
        %s998 = sand.u32 %s300, 1
        %s999 = scalar_lea.sflag [#allocation7], %s998
        %s1000 = sand.u32 %s300, 1
        %s1001 = smul.addr %s1000, 8
        %s1002 = scalar_lea.vmem [#allocation19], %s1001
        // Predicated region
        $region101: #{tpu_custom_call.1} parent=67 // pred_check
          %p1003 = pneg %p310
        $region102: #{tpu_custom_call.1} parent=67 // pred_check_branch
          %1005 = sbr.rel (%p1003) target = $region104
        $region103: #{tpu_custom_call.1} parent=67 // pred_region
          %1007 = vsyncadd %s999, 0
          %s1008 = smul.addr %s35, 8
          %s1009 = scalar_lea.hbm %s12, %s1008
          %s1011 = sshll.u32 %s1002, 4
          %s1012 = int_to_ptr.vmem [resolvable:$true] %s1011
          %s1013 = sshll.u32 %s1009, 4
          %s1014 = int_to_ptr.hbm [resolvable:$true] %s1013
          %1016 = dma.vmem_to_hbm [thread:$0]  %s1012, 128, %s1014, %s999
        $region104: #{tpu_custom_call.1} parent=67 // pred_fallthru
          _
      $region68: #{tpu_custom_call.1} parent=5 // pred_fallthru
        _
      %p1017 = scmp.le.s32.totalorder 2, %s30
      // Predicated region
      $region105: #{tpu_custom_call.1} parent=5 // pred_check
        %p1018 = pneg %p1017
      $region106: #{tpu_custom_call.1} parent=5 // pred_check_branch
        %1020 = sbr.rel (%p1018) target = $region108
      $region107: #{tpu_custom_call.1} parent=5 // pred_region
        %s1021 = ssub.s32 %s30, 2
        // Predicated region
        $region109: #{tpu_custom_call.1} parent=107 // pred_check
          %p1022 = pneg %p316
        $region110: #{tpu_custom_call.1} parent=107 // pred_check_branch
          %1024 = sbr.rel (%p1022) target = $region112
        $region111: #{tpu_custom_call.1} parent=107 // pred_region
          %s1025 = sand.u32 %s301, 1
          %s1026 = scalar_lea.sflag [#allocation7], %s1025
          %s1027 = sand.u32 %s301, 1
          %s1028 = smul.addr %s1027, 8
          %s1029 = scalar_lea.vmem [#allocation19], %s1028
          %1031 = dma.done %s1026, 128
        $region112: #{tpu_custom_call.1} parent=107 // pred_fallthru
          _
      $region108: #{tpu_custom_call.1} parent=5 // pred_fallthru
        _
    $region6: #{tpu_custom_call.1} parent=1 // loop_footer
      %s34 = sadd.s32 1, %s30
    $region7: #{tpu_custom_call.1} parent=1 // loop_footer_branch
      %29 = sbr.rel target = $region3
    $region8: #{tpu_custom_call.1} parent=1 // loop_exit
      _
    %1032 = vsyncpa [#allocation6], 1
    %s1033 = scalar_lea.sflag [#allocation6], 1
    %1034 = vsyncpa %s1033, 1
    %1035 = vsyncpa [#allocation9], 1
    %1036 = vsyncpa [#allocation12], 1
    %1037 = vsyncpa [#allocation15], 1
    %1038 = vsyncpa [#allocation18], 1
    %1039 = vsyncpa [#allocation7], 1
    %s1040 = scalar_lea.sflag [#allocation7], 1
    %1041 = vsyncpa %s1040, 1

// kernel: tpu_custom_call.1
$region0: #{tpu_custom_call.1}
  #allocation0 [shape = 'u32[]', space=smem, size = 0x4, offset = 0x4, fixed_abs, tag = 'smem constant byte address 0x4 - core index']
  #allocation1 [shape = 'u32[72,128]{1,0:T(1,128)}', space=vmem, size = 0x9000, scoped, tag = 'internal scratch']
  #allocation2 [shape = 'bf16[16,2]{1,0:T(8,128)(2,1)}', space=vmem, size = 0x1000, scoped, tag = 'scratch operand']
  #allocation3 [shape = 'bf16[16,16]{1,0:T(8,128)(2,1)}', space=vmem, size = 0x1000, scoped, tag = 'scratch operand']
  #allocation4 [shape = 'f32[1,1]{1,0:T(1,128)S(1)}', space=vmem, size = 0x200, scoped, tag = 'scoped memory for tpu_custom_call.1']
  %s0 = inlined_call_operand.hbm [shape: bf16[2,2,8,8], index: 0, kind: input, shape index: {}]
  %s1 = inlined_call_operand.hbm [shape: bf16[8,16], index: 1, kind: input, shape index: {}]
  %s2 = inlined_call_operand.hbm [shape: f32[1,16], index: 2, kind: input, shape index: {}]
  %s3 = inlined_call_operand.hbm [shape: bf16[16,48], index: 3, kind: input, shape index: {}]
  %s4 = inlined_call_operand.hbm [shape: f32[1,16], index: 4, kind: input, shape index: {}]
  %s5 = inlined_call_operand.hbm [shape: bf16[16,48], index: 5, kind: input, shape index: {}]
  %s6 = inlined_call_operand.hbm [shape: f32[1,16], index: 6, kind: input, shape index: {}]
  %s7 = inlined_call_operand.vmem [shape: bf16[16,20], index: 7, kind: input, shape index: {}]
  %s8 = inlined_call_operand.vmem [shape: f32[1,20], index: 8, kind: input, shape index: {}]
  %s9 = inlined_call_operand.<no memory space> [shape: f32[1,1], index: 9, kind: input, shape index: {}]
  %s10 = inlined_call_operand.hbm [shape: bf16[16,64], index: 10, kind: input, shape index: {}]
  %s11 = inlined_call_operand.vmem [shape: f32[1,16], index: 11, kind: input, shape index: {}]
  %s12 = inlined_call_operand.hbm [shape: f32[2,8,16], index: 12, kind: output, shape index: {}]
  %s13 = sld [smem:[#allocation0]]
  $region113: #{tpu_custom_call.1} parent=0
    _
  %s15 = ssub.s32 1, %s13
  %s16 = scalar_select 0, %s15, %s13
  %v17 = vstv %s9
  %18 = vst [vmem:[#allocation4] sm:$0x1] %v17
  $region1: #{tpu_custom_call.1} parent=0
    #allocation5 [shape = 'u8[8192]{0}', space=vmem, size = 0x2000, scoped, tag = 'input window, operand 0']
    #allocation6 [shape = 's32[2]{0}', space=sflag, size = 0x8, scoped, tag = 'scoped memory for tpu_custom_call.1']
    #allocation7 [shape = 's32[2]{0}', space=sflag, size = 0x8, scoped, tag = 'scoped memory for tpu_custom_call.1']
    #allocation8 [shape = 'u8[2048]{0}', space=vmem, size = 0x800, scoped, tag = 'input window, operand 1, single buffered']
    #allocation9 [shape = 's32[1]{0}', space=sflag, size = 0x4, scoped, tag = 'scoped memory for tpu_custom_call.1']
    #allocation10 [shape = 'u8[512]{0}', space=vmem, size = 0x400, scoped, tag = 'input window, operand 2, single buffered']
    #allocation11 [shape = 'u8[4096]{0}', space=vmem, size = 0x1000, scoped, tag = 'input window, operand 3, single buffered']
    #allocation12 [shape = 's32[1]{0}', space=sflag, size = 0x4, scoped, tag = 'scoped memory for tpu_custom_call.1']
    #allocation13 [shape = 'u8[512]{0}', space=vmem, size = 0x400, scoped, tag = 'input window, operand 4, single buffered']
    #allocation14 [shape = 'u8[4096]{0}', space=vmem, size = 0x1000, scoped, tag = 'input window, operand 5, single buffered']
    #allocation15 [shape = 's32[1]{0}', space=sflag, size = 0x4, scoped, tag = 'scoped memory for tpu_custom_call.1']
    #allocation16 [shape = 'u8[512]{0}', space=vmem, size = 0x400, scoped, tag = 'input window, operand 6, single buffered']
    #allocation17 [shape = 'u8[4096]{0}', space=vmem, size = 0x1000, scoped, tag = 'input window, operand 10, single buffered']
    #allocation18 [shape = 's32[1]{0}', space=sflag, size = 0x4, scoped, tag = 'scoped memory for tpu_custom_call.1']
    #allocation19 [shape = 'u8[8192]{0}', space=vmem, size = 0x2000, scoped, tag = 'output window, operand 0']
    %19 = vsyncpa [#allocation6], 0
    %s20 = scalar_lea.sflag [#allocation6], 1
    %21 = vsyncpa %s20, 0
    %22 = vsyncpa [#allocation9], 0
    %23 = vsyncpa [#allocation12], 0
    %24 = vsyncpa [#allocation15], 0
    %25 = vsyncpa [#allocation18], 0
    %26 = vsyncpa [#allocation7], 0
    %s27 = scalar_lea.sflag [#allocation7], 1
    %28 = vsyncpa %s27, 0
    loop: start=0, step=1, limit=4
    $region2: #{tpu_custom_call.1} parent=1 // loop_pre_header
      _
    $region3: #{tpu_custom_call.1} parent=1 // loop_header
      %s30 = sphi 0, %s34
      %p31 = scmp.ge.s32.totalorder %s30, 4
      %s40 = sphi 0, %s42
      %s43 = sphi 0, %s40
      %s44 = sphi 0, %s43
      %s60 = sphi 0, %s44
      %s64 = sphi 0, %s64
      %s66 = sphi 0, %s64
      %s67 = sphi 0, %s66
      %s81 = sphi 0, %s67
      %s85 = sphi 0, %s85
      %s87 = sphi 0, %s85
      %s88 = sphi 0, %s87
      %s102 = sphi 0, %s88
      %s106 = sphi 0, %s106
      %s108 = sphi 0, %s106
      %s109 = sphi 0, %s108
      %s123 = sphi 0, %s109
      %s127 = sphi 0, %s127
      %s129 = sphi 0, %s127
      %s130 = sphi 0, %s129
      %s144 = sphi 0, %s130
      %s148 = sphi 0, %s148
      %s150 = sphi 0, %s148
      %s151 = sphi 0, %s150
      %s165 = sphi 0, %s151
      %s169 = sphi 0, %s169
      %s171 = sphi 0, %s169
      %s172 = sphi 0, %s171
      %s186 = sphi 0, %s172
      %s190 = sphi 0, %s190
      %s192 = sphi 0, %s190
      %s193 = sphi 0, %s192
      %s207 = sphi 0, %s193
      %s211 = sphi 0, %s211
      %s213 = sphi 0, %s211
      %s214 = sphi 0, %s213
      %s228 = sphi 0, %s214
      %s232 = sphi 0, %s232
      %s234 = sphi 0, %s232
      %s235 = sphi 0, %s234
      %s249 = sphi 0, %s235
      %s253 = sphi 0, %s253
      %s255 = sphi 0, %s253
      %s256 = sphi 0, %s255
      %s270 = sphi 0, %s256
      %s274 = sphi 0, %s274
      %s276 = sphi 0, %s274
      %s277 = sphi 0, %s276
      %s291 = sphi 0, %s277
      %s297 = sphi 0, %s299
      %s300 = sphi 0, %s297
      %s301 = sphi 0, %s300
      %s317 = sphi 0, %s301
    $region4: #{tpu_custom_call.1} parent=1 // loop_header_branch
      %33 = sbr.rel (%p31) target = $region8
    $region5: #{tpu_custom_call.1} parent=1 // loop_body
      %s35 = ssub.s32 %s30, 1
      %s36 = ssub.s32 %s30, 2
      %s37 = sadd.s32 %s30, 1
      %s38 = ssub.s32 %s30, %s37
      %p39 = scmp.eq.s32.totalorder %s38, 0
      %s41 = sadd.s32 %s40, 1
      %s42 = scalar_select %p39, %s40, %s41
      %p45 = pneg %p39
      %p46 = scmp.eq.s32.totalorder %s30, 1
      %p47 = por %p45, %p46
      %p48 = scmp.ne.s32.totalorder %s40, %s43
      %p49 = scmp.eq.s32.totalorder %s30, 0
      %p50 = por %p48, %p49
      %p51 = scmp.ne.s32.totalorder %s40, %s43
      %p52 = scmp.eq.s32.totalorder %s35, 1
      %p53 = por %p51, %p52
      %p54 = scmp.ne.s32.totalorder %s43, %s44
      %p55 = scmp.eq.s32.totalorder %s35, 0
      %p56 = por %p54, %p55
      %p57 = scmp.ne.s32.totalorder %s43, %s44
      %p58 = scmp.eq.s32.totalorder %s36, 1
      %p59 = por %p57, %p58
      %p61 = scmp.ne.s32.totalorder %s44, %s60
      %p62 = scmp.eq.s32.totalorder %s36, 0
      %p63 = por %p61, %p62
      %s65 = sadd.s32 %s64, 1
      %p68 = scmp.eq.s32.totalorder %s30, 1
      %p69 = scmp.ne.s32.totalorder %s64, %s66
      %p70 = scmp.eq.s32.totalorder %s30, 0
      %p71 = por %p69, %p70
      %p72 = scmp.ne.s32.totalorder %s64, %s66
      %p73 = scmp.eq.s32.totalorder %s35, 1
      %p74 = por %p72, %p73
      %p75 = scmp.ne.s32.totalorder %s66, %s67
      %p76 = scmp.eq.s32.totalorder %s35, 0
      %p77 = por %p75, %p76
      %p78 = scmp.ne.s32.totalorder %s66, %s67
      %p79 = scmp.eq.s32.totalorder %s36, 1
      %p80 = por %p78, %p79
      %p82 = scmp.ne.s32.totalorder %s67, %s81
      %p83 = scmp.eq.s32.totalorder %s36, 0
      %p84 = por %p82, %p83
      %s86 = sadd.s32 %s85, 1
      %p89 = scmp.eq.s32.totalorder %s30, 1
      %p90 = scmp.ne.s32.totalorder %s85, %s87
      %p91 = scmp.eq.s32.totalorder %s30, 0
      %p92 = por %p90, %p91
      %p93 = scmp.ne.s32.totalorder %s85, %s87
      %p94 = scmp.eq.s32.totalorder %s35, 1
      %p95 = por %p93, %p94
      %p96 = scmp.ne.s32.totalorder %s87, %s88
      %p97 = scmp.eq.s32.totalorder %s35, 0
      %p98 = por %p96, %p97
      %p99 = scmp.ne.s32.totalorder %s87, %s88
      %p100 = scmp.eq.s32.totalorder %s36, 1
      %p101 = por %p99, %p100
      %p103 = scmp.ne.s32.totalorder %s88, %s102
      %p104 = scmp.eq.s32.totalorder %s36, 0
      %p105 = por %p103, %p104
      %s107 = sadd.s32 %s106, 1
      %p110 = scmp.eq.s32.totalorder %s30, 1
      %p111 = scmp.ne.s32.totalorder %s106, %s108
      %p112 = scmp.eq.s32.totalorder %s30, 0
      %p113 = por %p111, %p112
      %p114 = scmp.ne.s32.totalorder %s106, %s108
      %p115 = scmp.eq.s32.totalorder %s35, 1
      %p116 = por %p114, %p115
      %p117 = scmp.ne.s32.totalorder %s108, %s109
      %p118 = scmp.eq.s32.totalorder %s35, 0
      %p119 = por %p117, %p118
      %p120 = scmp.ne.s32.totalorder %s108, %s109
      %p121 = scmp.eq.s32.totalorder %s36, 1
      %p122 = por %p120, %p121
      %p124 = scmp.ne.s32.totalorder %s109, %s123
      %p125 = scmp.eq.s32.totalorder %s36, 0
      %p126 = por %p124, %p125
      %s128 = sadd.s32 %s127, 1
      %p131 = scmp.eq.s32.totalorder %s30, 1
      %p132 = scmp.ne.s32.totalorder %s127, %s129
      %p133 = scmp.eq.s32.totalorder %s30, 0
      %p134 = por %p132, %p133
      %p135 = scmp.ne.s32.totalorder %s127, %s129
      %p136 = scmp.eq.s32.totalorder %s35, 1
      %p137 = por %p135, %p136
      %p138 = scmp.ne.s32.totalorder %s129, %s130
      %p139 = scmp.eq.s32.totalorder %s35, 0
      %p140 = por %p138, %p139
      %p141 = scmp.ne.s32.totalorder %s129, %s130
      %p142 = scmp.eq.s32.totalorder %s36, 1
      %p143 = por %p141, %p142
      %p145 = scmp.ne.s32.totalorder %s130, %s144
      %p146 = scmp.eq.s32.totalorder %s36, 0
      %p147 = por %p145, %p146
      %s149 = sadd.s32 %s148, 1
      %p152 = scmp.eq.s32.totalorder %s30, 1
      %p153 = scmp.ne.s32.totalorder %s148, %s150
      %p154 = scmp.eq.s32.totalorder %s30, 0
      %p155 = por %p153, %p154
      %p156 = scmp.ne.s32.totalorder %s148, %s150
      %p157 = scmp.eq.s32.totalorder %s35, 1
      %p158 = por %p156, %p157
      %p159 = scmp.ne.s32.totalorder %s150, %s151
      %p160 = scmp.eq.s32.totalorder %s35, 0
      %p161 = por %p159, %p160
      %p162 = scmp.ne.s32.totalorder %s150, %s151
      %p163 = scmp.eq.s32.totalorder %s36, 1
      %p164 = por %p162, %p163
      %p166 = scmp.ne.s32.totalorder %s151, %s165
      %p167 = scmp.eq.s32.totalorder %s36, 0
      %p168 = por %p166, %p167
      %s170 = sadd.s32 %s169, 1
      %p173 = scmp.eq.s32.totalorder %s30, 1
      %p174 = scmp.ne.s32.totalorder %s169, %s171
      %p175 = scmp.eq.s32.totalorder %s30, 0
      %p176 = por %p174, %p175
      %p177 = scmp.ne.s32.totalorder %s169, %s171
      %p178 = scmp.eq.s32.totalorder %s35, 1
      %p179 = por %p177, %p178
      %p180 = scmp.ne.s32.totalorder %s171, %s172
      %p181 = scmp.eq.s32.totalorder %s35, 0
      %p182 = por %p180, %p181
      %p183 = scmp.ne.s32.totalorder %s171, %s172
      %p184 = scmp.eq.s32.totalorder %s36, 1
      %p185 = por %p183, %p184
      %p187 = scmp.ne.s32.totalorder %s172, %s186
      %p188 = scmp.eq.s32.totalorder %s36, 0
      %p189 = por %p187, %p188
      %s191 = sadd.s32 %s190, 1
      %p194 = scmp.eq.s32.totalorder %s30, 1
      %p195 = scmp.ne.s32.totalorder %s190, %s192
      %p196 = scmp.eq.s32.totalorder %s30, 0
      %p197 = por %p195, %p196
      %p198 = scmp.ne.s32.totalorder %s190, %s192
      %p199 = scmp.eq.s32.totalorder %s35, 1
      %p200 = por %p198, %p199
      %p201 = scmp.ne.s32.totalorder %s192, %s193
      %p202 = scmp.eq.s32.totalorder %s35, 0
      %p203 = por %p201, %p202
      %p204 = scmp.ne.s32.totalorder %s192, %s193
      %p205 = scmp.eq.s32.totalorder %s36, 1
      %p206 = por %p204, %p205
      %p208 = scmp.ne.s32.totalorder %s193, %s207
      %p209 = scmp.eq.s32.totalorder %s36, 0
      %p210 = por %p208, %p209
      %s212 = sadd.s32 %s211, 1
      %p215 = scmp.eq.s32.totalorder %s30, 1
      %p216 = scmp.ne.s32.totalorder %s211, %s213
      %p217 = scmp.eq.s32.totalorder %s30, 0
      %p218 = por %p216, %p217
      %p219 = scmp.ne.s32.totalorder %s211, %s213
      %p220 = scmp.eq.s32.totalorder %s35, 1
      %p221 = por %p219, %p220
      %p222 = scmp.ne.s32.totalorder %s213, %s214
      %p223 = scmp.eq.s32.totalorder %s35, 0
      %p224 = por %p222, %p223
      %p225 = scmp.ne.s32.totalorder %s213, %s214
      %p226 = scmp.eq.s32.totalorder %s36, 1
      %p227 = por %p225, %p226
      %p229 = scmp.ne.s32.totalorder %s214, %s228
      %p230 = scmp.eq.s32.totalorder %s36, 0
      %p231 = por %p229, %p230
      %s233 = sadd.s32 %s232, 1
      %p236 = scmp.eq.s32.totalorder %s30, 1
      %p237 = scmp.ne.s32.totalorder %s232, %s234
      %p238 = scmp.eq.s32.totalorder %s30, 0
      %p239 = por %p237, %p238
      %p240 = scmp.ne.s32.totalorder %s232, %s234
      %p241 = scmp.eq.s32.totalorder %s35, 1
      %p242 = por %p240, %p241
      %p243 = scmp.ne.s32.totalorder %s234, %s235
      %p244 = scmp.eq.s32.totalorder %s35, 0
      %p245 = por %p243, %p244
      %p246 = scmp.ne.s32.totalorder %s234, %s235
      %p247 = scmp.eq.s32.totalorder %s36, 1
      %p248 = por %p246, %p247
      %p250 = scmp.ne.s32.totalorder %s235, %s249
      %p251 = scmp.eq.s32.totalorder %s36, 0
      %p252 = por %p250, %p251
      %s254 = sadd.s32 %s253, 1
      %p257 = scmp.eq.s32.totalorder %s30, 1
      %p258 = scmp.ne.s32.totalorder %s253, %s255
      %p259 = scmp.eq.s32.totalorder %s30, 0
      %p260 = por %p258, %p259
      %p261 = scmp.ne.s32.totalorder %s253, %s255
      %p262 = scmp.eq.s32.totalorder %s35, 1
      %p263 = por %p261, %p262
      %p264 = scmp.ne.s32.totalorder %s255, %s256
      %p265 = scmp.eq.s32.totalorder %s35, 0
      %p266 = por %p264, %p265
      %p267 = scmp.ne.s32.totalorder %s255, %s256
      %p268 = scmp.eq.s32.totalorder %s36, 1
      %p269 = por %p267, %p268
      %p271 = scmp.ne.s32.totalorder %s256, %s270
      %p272 = scmp.eq.s32.totalorder %s36, 0
      %p273 = por %p271, %p272
      %s275 = sadd.s32 %s274, 1
      %p278 = scmp.eq.s32.totalorder %s30, 1
      %p279 = scmp.ne.s32.totalorder %s274, %s276
      %p280 = scmp.eq.s32.totalorder %s30, 0
      %p281 = por %p279, %p280
      %p282 = scmp.ne.s32.totalorder %s274, %s276
      %p283 = scmp.eq.s32.totalorder %s35, 1
      %p284 = por %p282, %p283
      %p285 = scmp.ne.s32.totalorder %s276, %s277
      %p286 = scmp.eq.s32.totalorder %s35, 0
      %p287 = por %p285, %p286
      %p288 = scmp.ne.s32.totalorder %s276, %s277
      %p289 = scmp.eq.s32.totalorder %s36, 1
      %p290 = por %p288, %p289
      %p292 = scmp.ne.s32.totalorder %s277, %s291
      %p293 = scmp.eq.s32.totalorder %s36, 0
      %p294 = por %p292, %p293
      %s295 = ssub.s32 %s30, %s37
      %p296 = scmp.eq.s32.totalorder %s295, 0
      %s298 = sadd.s32 %s297, 1
      %s299 = scalar_select %p296, %s297, %s298
      %p302 = pneg %p296
      %p303 = scmp.eq.s32.totalorder %s30, 1
      %p304 = por %p302, %p303
      %p305 = scmp.ne.s32.totalorder %s297, %s300
      %p306 = scmp.eq.s32.totalorder %s30, 0
      %p307 = por %p305, %p306
      %p308 = scmp.ne.s32.totalorder %s297, %s300
      %p309 = scmp.eq.s32.totalorder %s35, 1
      %p310 = por %p308, %p309
      %p311 = scmp.ne.s32.totalorder %s300, %s301
      %p312 = scmp.eq.s32.totalorder %s35, 0
      %p313 = por %p311, %p312
      %p314 = scmp.ne.s32.totalorder %s300, %s301
      %p315 = scmp.eq.s32.totalorder %s36, 1
      %p316 = por %p314, %p315
      %p318 = scmp.ne.s32.totalorder %s301, %s317
      %p319 = scmp.eq.s32.totalorder %s36, 0
      %p320 = por %p318, %p319
      %p321 = scmp.le.s32.totalorder 1, %s30
      %p322 = scmp.lt.s32.totalorder %s30, 3
      %p323 = pnand %p321, %p322
      %p324 = pneg %p323
      // Predicated region
      $region9: #{tpu_custom_call.1} parent=5 // pred_check
        _
      $region10: #{tpu_custom_call.1} parent=5 // pred_check_branch
        %326 = sbr.rel (%p323) target = $region12
      $region11: #{tpu_custom_call.1} parent=5 // pred_region
        %s327 = ssub.s32 %s30, 1
        // Predicated region
        $region13: #{tpu_custom_call.1} parent=11 // pred_check
          %p328 = pneg %p77
        $region14: #{tpu_custom_call.1} parent=11 // pred_check_branch
          %330 = sbr.rel (%p328) target = $region16
        $region15: #{tpu_custom_call.1} parent=11 // pred_region
          %332 = vsyncadd [#allocation9], 0
          %s334 = sshll.u32 %s1, 4
          %s335 = int_to_ptr.hbm [resolvable:$true] %s334
          %s336 = sshll.u32 [#allocation8], 4
          %s337 = int_to_ptr.vmem [resolvable:$true] %s336
          %339 = dma.hbm_to_vmem [thread:$0]  %s335, 64, %s337, [#allocation9]
        $region16: #{tpu_custom_call.1} parent=11 // pred_fallthru
          _
        // Predicated region
        $region17: #{tpu_custom_call.1} parent=11 // pred_check
          %p340 = pneg %p98
        $region18: #{tpu_custom_call.1} parent=11 // pred_check_branch
          %342 = sbr.rel (%p340) target = $region20
        $region19: #{tpu_custom_call.1} parent=11 // pred_region
          %344 = vsyncadd [#allocation9], 0
          %s346 = sshll.u32 %s2, 4
          %s347 = int_to_ptr.hbm [resolvable:$true] %s346
          %s348 = sshll.u32 [#allocation10], 4
          %s349 = int_to_ptr.vmem [resolvable:$true] %s348
          %351 = dma.hbm_to_vmem [thread:$0]  %s347, 16, %s349, [#allocation9]
        $region20: #{tpu_custom_call.1} parent=11 // pred_fallthru
          _
        // Predicated region
        $region21: #{tpu_custom_call.1} parent=11 // pred_check
          %p352 = pneg %p119
        $region22: #{tpu_custom_call.1} parent=11 // pred_check_branch
          %354 = sbr.rel (%p352) target = $region24
        $region23: #{tpu_custom_call.1} parent=11 // pred_region
          %356 = vsyncadd [#allocation12], 0
          %s357 = sshll.u32 %s3, 4
          %s358 = int_to_ptr.hbm [resolvable:$true] %s357
          %s359 = sshll.u32 [#allocation11], 4
          %s360 = int_to_ptr.vmem [resolvable:$true] %s359
          %365 = dma.hbm_to_vmem [thread:$0]  %s358, 128, %s360, [#allocation12], 64, 64, 4
        $region24: #{tpu_custom_call.1} parent=11 // pred_fallthru
          _
        // Predicated region
        $region25: #{tpu_custom_call.1} parent=11 // pred_check
          %p366 = pneg %p140
        $region26: #{tpu_custom_call.1} parent=11 // pred_check_branch
          %368 = sbr.rel (%p366) target = $region28
        $region27: #{tpu_custom_call.1} parent=11 // pred_region
          %370 = vsyncadd [#allocation12], 0
          %s372 = sshll.u32 %s4, 4
          %s373 = int_to_ptr.hbm [resolvable:$true] %s372
          %s374 = sshll.u32 [#allocation13], 4
          %s375 = int_to_ptr.vmem [resolvable:$true] %s374
          %377 = dma.hbm_to_vmem [thread:$0]  %s373, 16, %s375, [#allocation12]
        $region28: #{tpu_custom_call.1} parent=11 // pred_fallthru
          _
        // Predicated region
        $region29: #{tpu_custom_call.1} parent=11 // pred_check
          %p378 = pneg %p161
        $region30: #{tpu_custom_call.1} parent=11 // pred_check_branch
          %380 = sbr.rel (%p378) target = $region32
        $region31: #{tpu_custom_call.1} parent=11 // pred_region
          %382 = vsyncadd [#allocation15], 0
          %s383 = sshll.u32 %s5, 4
          %s384 = int_to_ptr.hbm [resolvable:$true] %s383
          %s385 = sshll.u32 [#allocation14], 4
          %s386 = int_to_ptr.vmem [resolvable:$true] %s385
          %391 = dma.hbm_to_vmem [thread:$0]  %s384, 128, %s386, [#allocation15], 64, 64, 4
        $region32: #{tpu_custom_call.1} parent=11 // pred_fallthru
          _
        // Predicated region
        $region33: #{tpu_custom_call.1} parent=11 // pred_check
          %p392 = pneg %p182
        $region34: #{tpu_custom_call.1} parent=11 // pred_check_branch
          %394 = sbr.rel (%p392) target = $region36
        $region35: #{tpu_custom_call.1} parent=11 // pred_region
          %396 = vsyncadd [#allocation15], 0
          %s398 = sshll.u32 %s6, 4
          %s399 = int_to_ptr.hbm [resolvable:$true] %s398
          %s400 = sshll.u32 [#allocation16], 4
          %s401 = int_to_ptr.vmem [resolvable:$true] %s400
          %403 = dma.hbm_to_vmem [thread:$0]  %s399, 16, %s401, [#allocation15]
        $region36: #{tpu_custom_call.1} parent=11 // pred_fallthru
          _
        // Predicated region
        $region37: #{tpu_custom_call.1} parent=11 // pred_check
          %p404 = pneg %p203
        $region38: #{tpu_custom_call.1} parent=11 // pred_check_branch
          %406 = sbr.rel (%p404) target = $region40
        $region39: #{tpu_custom_call.1} parent=11 // pred_region
          _
        $region40: #{tpu_custom_call.1} parent=11 // pred_fallthru
          _
        // Predicated region
        $region41: #{tpu_custom_call.1} parent=11 // pred_check
          %p407 = pneg %p224
        $region42: #{tpu_custom_call.1} parent=11 // pred_check_branch
          %409 = sbr.rel (%p407) target = $region44
        $region43: #{tpu_custom_call.1} parent=11 // pred_region
          _
        $region44: #{tpu_custom_call.1} parent=11 // pred_fallthru
          _
        // Predicated region
        $region45: #{tpu_custom_call.1} parent=11 // pred_check
          %p410 = pneg %p245
        $region46: #{tpu_custom_call.1} parent=11 // pred_check_branch
          %412 = sbr.rel (%p410) target = $region48
        $region47: #{tpu_custom_call.1} parent=11 // pred_region
          _
        $region48: #{tpu_custom_call.1} parent=11 // pred_fallthru
          _
        // Predicated region
        $region49: #{tpu_custom_call.1} parent=11 // pred_check
          %p413 = pneg %p266
        $region50: #{tpu_custom_call.1} parent=11 // pred_check_branch
          %415 = sbr.rel (%p413) target = $region52
        $region51: #{tpu_custom_call.1} parent=11 // pred_region
          %417 = vsyncadd [#allocation18], 0
          %s418 = sshll.u32 %s10, 4
          %s419 = int_to_ptr.hbm [resolvable:$true] %s418
          %s420 = sshll.u32 [#allocation17], 4
          %s421 = int_to_ptr.vmem [resolvable:$true] %s420
          %426 = dma.hbm_to_vmem [thread:$0]  %s419, 128, %s421, [#allocation18], 64, 64, 4
        $region52: #{tpu_custom_call.1} parent=11 // pred_fallthru
          _
        // Predicated region
        $region53: #{tpu_custom_call.1} parent=11 // pred_check
          %p427 = pneg %p287
        $region54: #{tpu_custom_call.1} parent=11 // pred_check_branch
          %429 = sbr.rel (%p427) target = $region56
        $region55: #{tpu_custom_call.1} parent=11 // pred_region
          _
        $region56: #{tpu_custom_call.1} parent=11 // pred_fallthru
          _
      $region12: #{tpu_custom_call.1} parent=5 // pred_fallthru
        _
      %p430 = scmp.lt.s32.totalorder %s30, 2
      // Predicated region
      $region57: #{tpu_custom_call.1} parent=5 // pred_check
        %p431 = pneg %p430
      $region58: #{tpu_custom_call.1} parent=5 // pred_check_branch
        %433 = sbr.rel (%p431) target = $region60
      $region59: #{tpu_custom_call.1} parent=5 // pred_region
        // Predicated region
        $region61: #{tpu_custom_call.1} parent=59 // pred_check
          %p434 = pneg %p50
        $region62: #{tpu_custom_call.1} parent=59 // pred_check_branch
          %436 = sbr.rel (%p434) target = $region64
        $region63: #{tpu_custom_call.1} parent=59 // pred_region
          %s437 = sand.u32 %s40, 1
          %s438 = scalar_lea.sflag [#allocation6], %s437
          %s439 = sand.u32 %s40, 1
          %s440 = smul.addr %s439, 8
          %s441 = scalar_lea.vmem [#allocation5], %s440
          %443 = vsyncadd %s438, 0
          %s444 = smul.addr %s30, 2
          %s445 = smul.addr %s444, 4
          %s446 = scalar_lea.hbm %s0, %s445
          %s447 = sshll.u32 %s446, 4
          %s448 = int_to_ptr.hbm [resolvable:$true] %s447
          %s449 = sshll.u32 %s441, 4
          %s450 = int_to_ptr.vmem [resolvable:$true] %s449
          %455 = dma.hbm_to_vmem [thread:$0]  %s448, 128, %s450, %s438, 64, 64, 4
        $region64: #{tpu_custom_call.1} parent=59 // pred_fallthru
          _
      $region60: #{tpu_custom_call.1} parent=5 // pred_fallthru
        _
      %p456 = scmp.le.s32.totalorder 1, %s30
      %p457 = scmp.lt.s32.totalorder %s30, 3
      %p458 = pnand %p456, %p457
      %p459 = pneg %p458
      // Predicated region
      $region65: #{tpu_custom_call.1} parent=5 // pred_check
        _
      $region66: #{tpu_custom_call.1} parent=5 // pred_check_branch
        %461 = sbr.rel (%p458) target = $region68
      $region67: #{tpu_custom_call.1} parent=5 // pred_region
        %s462 = ssub.s32 %s30, 1
        %s463 = sand.u32 %s43, 1
        %s464 = scalar_lea.sflag [#allocation6], %s463
        %s465 = sand.u32 %s43, 1
        %s466 = smul.addr %s465, 8
        %s467 = scalar_lea.vmem [#allocation5], %s466
        // Predicated region
        $region69: #{tpu_custom_call.1} parent=67 // pred_check
          %p468 = pneg %p56
        $region70: #{tpu_custom_call.1} parent=67 // pred_check_branch
          %470 = sbr.rel (%p468) target = $region72
        $region71: #{tpu_custom_call.1} parent=67 // pred_region
          %472 = dma.done %s464, 128
        $region72: #{tpu_custom_call.1} parent=67 // pred_fallthru
          _
        // Predicated region
        $region73: #{tpu_custom_call.1} parent=67 // pred_check
          %p473 = pneg %p77
        $region74: #{tpu_custom_call.1} parent=67 // pred_check_branch
          %475 = sbr.rel (%p473) target = $region76
        $region75: #{tpu_custom_call.1} parent=67 // pred_region
          %477 = dma.done [#allocation9], 64
        $region76: #{tpu_custom_call.1} parent=67 // pred_fallthru
          _
        // Predicated region
        $region77: #{tpu_custom_call.1} parent=67 // pred_check
          %p478 = pneg %p98
        $region78: #{tpu_custom_call.1} parent=67 // pred_check_branch
          %480 = sbr.rel (%p478) target = $region80
        $region79: #{tpu_custom_call.1} parent=67 // pred_region
          %482 = dma.done [#allocation9], 16
        $region80: #{tpu_custom_call.1} parent=67 // pred_fallthru
          _
        // Predicated region
        $region81: #{tpu_custom_call.1} parent=67 // pred_check
          %p483 = pneg %p119
        $region82: #{tpu_custom_call.1} parent=67 // pred_check_branch
          %485 = sbr.rel (%p483) target = $region84
        $region83: #{tpu_custom_call.1} parent=67 // pred_region
          %487 = dma.done [#allocation12], 128
        $region84: #{tpu_custom_call.1} parent=67 // pred_fallthru
          _
        // Predicated region
        $region85: #{tpu_custom_call.1} parent=67 // pred_check
          %p488 = pneg %p140
        $region86: #{tpu_custom_call.1} parent=67 // pred_check_branch
          %490 = sbr.rel (%p488) target = $region88
        $region87: #{tpu_custom_call.1} parent=67 // pred_region
          %492 = dma.done [#allocation12], 16
        $region88: #{tpu_custom_call.1} parent=67 // pred_fallthru
          _
        // Predicated region
        $region89: #{tpu_custom_call.1} parent=67 // pred_check
          %p493 = pneg %p161
        $region90: #{tpu_custom_call.1} parent=67 // pred_check_branch
          %495 = sbr.rel (%p493) target = $region92
        $region91: #{tpu_custom_call.1} parent=67 // pred_region
          %497 = dma.done [#allocation15], 128
        $region92: #{tpu_custom_call.1} parent=67 // pred_fallthru
          _
        // Predicated region
        $region93: #{tpu_custom_call.1} parent=67 // pred_check
          %p498 = pneg %p182
        $region94: #{tpu_custom_call.1} parent=67 // pred_check_branch
          %500 = sbr.rel (%p498) target = $region96
        $region95: #{tpu_custom_call.1} parent=67 // pred_region
          %502 = dma.done [#allocation15], 16
        $region96: #{tpu_custom_call.1} parent=67 // pred_fallthru
          _
        // Predicated region
        $region97: #{tpu_custom_call.1} parent=67 // pred_check
          %p503 = pneg %p266
        $region98: #{tpu_custom_call.1} parent=67 // pred_check_branch
          %505 = sbr.rel (%p503) target = $region100
        $region99: #{tpu_custom_call.1} parent=67 // pred_region
          %507 = dma.done [#allocation18], 128
        $region100: #{tpu_custom_call.1} parent=67 // pred_fallthru
          _
        %s508 = sand.u32 %s43, 1
        %s509 = scalar_lea.sflag [#allocation6], %s508
        %s510 = sand.u32 %s43, 1
        %s511 = smul.addr %s510, 8
        %s512 = scalar_lea.vmem [#allocation5], %s511
        %p513 = pneg %p56
        %p514 = pneg %p53
        %p515 = pneg %p77
        %p516 = pneg %p74
        %p517 = pneg %p98
        %p518 = pneg %p95
        %p519 = pneg %p119
        %p520 = pneg %p116
        %p521 = pneg %p140
        %p522 = pneg %p137
        %p523 = pneg %p161
        %p524 = pneg %p158
        %p525 = pneg %p182
        %p526 = pneg %p179
        %p527 = pneg %p203
        %p528 = pneg %p200
        %p529 = pneg %p224
        %p530 = pneg %p221
        %p531 = pneg %p245
        %p532 = pneg %p242
        %p533 = pneg %p266
        %p534 = pneg %p263
        %p535 = pneg %p287
        %p536 = pneg %p284
        %p537 = pneg %p313
        %p538 = pneg %p310
        %s539 = sand.u32 %s300, 1
        %s540 = scalar_lea.sflag [#allocation7], %s539
        %s541 = sand.u32 %s300, 1
        %s542 = smul.addr %s541, 8
        %s543 = scalar_lea.vmem [#allocation19], %s542
        %v545 = vld [vmem:[#allocation8] sm:$0xf]
        %v546 = vld [vmem:[#allocation10] sm:$0x1]
        %v547 = vld [vmem:[%s467] sm:$0xf]
        %v548 = vunpack.c.l.bf16 %v547
        %v549 = vmul.f32 %v548, 0.20019531
        %v550 = vpack.c.bf16 %v549, %v549
        %v551 = vunpack.c.l.bf16 %v550
        %v552 = vmax.f32 %v548, %v551
        %v553 = vpack.c.bf16 %v552, %v552
        %v555 = vperm.slane %v546, 0
        %vm557 = vcmask 64512
        %v559 = vsel %vm557, %v553, 0
        %vm561 = vcmask 1043456
        %v563 = vsel %vm561, %v545, 0
        %565 = vmatpush.bf16.msra.mxu0 0
        %566 = vmatpush.bf16.msra.mxu0 0
        %567 = vmatpush.bf16.msra.mxu0 0
        %568 = vmatpush.bf16.msra.mxu0 0
        %569 = vmatpush.bf16.msra.mxu0 0
        %570 = vmatpush.bf16.msra.mxu0 0
        %571 = vmatpush.bf16.msra.mxu0 0
        %572 = vmatpush.bf16.msra.mxu0 %v563
        %573 = vmatmul.bf16.gmra.mxu0 %v559
        %v574 = vpop.f32.mrf.mxu0
        %v575 = vadd.f32 %v555, %v574
        %v576 = vpop.f32.mrf.mxu0
        %577 = vdwg.mxu0
        %s578 = scalar_lea.vmem %s467, 4 [#allocation5]
        %v579 = vld [vmem:[%s578] sm:$0xf]
        %v580 = vunpack.c.l.bf16 %v579
        %v581 = vmul.f32 %v580, 0.20019531
        %v582 = vpack.c.bf16 %v581, %v581
        %v583 = vunpack.c.l.bf16 %v582
        %v584 = vmax.f32 %v580, %v583
        %v585 = vpack.c.bf16 %v584, %v584
        %v587 = vsel %vm557, %v585, 0
        %589 = vmatpush.bf16.msra.mxu0 0
        %590 = vmatpush.bf16.msra.mxu0 0
        %591 = vmatpush.bf16.msra.mxu0 0
        %592 = vmatpush.bf16.msra.mxu0 0
        %593 = vmatpush.bf16.msra.mxu0 0
        %594 = vmatpush.bf16.msra.mxu0 0
        %595 = vmatpush.bf16.msra.mxu0 0
        %596 = vmatpush.bf16.msra.mxu0 %v563
        %597 = vmatmul.bf16.gmra.mxu0 %v587
        %v598 = vpop.f32.mrf.mxu0
        %v599 = vadd.f32 %v555, %v598
        %v600 = vpop.f32.mrf.mxu0
        %601 = vdwg.mxu0
        %v602 = vmul.f32 %v575, 0.2
        %v603 = vmax.f32 %v575, %v602
        %v604 = vpack.c.bf16 %v603, %v603
        %v605 = vmul.f32 %v599, 0.2
        %v606 = vmax.f32 %v599, %v605
        %v607 = vpack.c.bf16 %v606, %v606
        %v608 = vld [vmem:[#allocation11] sm:$0xf]
        %v609 = vld [vmem:[#allocation11 + $0x4] sm:$0xf]
        %v610 = vld [vmem:[#allocation13] sm:$0x1]
        %v613 = vunpack.c.l.b16 %v608
        %v614 = vunpack.c.l.b16 %v609
        %v615 = vpack.c.b16 %v614, %v613
        %vm617 = vcmask 130048
        %v619 = vsel %vm617, %v604, 0
        %621 = vmatpush.bf16.msra.mxu0 0
        %622 = vmatpush.bf16.msra.mxu0 0
        %623 = vmatpush.bf16.msra.mxu0 0
        %624 = vmatpush.bf16.msra.mxu0 0
        %625 = vmatpush.bf16.msra.mxu0 0
        %626 = vmatpush.bf16.msra.mxu0 0
        %627 = vmatpush.bf16.msra.mxu0 0
        %628 = vmatpush.bf16.msra.mxu0 %v615
        %629 = vmatmul.bf16.gmra.mxu0 %v619
        %v630 = vpop.f32.mrf.mxu0
        %v631 = vadd.f32 0.0, %v630
        %v632 = vpop.f32.mrf.mxu0
        %633 = vdwg.mxu0
        %v635 = vsel %vm617, %v607, 0
        %637 = vmatpush.bf16.msra.mxu0 0
        %638 = vmatpush.bf16.msra.mxu0 0
        %639 = vmatpush.bf16.msra.mxu0 0
        %640 = vmatpush.bf16.msra.mxu0 0
        %641 = vmatpush.bf16.msra.mxu0 0
        %642 = vmatpush.bf16.msra.mxu0 0
        %643 = vmatpush.bf16.msra.mxu0 0
        %644 = vmatpush.bf16.msra.mxu0 %v615
        %645 = vmatmul.bf16.gmra.mxu0 %v635
        %v646 = vpop.f32.mrf.mxu0
        %v647 = vadd.f32 0.0, %v646
        %v648 = vpop.f32.mrf.mxu0
        %649 = vdwg.mxu0
        %651 = vrot.lane.b32.xlu0 %v647, 112
        %v652 = vpop.permute.xlu0 %651
        %v654 = vadd.f32 %v631, %v652
        %v655 = vrot.slane %v647, 7
        %v656 = vlaneseq
        %v657 = vshrl.u32 %v656, 7
        %vm658 = vcmp.eq.s32.totalorder %v657, 0
        %v659 = vsel %vm658, 0.0, %v655
        %661 = vrot.lane.b32.xlu0 %v659, 16
        %v662 = vpop.permute.xlu0 %661
        %v664 = vadd.f32 %v654, %v662
        %666 = vrot.lane.b32.xlu0 %v631, 96
        %v667 = vpop.permute.xlu0 %666
        %v669 = vrot.slane %v667, 1
        %vm670 = vcmp.eq.s32.totalorder %v657, 7
        %v671 = vsel %vm670, 0.0, %v669
        %v672 = vadd.f32 %v654, %v671
        %v674 = vperm.slane %v610, 0
        %676 = vrot.lane.b32.xlu0 %v674, 16
        %v677 = vpop.permute.xlu0 %676
        %v679 = vadd.f32 %v664, %v677
        %v680 = vadd.f32 %v672, %v674
        %v681 = vmul.f32 %v679, 0.2
        %v682 = vmax.f32 %v679, %v681
        %v683 = vpack.c.bf16 %v682, %v682
        %v684 = vmul.f32 %v680, 0.2
        %v685 = vmax.f32 %v680, %v684
        %v686 = vpack.c.bf16 %v685, %v685
        %v687 = vld [vmem:[#allocation14] sm:$0xf]
        %v688 = vld [vmem:[#allocation14 + $0x4] sm:$0xf]
        %v689 = vld [vmem:[#allocation16] sm:$0x1]
        %691 = vrot.lane.b32.xlu0 %v683, 112
        %v692 = vpop.permute.xlu0 %691
        %v695 = vunpack.c.l.b16 %v687
        %v696 = vunpack.c.l.b16 %v688
        %v697 = vpack.c.b16 %v696, %v695
        %v700 = vsel %vm617, %v692, 0
        %702 = vmatpush.bf16.msra.mxu0 0
        %703 = vmatpush.bf16.msra.mxu0 0
        %704 = vmatpush.bf16.msra.mxu0 0
        %705 = vmatpush.bf16.msra.mxu0 0
        %706 = vmatpush.bf16.msra.mxu0 0
        %707 = vmatpush.bf16.msra.mxu0 0
        %708 = vmatpush.bf16.msra.mxu0 0
        %709 = vmatpush.bf16.msra.mxu0 %v697
        %710 = vmatmul.bf16.gmra.mxu0 %v700
        %v711 = vpop.f32.mrf.mxu0
        %v712 = vadd.f32 0.0, %v711
        %v713 = vpop.f32.mrf.mxu0
        %714 = vdwg.mxu0
        %v716 = vsel %vm617, %v686, 0
        %718 = vmatpush.bf16.msra.mxu0 0
        %719 = vmatpush.bf16.msra.mxu0 0
        %720 = vmatpush.bf16.msra.mxu0 0
        %721 = vmatpush.bf16.msra.mxu0 0
        %722 = vmatpush.bf16.msra.mxu0 0
        %723 = vmatpush.bf16.msra.mxu0 0
        %724 = vmatpush.bf16.msra.mxu0 0
        %725 = vmatpush.bf16.msra.mxu0 %v697
        %726 = vmatmul.bf16.gmra.mxu0 %v716
        %v727 = vpop.f32.mrf.mxu0
        %v728 = vadd.f32 0.0, %v727
        %v729 = vpop.f32.mrf.mxu0
        %730 = vdwg.mxu0
        %732 = vrot.lane.b32.xlu0 %v728, 112
        %v733 = vpop.permute.xlu0 %732
        %v735 = vadd.f32 %v712, %v733
        %v736 = vrot.slane %v728, 7
        %v737 = vsel %vm658, 0.0, %v736
        %739 = vrot.lane.b32.xlu0 %v737, 16
        %v740 = vpop.permute.xlu0 %739
        %v742 = vadd.f32 %v735, %v740
        %744 = vrot.lane.b32.xlu0 %v712, 96
        %v745 = vpop.permute.xlu0 %744
        %v747 = vrot.slane %v745, 1
        %v748 = vsel %vm670, 0.0, %v747
        %v749 = vadd.f32 %v735, %v748
        %v751 = vperm.slane %v689, 0
        %753 = vrot.lane.b32.xlu0 %v751, 16
        %v754 = vpop.permute.xlu0 %753
        %v756 = vadd.f32 %v742, %v754
        %v757 = vadd.f32 %v749, %v751
        %759 = vrot.lane.b32.xlu0 %v756, 112
        %v760 = vpop.permute.xlu0 %759
        %v762 = vadd.f32 %v575, %v760
        %v763 = vadd.f32 %v599, %v757
        %v764 = vpack.c.bf16 %v763, %v762
        %v765 = vld [vmem:[%s7] sm:$0xf]
        %v766 = vld [vmem:[%s7 + $0x4] sm:$0xf]
        %v767 = vld [vmem:[%s8] sm:$0x1]
        %v769 = vperm.slane %v767, 0
        %v773 = vunpack.c.l.b16 %v765
        %v774 = vunpack.c.l.b16 %v766
        %v775 = vpack.c.b16 %v774, %v773
        %v778 = vsel %vm617, %v764, 0
        %780 = vmatpush.bf16.msra.mxu0 0
        %781 = vmatpush.bf16.msra.mxu0 0
        %782 = vmatpush.bf16.msra.mxu0 0
        %783 = vmatpush.bf16.msra.mxu0 0
        %784 = vmatpush.bf16.msra.mxu0 0
        %785 = vmatpush.bf16.msra.mxu0 0
        %786 = vmatpush.bf16.msra.mxu0 0
        %787 = vmatpush.bf16.msra.mxu0 %v775
        %788 = vmatmul.bf16.gmra.mxu0 %v778
        %v789 = vpop.f32.mrf.mxu0
        %v790 = vadd.f32 %v769, %v789
        %v791 = vpop.f32.mrf.mxu0
        %v792 = vadd.f32 %v769, %v791
        %793 = vdwg.mxu0
        %v794 = vpack.c.bf16 %v792, %v790
        %v795 = vpack.c.bf16 %v790, %v790
        %v796 = vpack.c.bf16 %v792, %v792
        %799 = vrot.lane.b32.xlu0 %v795, 126
        %v800 = vpop.permute.xlu0 %799
        %801 = vrot.lane.b32.xlu0 %v796, 126
        %v802 = vpop.permute.xlu0 %801
        %vm805 = vcmask 11264
        %806 = vst.msk [vmem:[#allocation2] sm:$0xf] %vm805, %v800
        %807 = vst.msk [vmem:[#allocation2 + $0x4] sm:$0xf] %vm805, %v802
        %808 = vrot.lane.b32.xlu0 %v795, 124
        %v809 = vpop.permute.xlu0 %808
        %810 = vrot.lane.b32.xlu0 %v796, 124
        %v811 = vpop.permute.xlu0 %810
        %vm814 = vcmask 125952
        %815 = vst.msk [vmem:[#allocation3] sm:$0xf] %vm814, %v809
        %816 = vst.msk [vmem:[#allocation3 + $0x4] sm:$0xf] %vm814, %v811
        %v817 = vld [vmem:[#allocation2] sm:$0xf]
        %v818 = vld [vmem:[#allocation2 + $0x4] sm:$0xf]
        %v819 = vld [vmem:[#allocation3] sm:$0xf]
        %v820 = vld [vmem:[#allocation3 + $0x4] sm:$0xf]
        %v823 = vunpack.c.l.b16 %v817
        %v824 = vunpack.c.l.b16 %v818
        %v825 = vpack.c.b16 %v824, %v823
        %vm826 = vcmask 15360
        %v828 = vsel %vm826, %v794, 0
        %v831 = vsel %vm826, %v825, 0
        %833 = vmatpush.bf16.xpose.msra.mxu0 0
        %834 = vmatpush.bf16.xpose.msra.mxu0 0
        %835 = vmatpush.bf16.xpose.msra.mxu0 0
        %836 = vmatpush.bf16.xpose.msra.mxu0 0
        %837 = vmatpush.bf16.xpose.msra.mxu0 0
        %838 = vmatpush.bf16.xpose.msra.mxu0 0
        %839 = vmatpush.bf16.xpose.msra.mxu0 0
        %840 = vmatpush.bf16.xpose.msra.mxu0 %v831
        %841 = vmatmul.bf16.gmra.mxu0 %v828
        %v842 = vpop.f32.mrf.mxu0
        %v843 = vadd.f32 0.0, %v842
        %v844 = vpop.f32.mrf.mxu0
        %v845 = vadd.f32 0.0, %v844
        %846 = vdwg.mxu0
        %v847 = vsel %vm617, %v843, -inf
        %848 = vmax.xlane.f32.xlu0 %v847
        %v849 = vpop.xlane.xlu0 %848
        %v850 = vsel %vm617, %v845, -inf
        %851 = vmax.xlane.f32.xlu0 %v850
        %v852 = vpop.xlane.xlu0 %851
        %v853 = vmax.f32 %v849, -1e+30
        %v854 = vmax.f32 %v852, -1e+30
        %v855 = vsub.f32 -1e+30, %v853
        %v856 = vsub.f32 -1e+30, %v854
        %v857 = vmul.f32 %v855, 1.442695
        %v858 = vpow.pop %v857
        %v859 = vmul.f32 %v856, 1.442695
        %v860 = vpow.pop %v859
        %v861 = vsub.f32 %v843, %v853
        %v862 = vsub.f32 %v845, %v854
        %v863 = vmul.f32 %v861, 1.442695
        %v864 = vpow.pop %v863
        %v865 = vmul.f32 %v862, 1.442695
        %v866 = vpow.pop %v865
        %v867 = vmul.f32 %v858, 0.0
        %v868 = vmul.f32 %v860, 0.0
        %v869 = vsel %vm617, %v864, 0.0
        %870 = vadd.xlane.f32.xlu0 %v869
        %v871 = vpop.xlane.xlu0 %870
        %v872 = vsel %vm617, %v866, 0.0
        %873 = vadd.xlane.f32.xlu0 %v872
        %v874 = vpop.xlane.xlu0 %873
        %v875 = vadd.f32 %v867, %v871
        %v876 = vadd.f32 %v868, %v874
        %v877 = vpack.c.bf16 %v866, %v864
        %v880 = vunpack.c.l.b16 %v819
        %v881 = vunpack.c.l.b16 %v820
        %v882 = vpack.c.b16 %v881, %v880
        %v885 = vsel %vm617, %v877, 0
        %887 = vmatpush.bf16.msra.mxu0 0
        %888 = vmatpush.bf16.msra.mxu0 0
        %889 = vmatpush.bf16.msra.mxu0 0
        %890 = vmatpush.bf16.msra.mxu0 0
        %891 = vmatpush.bf16.msra.mxu0 0
        %892 = vmatpush.bf16.msra.mxu0 0
        %893 = vmatpush.bf16.msra.mxu0 0
        %894 = vmatpush.bf16.msra.mxu0 %v882
        %895 = vmatmul.bf16.gmra.mxu0 %v885
        %v896 = vpop.f32.mrf.mxu0
        %v897 = vadd.f32 0.0, %v896
        %v898 = vpop.f32.mrf.mxu0
        %v899 = vadd.f32 0.0, %v898
        %900 = vdwg.mxu0
        %v901 = vadd.f32 %v867, %v897
        %v902 = vadd.f32 %v868, %v899
        %v903 = vrcp.pop %v875
        %v904 = vrcp.pop %v876
        %v905 = vmul.f32 %v901, %v903
        %v906 = vmul.f32 %v902, %v904
        %v907 = vld [vmem:[#allocation4] sm:$0x1]
        %v908 = vtanh.pop %v907
        %v910 = vperm.slane %v908, 0
        %911 = vset.pattern.permute.xlu0 0
        %912 = vperm.xlu0 %911, %v910
        %v913 = vpop.permute.xlu0 %912
        %v915 = vmul.f32 %v913, %v905
        %v916 = vmul.f32 %v913, %v906
        %v917 = vadd.f32 %v915, %v762
        %v918 = vadd.f32 %v916, %v763
        %v919 = vld [vmem:[#allocation17] sm:$0xf]
        %v920 = vld [vmem:[#allocation17 + $0x4] sm:$0xf]
        %v921 = vld [vmem:[%s11] sm:$0x1]
        %v922 = vpack.c.bf16 %v917, %v917
        %v925 = vunpack.c.l.b16 %v919
        %v926 = vunpack.c.l.b16 %v920
        %v927 = vpack.c.b16 %v926, %v925
        %v930 = vsel %vm617, %v922, 0
        %932 = vmatpush.bf16.msra.mxu0 0
        %933 = vmatpush.bf16.msra.mxu0 0
        %934 = vmatpush.bf16.msra.mxu0 0
        %935 = vmatpush.bf16.msra.mxu0 0
        %936 = vmatpush.bf16.msra.mxu0 0
        %937 = vmatpush.bf16.msra.mxu0 0
        %938 = vmatpush.bf16.msra.mxu0 0
        %939 = vmatpush.bf16.msra.mxu0 %v927
        %940 = vmatmul.bf16.gmra.mxu0 %v930
        %v941 = vpop.f32.mrf.mxu0
        %v942 = vadd.f32 0.0, %v941
        %v943 = vpop.f32.mrf.mxu0
        %944 = vdwg.mxu0
        %v945 = vpack.c.bf16 %v918, %v918
        %v947 = vsel %vm617, %v945, 0
        %949 = vmatpush.bf16.msra.mxu0 0
        %950 = vmatpush.bf16.msra.mxu0 0
        %951 = vmatpush.bf16.msra.mxu0 0
        %952 = vmatpush.bf16.msra.mxu0 0
        %953 = vmatpush.bf16.msra.mxu0 0
        %954 = vmatpush.bf16.msra.mxu0 0
        %955 = vmatpush.bf16.msra.mxu0 0
        %956 = vmatpush.bf16.msra.mxu0 %v927
        %957 = vmatmul.bf16.gmra.mxu0 %v947
        %v958 = vpop.f32.mrf.mxu0
        %v959 = vadd.f32 0.0, %v958
        %v960 = vpop.f32.mrf.mxu0
        %961 = vdwg.mxu0
        %963 = vrot.lane.b32.xlu0 %v959, 112
        %v964 = vpop.permute.xlu0 %963
        %v966 = vadd.f32 %v942, %v964
        %v967 = vrot.slane %v959, 7
        %v968 = vsel %vm658, 0.0, %v967
        %970 = vrot.lane.b32.xlu0 %v968, 16
        %v971 = vpop.permute.xlu0 %970
        %v973 = vadd.f32 %v966, %v971
        %975 = vrot.lane.b32.xlu0 %v942, 80
        %v976 = vpop.permute.xlu0 %975
        %v978 = vrot.slane %v976, 1
        %v979 = vsel %vm670, 0.0, %v978
        %981 = vrot.lane.b32.xlu0 %v979, 16
        %v982 = vpop.permute.xlu0 %981
        %v984 = vadd.f32 %v973, %v982
        %v986 = vperm.slane %v921, 0
        %987 = vrot.lane.b32.xlu0 %v986, 16
        %v988 = vpop.permute.xlu0 %987
        %v990 = vadd.f32 %v984, %v988
        %v991 = vmul.f32 %v990, 0.2
        %v992 = vmax.f32 %v990, %v991
        %994 = vrot.lane.b32.xlu0 %v992, 112
        %v995 = vpop.permute.xlu0 %994
        %997 = vst.msk [vmem:[%s543] sm:$0xff] %vm617, %v995
        %s998 = sand.u32 %s300, 1
        %s999 = scalar_lea.sflag [#allocation7], %s998
        %s1000 = sand.u32 %s300, 1
        %s1001 = smul.addr %s1000, 8
        %s1002 = scalar_lea.vmem [#allocation19], %s1001
        // Predicated region
        $region101: #{tpu_custom_call.1} parent=67 // pred_check
          %p1003 = pneg %p310
        $region102: #{tpu_custom_call.1} parent=67 // pred_check_branch
          %1005 = sbr.rel (%p1003) target = $region104
        $region103: #{tpu_custom_call.1} parent=67 // pred_region
          %1007 = vsyncadd %s999, 0
          %s1008 = smul.addr %s35, 8
          %s1009 = scalar_lea.hbm %s12, %s1008
          %s1011 = sshll.u32 %s1002, 4
          %s1012 = int_to_ptr.vmem [resolvable:$true] %s1011
          %s1013 = sshll.u32 %s1009, 4
          %s1014 = int_to_ptr.hbm [resolvable:$true] %s1013
          %1016 = dma.vmem_to_hbm [thread:$0]  %s1012, 128, %s1014, %s999
        $region104: #{tpu_custom_call.1} parent=67 // pred_fallthru
          _
      $region68: #{tpu_custom_call.1} parent=5 // pred_fallthru
        _
      %p1017 = scmp.le.s32.totalorder 2, %s30
      // Predicated region
      $region105: #{tpu_custom_call.1} parent=5 // pred_check
        %p1018 = pneg %p1017
      $region106: #{tpu_custom_call.1} parent=5 // pred_check_branch
        %1020 = sbr.rel (%p1018) target = $region108
      $region107: #{tpu_custom_call.1} parent=5 // pred_region
        %s1021 = ssub.s32 %s30, 2
        // Predicated region
        $region109: #{tpu_custom_call.1} parent=107 // pred_check
          %p1022 = pneg %p316
        $region110: #{tpu_custom_call.1} parent=107 // pred_check_branch
          %1024 = sbr.rel (%p1022) target = $region112
        $region111: #{tpu_custom_call.1} parent=107 // pred_region
          %s1025 = sand.u32 %s301, 1
          %s1026 = scalar_lea.sflag [#allocation7], %s1025
          %s1027 = sand.u32 %s301, 1
          %s1028 = smul.addr %s1027, 8
          %s1029 = scalar_lea.vmem [#allocation19], %s1028
          %1031 = dma.done %s1026, 128
        $region112: #{tpu_custom_call.1} parent=107 // pred_fallthru
          _
      $region108: #{tpu_custom_call.1} parent=5 // pred_fallthru
        _
    $region6: #{tpu_custom_call.1} parent=1 // loop_footer
      %s34 = sadd.s32 1, %s30
    $region7: #{tpu_custom_call.1} parent=1 // loop_footer_branch
      %29 = sbr.rel target = $region3
    $region8: #{tpu_custom_call.1} parent=1 // loop_exit
      _
    %1032 = vsyncpa [#allocation6], 1
    %s1033 = scalar_lea.sflag [#allocation6], 1
    %1034 = vsyncpa %s1033, 1
    %1035 = vsyncpa [#allocation9], 1
    %1036 = vsyncpa [#allocation12], 1
    %1037 = vsyncpa [#allocation15], 1
    %1038 = vsyncpa [#allocation18], 1
    %1039 = vsyncpa [#allocation7], 1
    %s1040 = scalar_lea.sflag [#allocation7], 1
    %1041 = vsyncpa %s1040, 1

</llo_original>
